<compile_context>
chip_gen: v7x
topology: tpu7x:2x2x1
jax: 0.10.0
libtpu: 0.0.40
codegen_flags: <defaults>
</compile_context>

<pallas_src>
import jax
import jax.numpy as jnp
from jax.experimental import pallas as pl
from jax.experimental.pallas import tpu as pltpu


# ----------------------------------------------------------------------------
# Fused IARNet layer kernel: M x GATConv -> flatten/stack -> SemanticAttention
# ----------------------------------------------------------------------------
def iarnet_layer_kernel(x_ref, w_ref, asrc_ref, adst_ref, bias_ref, adj_ref,
                        sw1_ref, sb1_ref, sw2_ref, out_ref):
    """x_ref   : [N, F_in]
       w_ref   : [M, F_in, H*F_out]   head-flattened projection
       asrc_ref: [M, H*F_out, H]      block-diagonal att_src
       adst_ref: [M, H*F_out, H]      block-diagonal att_dst
       bias_ref: [M, 1, H*F_out]
       adj_ref : [M, N, N]            adj[m,i,j]=1 iff edge j->i (self-loops in)
       sw1_ref : [H*F_out, K]
       sb1_ref : [1, K]
       sw2_ref : [K, 1]
       out_ref : [N, H*F_out]
    """
    N = x_ref.shape[0]
    M, _, HF = w_ref.shape
    H = asrc_ref.shape[2]
    F_out = HF // H
    neg_inf = jnp.float32(-1e30)

    x_bf = x_ref[...].astype(jnp.bfloat16)          # hoisted: shared by all m

    # ---------------- per-meta-path GAT (static loop, M is tiny) -------------
    z_list = []
    for m in range(M):
        mask = adj_ref[m] > 0.5                                     # [N, N]

        # single projection matmul for ALL heads (bf16 in, f32 accumulate)
        xp = jnp.dot(x_bf, w_ref[m].astype(jnp.bfloat16),
                     preferred_element_type=jnp.float32)            # [N, HF]

        # per-head attention logits via block-diagonal matmuls -> [N, H]
        s_src = jnp.dot(xp, asrc_ref[m], preferred_element_type=jnp.float32)
        s_dst = jnp.dot(xp, adst_ref[m], preferred_element_type=jnp.float32)

        # e[h, i, j] = leaky_relu(s_dst[i, h] + s_src[j, h]), slope 0.2
        e = s_dst.T[:, :, None] + s_src.T[:, None, :]               # [H, N, N]
        e = jnp.where(e > 0, e, 0.2 * e)
        e = jnp.where(mask[None], e, neg_inf)                       # mask once
        e = e - jnp.max(e, axis=-1, keepdims=True)
        p = jnp.exp(e)
        p = jnp.where(mask[None], p, 0.0)
        alpha = p / jnp.sum(p, axis=-1, keepdims=True)              # [H, N, N]

        alpha_bf = alpha.astype(jnp.bfloat16)
        xp_bf = xp.astype(jnp.bfloat16)
        # alpha_h @ xp_h per head (batch dims don't fuse on the MXU anyway);
        # result is assembled lane-dense as [N, H*F_out].
        head_outs = [
            jnp.dot(alpha_bf[h], xp_bf[:, h * F_out:(h + 1) * F_out],
                    preferred_element_type=jnp.float32)
            for h in range(H)
        ]
        z_m = jnp.concatenate(head_outs, axis=-1) + bias_ref[m]     # [N, HF]
        z_list.append(z_m)

    # ------------- semantic attention (softmax over meta-paths) --------------
    # Batch all meta-paths through the projection MLP with ONE matmul each:
    # stack along the sublane axis -> [M*N, HF].
    z_all = jnp.concatenate(z_list, axis=0)                         # [M*N, HF]
    hidden = jnp.tanh(
        jnp.dot(z_all.astype(jnp.bfloat16), sw1_ref[...].astype(jnp.bfloat16),
                preferred_element_type=jnp.float32) + sb1_ref[...])  # [M*N, K]
    scores = jnp.dot(hidden.astype(jnp.bfloat16),
                     sw2_ref[...].astype(jnp.bfloat16),
                     preferred_element_type=jnp.float32)             # [M*N, 1]

    # softmax over the M meta-paths, per node (dim=1 in the PyTorch reference)
    s_cols = [scores[m * N:(m + 1) * N, :] for m in range(M)]        # [N,1] each
    mx = s_cols[0]
    for m in range(1, M):
        mx = jnp.maximum(mx, s_cols[m])
    exps = [jnp.exp(s - mx) for s in s_cols]
    denom = exps[0]
    for m in range(1, M):
        denom = denom + exps[m]
    inv = 1.0 / denom                                                # [N, 1]

    acc = (exps[0] * inv) * z_list[0]
    for m in range(1, M):
        acc = acc + (exps[m] * inv) * z_list[m]
    out_ref[...] = acc.astype(out_ref.dtype)


def iarnet_layer(x, W_flat, A_src, A_dst, bias, adj, sem_w1, sem_b1, sem_w2):
    """One fused IARNetLayer forward. Returns [N, H*F_out]."""
    N = x.shape[0]
    HF = W_flat.shape[2]
    vmem = pl.BlockSpec(memory_space=pltpu.MemorySpace.VMEM)
    return pl.pallas_call(
        iarnet_layer_kernel,
        out_shape=jax.ShapeDtypeStruct((N, HF), jnp.float32),
        in_specs=[vmem] * 9,
        out_specs=pl.BlockSpec(memory_space=pltpu.MemorySpace.VMEM),
    )(x, W_flat, A_src, A_dst, bias, adj, sem_w1, sem_b1, sem_w2)
    # NOTE: no grid — everything (all meta-paths + semantic attention) runs in a
    # single invocation; at these sizes that beats a grid over M even on v7x,
    # since fusion removes 2 launches + a transpose + an HBM round-trip/layer.
    # TODO(synk): for realistic graph sizes, tile the [N,N] softmax online
    # (flash style) and reconsider a parallel M grid axis for v7x's 2 TCs.


# ----------------------------------------------------------------------------
# Parameter setup + full IARNet forward
# ----------------------------------------------------------------------------
def init_iarnet_params(key, num_meta_paths, in_size, hidden_size, num_heads,
                       sem_hidden=128):
    params = []
    prev = in_size
    for heads in num_heads:
        key, k_w, k_as, k_ad, k_w1, k_b1, k_w2 = jax.random.split(key, 7)
        w_scale = 1.0 / jnp.sqrt(jnp.float32(prev))
        HF = heads * hidden_size

        W = jax.random.normal(
            k_w, (num_meta_paths, heads, prev, hidden_size), jnp.float32) * w_scale
        att_src = jax.random.normal(
            k_as, (num_meta_paths, heads, hidden_size), jnp.float32) * 0.1
        att_dst = jax.random.normal(
            k_ad, (num_meta_paths, heads, hidden_size), jnp.float32) * 0.1

        # Head-flattened projection: [M, F_in, H*F_out]
        W_flat = jnp.transpose(W, (0, 2, 1, 3)).reshape(num_meta_paths, prev, HF)
        # Block-diagonal attention vectors: A[m, h*F+f, h'] = att[m,h,f]*[h==h']
        eye = jnp.eye(heads, dtype=jnp.float32)
        A_src = (att_src[:, :, :, None] * eye[:, None, :]).reshape(
            num_meta_paths, HF, heads)
        A_dst = (att_dst[:, :, :, None] * eye[:, None, :]).reshape(
            num_meta_paths, HF, heads)

        layer = dict(
            W_flat=W_flat,
            A_src=A_src,
            A_dst=A_dst,
            bias=jnp.zeros((num_meta_paths, 1, HF), jnp.float32),
            sem_w1=jax.random.normal(k_w1, (HF, sem_hidden), jnp.float32)
                   * (1.0 / jnp.sqrt(jnp.float32(HF))),
            sem_b1=jax.random.normal(k_b1, (1, sem_hidden), jnp.float32) * 0.01,
            sem_w2=jax.random.normal(k_w2, (sem_hidden, 1), jnp.float32)
                   * (1.0 / jnp.sqrt(jnp.float32(sem_hidden))),
        )
        params.append(layer)
        prev = HF
    return params


def iarnet_forward(params, adj, h):
    """adj: [M, N, N] dense per-meta-path adjacency (with self-loops);
       h: [N, in_size]."""
    for layer in params:
        h = iarnet_layer(h, layer["W_flat"], layer["A_src"], layer["A_dst"],
                         layer["bias"], adj,
                         layer["sem_w1"], layer["sem_b1"], layer["sem_w2"])
    return h


if __name__ == "__main__":
    key = jax.random.PRNGKey(0)

    num_meta_paths = 2
    N = 16             # number of graph nodes
    in_size = 16
    hidden_size = 8
    out_size = 4       # NOTE: unused by IARNet.forward (kept for signature parity)
    num_heads = [2, 2]
    dropout = 0.5      # eval-mode forward: dropout is identity

    key, k_x, k_adj, k_p = jax.random.split(key, 4)
    x = jax.random.normal(k_x, (N, in_size), jnp.float32)

    # Random directed graph per meta-path + self-loops (GATConv add_self_loops=True).
    # Self-loops are REQUIRED: they guarantee every softmax row has an unmasked entry.
    rand = jax.random.uniform(k_adj, (num_meta_paths, N, N))
    adj = (rand < 0.3).astype(jnp.float32)
    adj = jnp.maximum(adj, jnp.eye(N, dtype=jnp.float32)[None])

    params = init_iarnet_params(k_p, num_meta_paths, in_size, hidden_size, num_heads)

    fwd = jax.jit(iarnet_forward)
    out = fwd(params, adj, x)
    out = jax.block_until_ready(out)

    assert out.shape == (N, hidden_size * num_heads[-1]), out.shape
    assert bool(jnp.all(jnp.isfinite(out)))
    print("KERNEL_OK")
</pallas_src>

<mosaic_0001>
module attributes {stable_mosaic.version = 11 : i64} {
  func.func @iarnet_layer_kernel(%arg0: memref<16x16xf32, #tpu.memory_space<vmem>>, %arg1: memref<2x16x16xf32, #tpu.memory_space<vmem>>, %arg2: memref<2x16x2xf32, #tpu.memory_space<vmem>>, %arg3: memref<2x16x2xf32, #tpu.memory_space<vmem>>, %arg4: memref<2x1x16xf32, #tpu.memory_space<vmem>>, %arg5: memref<2x16x16xf32, #tpu.memory_space<vmem>>, %arg6: memref<16x128xf32, #tpu.memory_space<vmem>>, %arg7: memref<1x128xf32, #tpu.memory_space<vmem>>, %arg8: memref<128x1xf32, #tpu.memory_space<vmem>>, %arg9: memref<16x16xf32, #tpu.memory_space<vmem>>) attributes {dimension_semantics = [], scalar_prefetch = 0 : i64, scratch_operands = 0 : i64, tpu.core_type = #tpu.core_type<tc>} {
    %c0 = arith.constant 0 : index
    %c0_0 = arith.constant 0 : index
    %0 = vector.load %arg0[%c0, %c0_0] : memref<16x16xf32, #tpu.memory_space<vmem>>, vector<16x16xf32>
    %1 = arith.truncf %0 : vector<16x16xf32> to vector<16x16xbf16>
    %c0_1 = arith.constant 0 : index
    %c0_2 = arith.constant 0 : index
    %c0_3 = arith.constant 0 : index
    %2 = vector.load %arg5[%c0_1, %c0_2, %c0_3] : memref<2x16x16xf32, #tpu.memory_space<vmem>>, vector<1x16x16xf32>
    %3 = vector.shape_cast %2 : vector<1x16x16xf32> to vector<16x16xf32>
    %cst = arith.constant 5.000000e-01 : f32
    %4 = vector.broadcast %cst : f32 to vector<16x16xf32>
    %5 = arith.cmpf ogt, %3, %4 : vector<16x16xf32>
    %c0_4 = arith.constant 0 : index
    %c0_5 = arith.constant 0 : index
    %c0_6 = arith.constant 0 : index
    %6 = vector.load %arg1[%c0_4, %c0_5, %c0_6] : memref<2x16x16xf32, #tpu.memory_space<vmem>>, vector<1x16x16xf32>
    %7 = vector.shape_cast %6 : vector<1x16x16xf32> to vector<16x16xf32>
    %8 = arith.truncf %7 : vector<16x16xf32> to vector<16x16xbf16>
    %cst_7 = arith.constant dense<0.000000e+00> : vector<16x16xf32>
    %9 = tpu.matmul %1, %8, %cst_7 {dimension_numbers = #tpu.dot_dimension_numbers<[1], [0], [0], [1], [0, 0, 1, 1], [], []>} : vector<16x16xbf16>, vector<16x16xbf16>, vector<16x16xf32> -> vector<16x16xf32>
    %c0_8 = arith.constant 0 : index
    %c0_9 = arith.constant 0 : index
    %c0_10 = arith.constant 0 : index
    %10 = vector.load %arg2[%c0_8, %c0_9, %c0_10] : memref<2x16x2xf32, #tpu.memory_space<vmem>>, vector<1x16x2xf32>
    %11 = vector.shape_cast %10 : vector<1x16x2xf32> to vector<16x2xf32>
    %cst_11 = arith.constant dense<0.000000e+00> : vector<16x2xf32>
    %12 = tpu.matmul %9, %11, %cst_11 {dimension_numbers = #tpu.dot_dimension_numbers<[1], [0], [0], [1], [0, 0, 1, 1], [], []>} : vector<16x16xf32>, vector<16x2xf32>, vector<16x2xf32> -> vector<16x2xf32>
    %c0_12 = arith.constant 0 : index
    %c0_13 = arith.constant 0 : index
    %c0_14 = arith.constant 0 : index
    %13 = vector.load %arg3[%c0_12, %c0_13, %c0_14] : memref<2x16x2xf32, #tpu.memory_space<vmem>>, vector<1x16x2xf32>
    %14 = vector.shape_cast %13 : vector<1x16x2xf32> to vector<16x2xf32>
    %cst_15 = arith.constant dense<0.000000e+00> : vector<16x2xf32>
    %15 = tpu.matmul %9, %14, %cst_15 {dimension_numbers = #tpu.dot_dimension_numbers<[1], [0], [0], [1], [0, 0, 1, 1], [], []>} : vector<16x16xf32>, vector<16x2xf32>, vector<16x2xf32> -> vector<16x2xf32>
    %16 = tpu.transpose %15, [1, 0] : vector<16x2xf32> -> vector<2x16xf32>
    %17 = vector.shape_cast %16 : vector<2x16xf32> to vector<2x16x1xf32>
    %18 = tpu.transpose %12, [1, 0] : vector<16x2xf32> -> vector<2x16xf32>
    %19 = vector.shape_cast %18 : vector<2x16xf32> to vector<2x1x16xf32>
    %20 = vector.broadcast %17 : vector<2x16x1xf32> to vector<2x16x16xf32>
    %21 = vector.broadcast %19 : vector<2x1x16xf32> to vector<2x16x16xf32>
    %22 = arith.addf %20, %21 : vector<2x16x16xf32>
    %cst_16 = arith.constant 0.000000e+00 : f32
    %23 = vector.broadcast %cst_16 : f32 to vector<2x16x16xf32>
    %24 = arith.cmpf ogt, %22, %23 : vector<2x16x16xf32>
    %cst_17 = arith.constant 2.000000e-01 : f32
    %25 = vector.broadcast %cst_17 : f32 to vector<2x16x16xf32>
    %26 = arith.mulf %25, %22 : vector<2x16x16xf32>
    %27 = arith.select %24, %22, %26 : vector<2x16x16xi1>, vector<2x16x16xf32>
    %28 = vector.shape_cast %5 : vector<16x16xi1> to vector<1x16x16xi1>
    %cst_18 = arith.constant -1.000000e+30 : f32
    %29 = vector.shape_cast %28 : vector<1x16x16xi1> to vector<1x16x16xi1>
    %30 = vector.broadcast %29 : vector<1x16x16xi1> to vector<2x16x16xi1>
    %31 = vector.broadcast %cst_18 : f32 to vector<2x16x16xf32>
    %32 = arith.select %30, %27, %31 : vector<2x16x16xi1>, vector<2x16x16xf32>
    %cst_19 = arith.constant dense<0xFF800000> : vector<2x16xf32>
    %33 = vector.multi_reduction <maximumf>, %32, %cst_19 [2] : vector<2x16x16xf32> to vector<2x16xf32>
    %34 = vector.shape_cast %33 : vector<2x16xf32> to vector<2x16x1xf32>
    %35 = vector.broadcast %34 : vector<2x16x1xf32> to vector<2x16x16xf32>
    %36 = arith.subf %32, %35 : vector<2x16x16xf32>
    %37 = math.exp %36 : vector<2x16x16xf32>
    %38 = vector.shape_cast %5 : vector<16x16xi1> to vector<1x16x16xi1>
    %cst_20 = arith.constant 0.000000e+00 : f32
    %39 = vector.shape_cast %38 : vector<1x16x16xi1> to vector<1x16x16xi1>
    %40 = vector.broadcast %39 : vector<1x16x16xi1> to vector<2x16x16xi1>
    %41 = vector.broadcast %cst_20 : f32 to vector<2x16x16xf32>
    %42 = arith.select %40, %37, %41 : vector<2x16x16xi1>, vector<2x16x16xf32>
    %cst_21 = arith.constant dense<0.000000e+00> : vector<2x16xf32>
    %43 = vector.multi_reduction <add>, %42, %cst_21 [2] : vector<2x16x16xf32> to vector<2x16xf32>
    %44 = vector.shape_cast %43 : vector<2x16xf32> to vector<2x16x1xf32>
    %45 = vector.broadcast %44 : vector<2x16x1xf32> to vector<2x16x16xf32>
    %46 = arith.divf %42, %45 : vector<2x16x16xf32>
    %47 = arith.truncf %46 : vector<2x16x16xf32> to vector<2x16x16xbf16>
    %48 = arith.truncf %9 : vector<16x16xf32> to vector<16x16xbf16>
    %49 = vector.extract_strided_slice %47 {offsets = [0, 0, 0], sizes = [1, 16, 16], strides = [1, 1, 1]} : vector<2x16x16xbf16> to vector<1x16x16xbf16>
    %50 = vector.shape_cast %49 : vector<1x16x16xbf16> to vector<16x16xbf16>
    %51 = vector.extract_strided_slice %48 {offsets = [0, 0], sizes = [16, 8], strides = [1, 1]} : vector<16x16xbf16> to vector<16x8xbf16>
    %cst_22 = arith.constant dense<0.000000e+00> : vector<16x8xf32>
    %52 = tpu.matmul %50, %51, %cst_22 {dimension_numbers = #tpu.dot_dimension_numbers<[1], [0], [0], [1], [0, 0, 1, 1], [], []>} : vector<16x16xbf16>, vector<16x8xbf16>, vector<16x8xf32> -> vector<16x8xf32>
    %53 = vector.extract_strided_slice %47 {offsets = [1, 0, 0], sizes = [1, 16, 16], strides = [1, 1, 1]} : vector<2x16x16xbf16> to vector<1x16x16xbf16>
    %54 = vector.shape_cast %53 : vector<1x16x16xbf16> to vector<16x16xbf16>
    %55 = vector.extract_strided_slice %48 {offsets = [0, 8], sizes = [16, 8], strides = [1, 1]} : vector<16x16xbf16> to vector<16x8xbf16>
    %cst_23 = arith.constant dense<0.000000e+00> : vector<16x8xf32>
    %56 = tpu.matmul %54, %55, %cst_23 {dimension_numbers = #tpu.dot_dimension_numbers<[1], [0], [0], [1], [0, 0, 1, 1], [], []>} : vector<16x16xbf16>, vector<16x8xbf16>, vector<16x8xf32> -> vector<16x8xf32>
    %57 = tpu.concatenate %52, %56 in 1 : vector<16x8xf32>, vector<16x8xf32> -> vector<16x16xf32>
    %c0_24 = arith.constant 0 : index
    %c0_25 = arith.constant 0 : index
    %c0_26 = arith.constant 0 : index
    %58 = vector.load %arg4[%c0_24, %c0_25, %c0_26] : memref<2x1x16xf32, #tpu.memory_space<vmem>>, vector<1x1x16xf32>
    %59 = vector.shape_cast %58 : vector<1x1x16xf32> to vector<1x16xf32>
    %60 = vector.broadcast %59 : vector<1x16xf32> to vector<16x16xf32>
    %61 = arith.addf %57, %60 : vector<16x16xf32>
    %c1 = arith.constant 1 : index
    %c0_27 = arith.constant 0 : index
    %c0_28 = arith.constant 0 : index
    %62 = vector.load %arg5[%c1, %c0_27, %c0_28] : memref<2x16x16xf32, #tpu.memory_space<vmem>>, vector<1x16x16xf32>
    %63 = vector.shape_cast %62 : vector<1x16x16xf32> to vector<16x16xf32>
    %cst_29 = arith.constant 5.000000e-01 : f32
    %64 = vector.broadcast %cst_29 : f32 to vector<16x16xf32>
    %65 = arith.cmpf ogt, %63, %64 : vector<16x16xf32>
    %c1_30 = arith.constant 1 : index
    %c0_31 = arith.constant 0 : index
    %c0_32 = arith.constant 0 : index
    %66 = vector.load %arg1[%c1_30, %c0_31, %c0_32] : memref<2x16x16xf32, #tpu.memory_space<vmem>>, vector<1x16x16xf32>
    %67 = vector.shape_cast %66 : vector<1x16x16xf32> to vector<16x16xf32>
    %68 = arith.truncf %67 : vector<16x16xf32> to vector<16x16xbf16>
    %cst_33 = arith.constant dense<0.000000e+00> : vector<16x16xf32>
    %69 = tpu.matmul %1, %68, %cst_33 {dimension_numbers = #tpu.dot_dimension_numbers<[1], [0], [0], [1], [0, 0, 1, 1], [], []>} : vector<16x16xbf16>, vector<16x16xbf16>, vector<16x16xf32> -> vector<16x16xf32>
    %c1_34 = arith.constant 1 : index
    %c0_35 = arith.constant 0 : index
    %c0_36 = arith.constant 0 : index
    %70 = vector.load %arg2[%c1_34, %c0_35, %c0_36] : memref<2x16x2xf32, #tpu.memory_space<vmem>>, vector<1x16x2xf32>
    %71 = vector.shape_cast %70 : vector<1x16x2xf32> to vector<16x2xf32>
    %cst_37 = arith.constant dense<0.000000e+00> : vector<16x2xf32>
    %72 = tpu.matmul %69, %71, %cst_37 {dimension_numbers = #tpu.dot_dimension_numbers<[1], [0], [0], [1], [0, 0, 1, 1], [], []>} : vector<16x16xf32>, vector<16x2xf32>, vector<16x2xf32> -> vector<16x2xf32>
    %c1_38 = arith.constant 1 : index
    %c0_39 = arith.constant 0 : index
    %c0_40 = arith.constant 0 : index
    %73 = vector.load %arg3[%c1_38, %c0_39, %c0_40] : memref<2x16x2xf32, #tpu.memory_space<vmem>>, vector<1x16x2xf32>
    %74 = vector.shape_cast %73 : vector<1x16x2xf32> to vector<16x2xf32>
    %cst_41 = arith.constant dense<0.000000e+00> : vector<16x2xf32>
    %75 = tpu.matmul %69, %74, %cst_41 {dimension_numbers = #tpu.dot_dimension_numbers<[1], [0], [0], [1], [0, 0, 1, 1], [], []>} : vector<16x16xf32>, vector<16x2xf32>, vector<16x2xf32> -> vector<16x2xf32>
    %76 = tpu.transpose %75, [1, 0] : vector<16x2xf32> -> vector<2x16xf32>
    %77 = vector.shape_cast %76 : vector<2x16xf32> to vector<2x16x1xf32>
    %78 = tpu.transpose %72, [1, 0] : vector<16x2xf32> -> vector<2x16xf32>
    %79 = vector.shape_cast %78 : vector<2x16xf32> to vector<2x1x16xf32>
    %80 = vector.broadcast %77 : vector<2x16x1xf32> to vector<2x16x16xf32>
    %81 = vector.broadcast %79 : vector<2x1x16xf32> to vector<2x16x16xf32>
    %82 = arith.addf %80, %81 : vector<2x16x16xf32>
    %cst_42 = arith.constant 0.000000e+00 : f32
    %83 = vector.broadcast %cst_42 : f32 to vector<2x16x16xf32>
    %84 = arith.cmpf ogt, %82, %83 : vector<2x16x16xf32>
    %cst_43 = arith.constant 2.000000e-01 : f32
    %85 = vector.broadcast %cst_43 : f32 to vector<2x16x16xf32>
    %86 = arith.mulf %85, %82 : vector<2x16x16xf32>
    %87 = arith.select %84, %82, %86 : vector<2x16x16xi1>, vector<2x16x16xf32>
    %88 = vector.shape_cast %65 : vector<16x16xi1> to vector<1x16x16xi1>
    %cst_44 = arith.constant -1.000000e+30 : f32
    %89 = vector.shape_cast %88 : vector<1x16x16xi1> to vector<1x16x16xi1>
    %90 = vector.broadcast %89 : vector<1x16x16xi1> to vector<2x16x16xi1>
    %91 = vector.broadcast %cst_44 : f32 to vector<2x16x16xf32>
    %92 = arith.select %90, %87, %91 : vector<2x16x16xi1>, vector<2x16x16xf32>
    %cst_45 = arith.constant dense<0xFF800000> : vector<2x16xf32>
    %93 = vector.multi_reduction <maximumf>, %92, %cst_45 [2] : vector<2x16x16xf32> to vector<2x16xf32>
    %94 = vector.shape_cast %93 : vector<2x16xf32> to vector<2x16x1xf32>
    %95 = vector.broadcast %94 : vector<2x16x1xf32> to vector<2x16x16xf32>
    %96 = arith.subf %92, %95 : vector<2x16x16xf32>
    %97 = math.exp %96 : vector<2x16x16xf32>
    %98 = vector.shape_cast %65 : vector<16x16xi1> to vector<1x16x16xi1>
    %cst_46 = arith.constant 0.000000e+00 : f32
    %99 = vector.shape_cast %98 : vector<1x16x16xi1> to vector<1x16x16xi1>
    %100 = vector.broadcast %99 : vector<1x16x16xi1> to vector<2x16x16xi1>
    %101 = vector.broadcast %cst_46 : f32 to vector<2x16x16xf32>
    %102 = arith.select %100, %97, %101 : vector<2x16x16xi1>, vector<2x16x16xf32>
    %cst_47 = arith.constant dense<0.000000e+00> : vector<2x16xf32>
    %103 = vector.multi_reduction <add>, %102, %cst_47 [2] : vector<2x16x16xf32> to vector<2x16xf32>
    %104 = vector.shape_cast %103 : vector<2x16xf32> to vector<2x16x1xf32>
    %105 = vector.broadcast %104 : vector<2x16x1xf32> to vector<2x16x16xf32>
    %106 = arith.divf %102, %105 : vector<2x16x16xf32>
    %107 = arith.truncf %106 : vector<2x16x16xf32> to vector<2x16x16xbf16>
    %108 = arith.truncf %69 : vector<16x16xf32> to vector<16x16xbf16>
    %109 = vector.extract_strided_slice %107 {offsets = [0, 0, 0], sizes = [1, 16, 16], strides = [1, 1, 1]} : vector<2x16x16xbf16> to vector<1x16x16xbf16>
    %110 = vector.shape_cast %109 : vector<1x16x16xbf16> to vector<16x16xbf16>
    %111 = vector.extract_strided_slice %108 {offsets = [0, 0], sizes = [16, 8], strides = [1, 1]} : vector<16x16xbf16> to vector<16x8xbf16>
    %cst_48 = arith.constant dense<0.000000e+00> : vector<16x8xf32>
    %112 = tpu.matmul %110, %111, %cst_48 {dimension_numbers = #tpu.dot_dimension_numbers<[1], [0], [0], [1], [0, 0, 1, 1], [], []>} : vector<16x16xbf16>, vector<16x8xbf16>, vector<16x8xf32> -> vector<16x8xf32>
    %113 = vector.extract_strided_slice %107 {offsets = [1, 0, 0], sizes = [1, 16, 16], strides = [1, 1, 1]} : vector<2x16x16xbf16> to vector<1x16x16xbf16>
    %114 = vector.shape_cast %113 : vector<1x16x16xbf16> to vector<16x16xbf16>
    %115 = vector.extract_strided_slice %108 {offsets = [0, 8], sizes = [16, 8], strides = [1, 1]} : vector<16x16xbf16> to vector<16x8xbf16>
    %cst_49 = arith.constant dense<0.000000e+00> : vector<16x8xf32>
    %116 = tpu.matmul %114, %115, %cst_49 {dimension_numbers = #tpu.dot_dimension_numbers<[1], [0], [0], [1], [0, 0, 1, 1], [], []>} : vector<16x16xbf16>, vector<16x8xbf16>, vector<16x8xf32> -> vector<16x8xf32>
    %117 = tpu.concatenate %112, %116 in 1 : vector<16x8xf32>, vector<16x8xf32> -> vector<16x16xf32>
    %c1_50 = arith.constant 1 : index
    %c0_51 = arith.constant 0 : index
    %c0_52 = arith.constant 0 : index
    %118 = vector.load %arg4[%c1_50, %c0_51, %c0_52] : memref<2x1x16xf32, #tpu.memory_space<vmem>>, vector<1x1x16xf32>
    %119 = vector.shape_cast %118 : vector<1x1x16xf32> to vector<1x16xf32>
    %120 = vector.broadcast %119 : vector<1x16xf32> to vector<16x16xf32>
    %121 = arith.addf %117, %120 : vector<16x16xf32>
    %122 = tpu.concatenate %61, %121 in 0 : vector<16x16xf32>, vector<16x16xf32> -> vector<32x16xf32>
    %123 = arith.truncf %122 : vector<32x16xf32> to vector<32x16xbf16>
    %c0_53 = arith.constant 0 : index
    %c0_54 = arith.constant 0 : index
    %124 = vector.load %arg6[%c0_53, %c0_54] : memref<16x128xf32, #tpu.memory_space<vmem>>, vector<16x128xf32>
    %125 = arith.truncf %124 : vector<16x128xf32> to vector<16x128xbf16>
    %cst_55 = arith.constant dense<0.000000e+00> : vector<32x128xf32>
    %126 = tpu.matmul %123, %125, %cst_55 {dimension_numbers = #tpu.dot_dimension_numbers<[1], [0], [0], [1], [0, 0, 1, 1], [], []>} : vector<32x16xbf16>, vector<16x128xbf16>, vector<32x128xf32> -> vector<32x128xf32>
    %c0_56 = arith.constant 0 : index
    %c0_57 = arith.constant 0 : index
    %127 = vector.load %arg7[%c0_56, %c0_57] : memref<1x128xf32, #tpu.memory_space<vmem>>, vector<1x128xf32>
    %128 = vector.broadcast %127 : vector<1x128xf32> to vector<32x128xf32>
    %129 = arith.addf %126, %128 : vector<32x128xf32>
    %130 = math.tanh %129 : vector<32x128xf32>
    %131 = arith.truncf %130 : vector<32x128xf32> to vector<32x128xbf16>
    %c0_58 = arith.constant 0 : index
    %c0_59 = arith.constant 0 : index
    %132 = vector.load %arg8[%c0_58, %c0_59] : memref<128x1xf32, #tpu.memory_space<vmem>>, vector<128x1xf32>
    %133 = arith.truncf %132 : vector<128x1xf32> to vector<128x1xbf16>
    %cst_60 = arith.constant dense<0.000000e+00> : vector<32x1xf32>
    %134 = tpu.matmul %131, %133, %cst_60 {dimension_numbers = #tpu.dot_dimension_numbers<[1], [0], [0], [1], [0, 0, 1, 1], [], []>} : vector<32x128xbf16>, vector<128x1xbf16>, vector<32x1xf32> -> vector<32x1xf32>
    %135 = vector.extract_strided_slice %134 {offsets = [0, 0], sizes = [16, 1], strides = [1, 1]} : vector<32x1xf32> to vector<16x1xf32>
    %136 = vector.extract_strided_slice %134 {offsets = [16, 0], sizes = [16, 1], strides = [1, 1]} : vector<32x1xf32> to vector<16x1xf32>
    %137 = arith.maximumf %135, %136 : vector<16x1xf32>
    %138 = arith.subf %135, %137 : vector<16x1xf32>
    %139 = math.exp %138 : vector<16x1xf32>
    %140 = arith.subf %136, %137 : vector<16x1xf32>
    %141 = math.exp %140 : vector<16x1xf32>
    %142 = arith.addf %139, %141 : vector<16x1xf32>
    %cst_61 = arith.constant 1.000000e+00 : f32
    %143 = vector.broadcast %cst_61 : f32 to vector<16x1xf32>
    %144 = arith.divf %143, %142 : vector<16x1xf32>
    %145 = arith.mulf %139, %144 : vector<16x1xf32>
    %146 = vector.broadcast %145 : vector<16x1xf32> to vector<16x16xf32>
    %147 = arith.mulf %146, %61 : vector<16x16xf32>
    %148 = arith.mulf %141, %144 : vector<16x1xf32>
    %149 = vector.broadcast %148 : vector<16x1xf32> to vector<16x16xf32>
    %150 = arith.mulf %149, %121 : vector<16x16xf32>
    %151 = arith.addf %147, %150 : vector<16x16xf32>
    %c0_62 = arith.constant 0 : index
    %c0_63 = arith.constant 0 : index
    %152 = vector.load %arg9[%c0_62, %c0_63] : memref<16x16xf32, #tpu.memory_space<vmem>>, vector<16x16xf32>
    tpu.vector_store %arg9[%c0_62, %c0_63], %151 {strides = array<i32>} : memref<16x16xf32, #tpu.memory_space<vmem>>, vector<16x16xf32>,
    return
  }
}

module attributes {stable_mosaic.version = 11 : i64} {
  func.func @iarnet_layer_kernel(%arg0: memref<16x16xf32, #tpu.memory_space<vmem>>, %arg1: memref<2x16x16xf32, #tpu.memory_space<vmem>>, %arg2: memref<2x16x2xf32, #tpu.memory_space<vmem>>, %arg3: memref<2x16x2xf32, #tpu.memory_space<vmem>>, %arg4: memref<2x1x16xf32, #tpu.memory_space<vmem>>, %arg5: memref<2x16x16xf32, #tpu.memory_space<vmem>>, %arg6: memref<16x128xf32, #tpu.memory_space<vmem>>, %arg7: memref<1x128xf32, #tpu.memory_space<vmem>>, %arg8: memref<128x1xf32, #tpu.memory_space<vmem>>, %arg9: memref<16x16xf32, #tpu.memory_space<vmem>>) attributes {dimension_semantics = [], scalar_prefetch = 0 : i64, scratch_operands = 0 : i64, tpu.core_type = #tpu.core_type<tc>} {
    %c0 = arith.constant 0 : index
    %c0_0 = arith.constant 0 : index
    %0 = vector.load %arg0[%c0, %c0_0] : memref<16x16xf32, #tpu.memory_space<vmem>>, vector<16x16xf32>
    %1 = arith.truncf %0 : vector<16x16xf32> to vector<16x16xbf16>
    %c0_1 = arith.constant 0 : index
    %c0_2 = arith.constant 0 : index
    %c0_3 = arith.constant 0 : index
    %2 = vector.load %arg5[%c0_1, %c0_2, %c0_3] : memref<2x16x16xf32, #tpu.memory_space<vmem>>, vector<1x16x16xf32>
    %3 = vector.shape_cast %2 : vector<1x16x16xf32> to vector<16x16xf32>
    %cst = arith.constant 5.000000e-01 : f32
    %4 = vector.broadcast %cst : f32 to vector<16x16xf32>
    %5 = arith.cmpf ogt, %3, %4 : vector<16x16xf32>
    %c0_4 = arith.constant 0 : index
    %c0_5 = arith.constant 0 : index
    %c0_6 = arith.constant 0 : index
    %6 = vector.load %arg1[%c0_4, %c0_5, %c0_6] : memref<2x16x16xf32, #tpu.memory_space<vmem>>, vector<1x16x16xf32>
    %7 = vector.shape_cast %6 : vector<1x16x16xf32> to vector<16x16xf32>
    %8 = arith.truncf %7 : vector<16x16xf32> to vector<16x16xbf16>
    %cst_7 = arith.constant dense<0.000000e+00> : vector<16x16xf32>
    %9 = tpu.matmul %1, %8, %cst_7 {dimension_numbers = #tpu.dot_dimension_numbers<[1], [0], [0], [1], [0, 0, 1, 1], [], []>} : vector<16x16xbf16>, vector<16x16xbf16>, vector<16x16xf32> -> vector<16x16xf32>
    %c0_8 = arith.constant 0 : index
    %c0_9 = arith.constant 0 : index
    %c0_10 = arith.constant 0 : index
    %10 = vector.load %arg2[%c0_8, %c0_9, %c0_10] : memref<2x16x2xf32, #tpu.memory_space<vmem>>, vector<1x16x2xf32>
    %11 = vector.shape_cast %10 : vector<1x16x2xf32> to vector<16x2xf32>
    %cst_11 = arith.constant dense<0.000000e+00> : vector<16x2xf32>
    %12 = tpu.matmul %9, %11, %cst_11 {dimension_numbers = #tpu.dot_dimension_numbers<[1], [0], [0], [1], [0, 0, 1, 1], [], []>} : vector<16x16xf32>, vector<16x2xf32>, vector<16x2xf32> -> vector<16x2xf32>
    %c0_12 = arith.constant 0 : index
    %c0_13 = arith.constant 0 : index
    %c0_14 = arith.constant 0 : index
    %13 = vector.load %arg3[%c0_12, %c0_13, %c0_14] : memref<2x16x2xf32, #tpu.memory_space<vmem>>, vector<1x16x2xf32>
    %14 = vector.shape_cast %13 : vector<1x16x2xf32> to vector<16x2xf32>
    %cst_15 = arith.constant dense<0.000000e+00> : vector<16x2xf32>
    %15 = tpu.matmul %9, %14, %cst_15 {dimension_numbers = #tpu.dot_dimension_numbers<[1], [0], [0], [1], [0, 0, 1, 1], [], []>} : vector<16x16xf32>, vector<16x2xf32>, vector<16x2xf32> -> vector<16x2xf32>
    %16 = tpu.transpose %15, [1, 0] : vector<16x2xf32> -> vector<2x16xf32>
    %17 = vector.shape_cast %16 : vector<2x16xf32> to vector<2x16x1xf32>
    %18 = tpu.transpose %12, [1, 0] : vector<16x2xf32> -> vector<2x16xf32>
    %19 = vector.shape_cast %18 : vector<2x16xf32> to vector<2x1x16xf32>
    %20 = vector.broadcast %17 : vector<2x16x1xf32> to vector<2x16x16xf32>
    %21 = vector.broadcast %19 : vector<2x1x16xf32> to vector<2x16x16xf32>
    %22 = arith.addf %20, %21 : vector<2x16x16xf32>
    %cst_16 = arith.constant 0.000000e+00 : f32
    %23 = vector.broadcast %cst_16 : f32 to vector<2x16x16xf32>
    %24 = arith.cmpf ogt, %22, %23 : vector<2x16x16xf32>
    %cst_17 = arith.constant 2.000000e-01 : f32
    %25 = vector.broadcast %cst_17 : f32 to vector<2x16x16xf32>
    %26 = arith.mulf %25, %22 : vector<2x16x16xf32>
    %27 = arith.select %24, %22, %26 : vector<2x16x16xi1>, vector<2x16x16xf32>
    %28 = vector.shape_cast %5 : vector<16x16xi1> to vector<1x16x16xi1>
    %cst_18 = arith.constant -1.000000e+30 : f32
    %29 = vector.shape_cast %28 : vector<1x16x16xi1> to vector<1x16x16xi1>
    %30 = vector.broadcast %29 : vector<1x16x16xi1> to vector<2x16x16xi1>
    %31 = vector.broadcast %cst_18 : f32 to vector<2x16x16xf32>
    %32 = arith.select %30, %27, %31 : vector<2x16x16xi1>, vector<2x16x16xf32>
    %cst_19 = arith.constant dense<0xFF800000> : vector<2x16xf32>
    %33 = vector.multi_reduction <maximumf>, %32, %cst_19 [2] : vector<2x16x16xf32> to vector<2x16xf32>
    %34 = vector.shape_cast %33 : vector<2x16xf32> to vector<2x16x1xf32>
    %35 = vector.broadcast %34 : vector<2x16x1xf32> to vector<2x16x16xf32>
    %36 = arith.subf %32, %35 : vector<2x16x16xf32>
    %37 = math.exp %36 : vector<2x16x16xf32>
    %38 = vector.shape_cast %5 : vector<16x16xi1> to vector<1x16x16xi1>
    %cst_20 = arith.constant 0.000000e+00 : f32
    %39 = vector.shape_cast %38 : vector<1x16x16xi1> to vector<1x16x16xi1>
    %40 = vector.broadcast %39 : vector<1x16x16xi1> to vector<2x16x16xi1>
    %41 = vector.broadcast %cst_20 : f32 to vector<2x16x16xf32>
    %42 = arith.select %40, %37, %41 : vector<2x16x16xi1>, vector<2x16x16xf32>
    %cst_21 = arith.constant dense<0.000000e+00> : vector<2x16xf32>
    %43 = vector.multi_reduction <add>, %42, %cst_21 [2] : vector<2x16x16xf32> to vector<2x16xf32>
    %44 = vector.shape_cast %43 : vector<2x16xf32> to vector<2x16x1xf32>
    %45 = vector.broadcast %44 : vector<2x16x1xf32> to vector<2x16x16xf32>
    %46 = arith.divf %42, %45 : vector<2x16x16xf32>
    %47 = arith.truncf %46 : vector<2x16x16xf32> to vector<2x16x16xbf16>
    %48 = arith.truncf %9 : vector<16x16xf32> to vector<16x16xbf16>
    %49 = vector.extract_strided_slice %47 {offsets = [0, 0, 0], sizes = [1, 16, 16], strides = [1, 1, 1]} : vector<2x16x16xbf16> to vector<1x16x16xbf16>
    %50 = vector.shape_cast %49 : vector<1x16x16xbf16> to vector<16x16xbf16>
    %51 = vector.extract_strided_slice %48 {offsets = [0, 0], sizes = [16, 8], strides = [1, 1]} : vector<16x16xbf16> to vector<16x8xbf16>
    %cst_22 = arith.constant dense<0.000000e+00> : vector<16x8xf32>
    %52 = tpu.matmul %50, %51, %cst_22 {dimension_numbers = #tpu.dot_dimension_numbers<[1], [0], [0], [1], [0, 0, 1, 1], [], []>} : vector<16x16xbf16>, vector<16x8xbf16>, vector<16x8xf32> -> vector<16x8xf32>
    %53 = vector.extract_strided_slice %47 {offsets = [1, 0, 0], sizes = [1, 16, 16], strides = [1, 1, 1]} : vector<2x16x16xbf16> to vector<1x16x16xbf16>
    %54 = vector.shape_cast %53 : vector<1x16x16xbf16> to vector<16x16xbf16>
    %55 = vector.extract_strided_slice %48 {offsets = [0, 8], sizes = [16, 8], strides = [1, 1]} : vector<16x16xbf16> to vector<16x8xbf16>
    %cst_23 = arith.constant dense<0.000000e+00> : vector<16x8xf32>
    %56 = tpu.matmul %54, %55, %cst_23 {dimension_numbers = #tpu.dot_dimension_numbers<[1], [0], [0], [1], [0, 0, 1, 1], [], []>} : vector<16x16xbf16>, vector<16x8xbf16>, vector<16x8xf32> -> vector<16x8xf32>
    %57 = tpu.concatenate %52, %56 in 1 : vector<16x8xf32>, vector<16x8xf32> -> vector<16x16xf32>
    %c0_24 = arith.constant 0 : index
    %c0_25 = arith.constant 0 : index
    %c0_26 = arith.constant 0 : index
    %58 = vector.load %arg4[%c0_24, %c0_25, %c0_26] : memref<2x1x16xf32, #tpu.memory_space<vmem>>, vector<1x1x16xf32>
    %59 = vector.shape_cast %58 : vector<1x1x16xf32> to vector<1x16xf32>
    %60 = vector.broadcast %59 : vector<1x16xf32> to vector<16x16xf32>
    %61 = arith.addf %57, %60 : vector<16x16xf32>
    %c1 = arith.constant 1 : index
    %c0_27 = arith.constant 0 : index
    %c0_28 = arith.constant 0 : index
    %62 = vector.load %arg5[%c1, %c0_27, %c0_28] : memref<2x16x16xf32, #tpu.memory_space<vmem>>, vector<1x16x16xf32>
    %63 = vector.shape_cast %62 : vector<1x16x16xf32> to vector<16x16xf32>
    %cst_29 = arith.constant 5.000000e-01 : f32
    %64 = vector.broadcast %cst_29 : f32 to vector<16x16xf32>
    %65 = arith.cmpf ogt, %63, %64 : vector<16x16xf32>
    %c1_30 = arith.constant 1 : index
    %c0_31 = arith.constant 0 : index
    %c0_32 = arith.constant 0 : index
    %66 = vector.load %arg1[%c1_30, %c0_31, %c0_32] : memref<2x16x16xf32, #tpu.memory_space<vmem>>, vector<1x16x16xf32>
    %67 = vector.shape_cast %66 : vector<1x16x16xf32> to vector<16x16xf32>
    %68 = arith.truncf %67 : vector<16x16xf32> to vector<16x16xbf16>
    %cst_33 = arith.constant dense<0.000000e+00> : vector<16x16xf32>
    %69 = tpu.matmul %1, %68, %cst_33 {dimension_numbers = #tpu.dot_dimension_numbers<[1], [0], [0], [1], [0, 0, 1, 1], [], []>} : vector<16x16xbf16>, vector<16x16xbf16>, vector<16x16xf32> -> vector<16x16xf32>
    %c1_34 = arith.constant 1 : index
    %c0_35 = arith.constant 0 : index
    %c0_36 = arith.constant 0 : index
    %70 = vector.load %arg2[%c1_34, %c0_35, %c0_36] : memref<2x16x2xf32, #tpu.memory_space<vmem>>, vector<1x16x2xf32>
    %71 = vector.shape_cast %70 : vector<1x16x2xf32> to vector<16x2xf32>
    %cst_37 = arith.constant dense<0.000000e+00> : vector<16x2xf32>
    %72 = tpu.matmul %69, %71, %cst_37 {dimension_numbers = #tpu.dot_dimension_numbers<[1], [0], [0], [1], [0, 0, 1, 1], [], []>} : vector<16x16xf32>, vector<16x2xf32>, vector<16x2xf32> -> vector<16x2xf32>
    %c1_38 = arith.constant 1 : index
    %c0_39 = arith.constant 0 : index
    %c0_40 = arith.constant 0 : index
    %73 = vector.load %arg3[%c1_38, %c0_39, %c0_40] : memref<2x16x2xf32, #tpu.memory_space<vmem>>, vector<1x16x2xf32>
    %74 = vector.shape_cast %73 : vector<1x16x2xf32> to vector<16x2xf32>
    %cst_41 = arith.constant dense<0.000000e+00> : vector<16x2xf32>
    %75 = tpu.matmul %69, %74, %cst_41 {dimension_numbers = #tpu.dot_dimension_numbers<[1], [0], [0], [1], [0, 0, 1, 1], [], []>} : vector<16x16xf32>, vector<16x2xf32>, vector<16x2xf32> -> vector<16x2xf32>
    %76 = tpu.transpose %75, [1, 0] : vector<16x2xf32> -> vector<2x16xf32>
    %77 = vector.shape_cast %76 : vector<2x16xf32> to vector<2x16x1xf32>
    %78 = tpu.transpose %72, [1, 0] : vector<16x2xf32> -> vector<2x16xf32>
    %79 = vector.shape_cast %78 : vector<2x16xf32> to vector<2x1x16xf32>
    %80 = vector.broadcast %77 : vector<2x16x1xf32> to vector<2x16x16xf32>
    %81 = vector.broadcast %79 : vector<2x1x16xf32> to vector<2x16x16xf32>
    %82 = arith.addf %80, %81 : vector<2x16x16xf32>
    %cst_42 = arith.constant 0.000000e+00 : f32
    %83 = vector.broadcast %cst_42 : f32 to vector<2x16x16xf32>
    %84 = arith.cmpf ogt, %82, %83 : vector<2x16x16xf32>
    %cst_43 = arith.constant 2.000000e-01 : f32
    %85 = vector.broadcast %cst_43 : f32 to vector<2x16x16xf32>
    %86 = arith.mulf %85, %82 : vector<2x16x16xf32>
    %87 = arith.select %84, %82, %86 : vector<2x16x16xi1>, vector<2x16x16xf32>
    %88 = vector.shape_cast %65 : vector<16x16xi1> to vector<1x16x16xi1>
    %cst_44 = arith.constant -1.000000e+30 : f32
    %89 = vector.shape_cast %88 : vector<1x16x16xi1> to vector<1x16x16xi1>
    %90 = vector.broadcast %89 : vector<1x16x16xi1> to vector<2x16x16xi1>
    %91 = vector.broadcast %cst_44 : f32 to vector<2x16x16xf32>
    %92 = arith.select %90, %87, %91 : vector<2x16x16xi1>, vector<2x16x16xf32>
    %cst_45 = arith.constant dense<0xFF800000> : vector<2x16xf32>
    %93 = vector.multi_reduction <maximumf>, %92, %cst_45 [2] : vector<2x16x16xf32> to vector<2x16xf32>
    %94 = vector.shape_cast %93 : vector<2x16xf32> to vector<2x16x1xf32>
    %95 = vector.broadcast %94 : vector<2x16x1xf32> to vector<2x16x16xf32>
    %96 = arith.subf %92, %95 : vector<2x16x16xf32>
    %97 = math.exp %96 : vector<2x16x16xf32>
    %98 = vector.shape_cast %65 : vector<16x16xi1> to vector<1x16x16xi1>
    %cst_46 = arith.constant 0.000000e+00 : f32
    %99 = vector.shape_cast %98 : vector<1x16x16xi1> to vector<1x16x16xi1>
    %100 = vector.broadcast %99 : vector<1x16x16xi1> to vector<2x16x16xi1>
    %101 = vector.broadcast %cst_46 : f32 to vector<2x16x16xf32>
    %102 = arith.select %100, %97, %101 : vector<2x16x16xi1>, vector<2x16x16xf32>
    %cst_47 = arith.constant dense<0.000000e+00> : vector<2x16xf32>
    %103 = vector.multi_reduction <add>, %102, %cst_47 [2] : vector<2x16x16xf32> to vector<2x16xf32>
    %104 = vector.shape_cast %103 : vector<2x16xf32> to vector<2x16x1xf32>
    %105 = vector.broadcast %104 : vector<2x16x1xf32> to vector<2x16x16xf32>
    %106 = arith.divf %102, %105 : vector<2x16x16xf32>
    %107 = arith.truncf %106 : vector<2x16x16xf32> to vector<2x16x16xbf16>
    %108 = arith.truncf %69 : vector<16x16xf32> to vector<16x16xbf16>
    %109 = vector.extract_strided_slice %107 {offsets = [0, 0, 0], sizes = [1, 16, 16], strides = [1, 1, 1]} : vector<2x16x16xbf16> to vector<1x16x16xbf16>
    %110 = vector.shape_cast %109 : vector<1x16x16xbf16> to vector<16x16xbf16>
    %111 = vector.extract_strided_slice %108 {offsets = [0, 0], sizes = [16, 8], strides = [1, 1]} : vector<16x16xbf16> to vector<16x8xbf16>
    %cst_48 = arith.constant dense<0.000000e+00> : vector<16x8xf32>
    %112 = tpu.matmul %110, %111, %cst_48 {dimension_numbers = #tpu.dot_dimension_numbers<[1], [0], [0], [1], [0, 0, 1, 1], [], []>} : vector<16x16xbf16>, vector<16x8xbf16>, vector<16x8xf32> -> vector<16x8xf32>
    %113 = vector.extract_strided_slice %107 {offsets = [1, 0, 0], sizes = [1, 16, 16], strides = [1, 1, 1]} : vector<2x16x16xbf16> to vector<1x16x16xbf16>
    %114 = vector.shape_cast %113 : vector<1x16x16xbf16> to vector<16x16xbf16>
    %115 = vector.extract_strided_slice %108 {offsets = [0, 8], sizes = [16, 8], strides = [1, 1]} : vector<16x16xbf16> to vector<16x8xbf16>
    %cst_49 = arith.constant dense<0.000000e+00> : vector<16x8xf32>
    %116 = tpu.matmul %114, %115, %cst_49 {dimension_numbers = #tpu.dot_dimension_numbers<[1], [0], [0], [1], [0, 0, 1, 1], [], []>} : vector<16x16xbf16>, vector<16x8xbf16>, vector<16x8xf32> -> vector<16x8xf32>
    %117 = tpu.concatenate %112, %116 in 1 : vector<16x8xf32>, vector<16x8xf32> -> vector<16x16xf32>
    %c1_50 = arith.constant 1 : index
    %c0_51 = arith.constant 0 : index
    %c0_52 = arith.constant 0 : index
    %118 = vector.load %arg4[%c1_50, %c0_51, %c0_52] : memref<2x1x16xf32, #tpu.memory_space<vmem>>, vector<1x1x16xf32>
    %119 = vector.shape_cast %118 : vector<1x1x16xf32> to vector<1x16xf32>
    %120 = vector.broadcast %119 : vector<1x16xf32> to vector<16x16xf32>
    %121 = arith.addf %117, %120 : vector<16x16xf32>
    %122 = tpu.concatenate %61, %121 in 0 : vector<16x16xf32>, vector<16x16xf32> -> vector<32x16xf32>
    %123 = arith.truncf %122 : vector<32x16xf32> to vector<32x16xbf16>
    %c0_53 = arith.constant 0 : index
    %c0_54 = arith.constant 0 : index
    %124 = vector.load %arg6[%c0_53, %c0_54] : memref<16x128xf32, #tpu.memory_space<vmem>>, vector<16x128xf32>
    %125 = arith.truncf %124 : vector<16x128xf32> to vector<16x128xbf16>
    %cst_55 = arith.constant dense<0.000000e+00> : vector<32x128xf32>
    %126 = tpu.matmul %123, %125, %cst_55 {dimension_numbers = #tpu.dot_dimension_numbers<[1], [0], [0], [1], [0, 0, 1, 1], [], []>} : vector<32x16xbf16>, vector<16x128xbf16>, vector<32x128xf32> -> vector<32x128xf32>
    %c0_56 = arith.constant 0 : index
    %c0_57 = arith.constant 0 : index
    %127 = vector.load %arg7[%c0_56, %c0_57] : memref<1x128xf32, #tpu.memory_space<vmem>>, vector<1x128xf32>
    %128 = vector.broadcast %127 : vector<1x128xf32> to vector<32x128xf32>
    %129 = arith.addf %126, %128 : vector<32x128xf32>
    %130 = math.tanh %129 : vector<32x128xf32>
    %131 = arith.truncf %130 : vector<32x128xf32> to vector<32x128xbf16>
    %c0_58 = arith.constant 0 : index
    %c0_59 = arith.constant 0 : index
    %132 = vector.load %arg8[%c0_58, %c0_59] : memref<128x1xf32, #tpu.memory_space<vmem>>, vector<128x1xf32>
    %133 = arith.truncf %132 : vector<128x1xf32> to vector<128x1xbf16>
    %cst_60 = arith.constant dense<0.000000e+00> : vector<32x1xf32>
    %134 = tpu.matmul %131, %133, %cst_60 {dimension_numbers = #tpu.dot_dimension_numbers<[1], [0], [0], [1], [0, 0, 1, 1], [], []>} : vector<32x128xbf16>, vector<128x1xbf16>, vector<32x1xf32> -> vector<32x1xf32>
    %135 = vector.extract_strided_slice %134 {offsets = [0, 0], sizes = [16, 1], strides = [1, 1]} : vector<32x1xf32> to vector<16x1xf32>
    %136 = vector.extract_strided_slice %134 {offsets = [16, 0], sizes = [16, 1], strides = [1, 1]} : vector<32x1xf32> to vector<16x1xf32>
    %137 = arith.maximumf %135, %136 : vector<16x1xf32>
    %138 = arith.subf %135, %137 : vector<16x1xf32>
    %139 = math.exp %138 : vector<16x1xf32>
    %140 = arith.subf %136, %137 : vector<16x1xf32>
    %141 = math.exp %140 : vector<16x1xf32>
    %142 = arith.addf %139, %141 : vector<16x1xf32>
    %cst_61 = arith.constant 1.000000e+00 : f32
    %143 = vector.broadcast %cst_61 : f32 to vector<16x1xf32>
    %144 = arith.divf %143, %142 : vector<16x1xf32>
    %145 = arith.mulf %139, %144 : vector<16x1xf32>
    %146 = vector.broadcast %145 : vector<16x1xf32> to vector<16x16xf32>
    %147 = arith.mulf %146, %61 : vector<16x16xf32>
    %148 = arith.mulf %141, %144 : vector<16x1xf32>
    %149 = vector.broadcast %148 : vector<16x1xf32> to vector<16x16xf32>
    %150 = arith.mulf %149, %121 : vector<16x16xf32>
    %151 = arith.addf %147, %150 : vector<16x16xf32>
    %c0_62 = arith.constant 0 : index
    %c0_63 = arith.constant 0 : index
    %152 = vector.load %arg9[%c0_62, %c0_63] : memref<16x16xf32, #tpu.memory_space<vmem>>, vector<16x16xf32>
    tpu.vector_store %arg9[%c0_62, %c0_63], %151 {strides = array<i32>} : memref<16x16xf32, #tpu.memory_space<vmem>>, vector<16x16xf32>,
    return
  }
}

</mosaic_0001>

<llo_original>
// kernel: iarnet_forward.2
$region0: #{iarnet_forward.2}
  #allocation0 [shape = 'u32[]', space=smem, size = 0x4, offset = 0x4, fixed_abs, tag = 'smem constant byte address 0x4 - core index']
  #allocation1 [shape = 'u32[144,128]{1,0:T(1,128)}', space=vmem, size = 0x12000, scoped, tag = 'internal scratch']
  %s0 = inlined_call_operand.vmem [shape: f32[16,16], index: 0, kind: input, shape index: {}]
  %s1 = inlined_call_operand.vmem [shape: f32[2,16,16], index: 1, kind: input, shape index: {}]
  %s2 = inlined_call_operand.vmem [shape: f32[2,16,2], index: 2, kind: input, shape index: {}]
  %s3 = inlined_call_operand.vmem [shape: f32[2,16,2], index: 3, kind: input, shape index: {}]
  %s4 = inlined_call_operand.vmem [shape: f32[2,1,16], index: 4, kind: input, shape index: {}]
  %s5 = inlined_call_operand.vmem [shape: f32[2,16,16], index: 5, kind: input, shape index: {}]
  %s6 = inlined_call_operand.vmem [shape: f32[16,128], index: 6, kind: input, shape index: {}]
  %s7 = inlined_call_operand.vmem [shape: f32[1,128], index: 7, kind: input, shape index: {}]
  %s8 = inlined_call_operand.vmem [shape: f32[128,1], index: 8, kind: input, shape index: {}]
  %s9 = inlined_call_operand.vmem [shape: f32[16,16], index: 9, kind: output, shape index: {}]
  %s10 = sld [smem:[#allocation0]]
  $region46: #{iarnet_forward.2} parent=0
    _
  %s12 = ssub.s32 1, %s10
  %s13 = scalar_select 0, %s12, %s10
  // Predicated region
  $region2: #{iarnet_forward.2} parent=0 // pred_check
    _
  $region3: #{iarnet_forward.2} parent=0 // pred_check_branch
    %15 = sbr.rel (0) target = $region5
  $region4: #{iarnet_forward.2} parent=0 // pred_region
    _
  $region5: #{iarnet_forward.2} parent=0 // pred_fallthru
    _
  // Predicated region
  $region6: #{iarnet_forward.2} parent=0 // pred_check
    _
  $region7: #{iarnet_forward.2} parent=0 // pred_check_branch
    %17 = sbr.rel (0) target = $region9
  $region8: #{iarnet_forward.2} parent=0 // pred_region
    _
  $region9: #{iarnet_forward.2} parent=0 // pred_fallthru
    _
  // Predicated region
  $region10: #{iarnet_forward.2} parent=0 // pred_check
    _
  $region11: #{iarnet_forward.2} parent=0 // pred_check_branch
    %19 = sbr.rel (0) target = $region13
  $region12: #{iarnet_forward.2} parent=0 // pred_region
    _
  $region13: #{iarnet_forward.2} parent=0 // pred_fallthru
    _
  // Predicated region
  $region14: #{iarnet_forward.2} parent=0 // pred_check
    _
  $region15: #{iarnet_forward.2} parent=0 // pred_check_branch
    %21 = sbr.rel (0) target = $region17
  $region16: #{iarnet_forward.2} parent=0 // pred_region
    _
  $region17: #{iarnet_forward.2} parent=0 // pred_fallthru
    _
  // Predicated region
  $region18: #{iarnet_forward.2} parent=0 // pred_check
    _
  $region19: #{iarnet_forward.2} parent=0 // pred_check_branch
    %23 = sbr.rel (0) target = $region21
  $region20: #{iarnet_forward.2} parent=0 // pred_region
    _
  $region21: #{iarnet_forward.2} parent=0 // pred_fallthru
    _
  // Predicated region
  $region22: #{iarnet_forward.2} parent=0 // pred_check
    _
  $region23: #{iarnet_forward.2} parent=0 // pred_check_branch
    %25 = sbr.rel (0) target = $region25
  $region24: #{iarnet_forward.2} parent=0 // pred_region
    _
  $region25: #{iarnet_forward.2} parent=0 // pred_fallthru
    _
  // Predicated region
  $region26: #{iarnet_forward.2} parent=0 // pred_check
    _
  $region27: #{iarnet_forward.2} parent=0 // pred_check_branch
    %27 = sbr.rel (0) target = $region29
  $region28: #{iarnet_forward.2} parent=0 // pred_region
    _
  $region29: #{iarnet_forward.2} parent=0 // pred_fallthru
    _
  // Predicated region
  $region30: #{iarnet_forward.2} parent=0 // pred_check
    _
  $region31: #{iarnet_forward.2} parent=0 // pred_check_branch
    %29 = sbr.rel (0) target = $region33
  $region32: #{iarnet_forward.2} parent=0 // pred_region
    _
  $region33: #{iarnet_forward.2} parent=0 // pred_fallthru
    _
  // Predicated region
  $region34: #{iarnet_forward.2} parent=0 // pred_check
    _
  $region35: #{iarnet_forward.2} parent=0 // pred_check_branch
    %31 = sbr.rel (0) target = $region37
  $region36: #{iarnet_forward.2} parent=0 // pred_region
    _
  $region37: #{iarnet_forward.2} parent=0 // pred_fallthru
    _
  %v33 = vld [vmem:[%s0] sm:$0xff]
  %v34 = vld [vmem:[%s0 + $0x8] sm:$0xff]
  %v35 = vpack.c.bf16 %v34, %v33
  %v36 = vld [vmem:[%s5] sm:$0xff]
  %v37 = vld [vmem:[%s5 + $0x8] sm:$0xff]
  %vm38 = vcmp.gt.f32.partialorder %v36, 0.5
  %vm39 = vcmp.gt.f32.partialorder %v37, 0.5
  %v40 = vld [vmem:[%s1] sm:$0xff]
  %v41 = vld [vmem:[%s1 + $0x8] sm:$0xff]
  %v42 = vpack.c.bf16 %v41, %v40
  %vm43 = vcmask 130048
  %v45 = vsel %vm43, %v35, 0
  %47 = vmatprep.subr.bf16.mxu0 0
  %48 = vmatpush1.bf16.msra.mxu0 %v42
  %49 = vmatprep.subr.bf16.mxu0 0
  %50 = vmatpush1.bf16.msra.mxu0 0
  %51 = vmatprep.subr.bf16.mxu0 0
  %52 = vmatpush1.bf16.msra.mxu0 0
  %53 = vmatprep.subr.bf16.mxu0 0
  %54 = vmatpush1.bf16.msra.mxu0 0
  %55 = vmatprep.subr.bf16.mxu0 0
  %56 = vmatpush1.bf16.msra.mxu0 0
  %57 = vmatprep.subr.bf16.mxu0 0
  %58 = vmatpush1.bf16.msra.mxu0 0
  %59 = vmatprep.subr.bf16.mxu0 0
  %60 = vmatpush1.bf16.msra.mxu0 0
  %61 = vmatprep.subr.bf16.mxu0 0
  %62 = vmatpush1.bf16.msra.mxu0 0
  %63 = vmatprep.subr.bf16.mxu0 0
  %64 = vmatpush1.bf16.msra.mxu0 0
  %65 = vmatprep.subr.bf16.mxu0 0
  %66 = vmatpush1.bf16.msra.mxu0 0
  %67 = vmatprep.subr.bf16.mxu0 0
  %68 = vmatpush1.bf16.msra.mxu0 0
  %69 = vmatprep.subr.bf16.mxu0 0
  %70 = vmatpush1.bf16.msra.mxu0 0
  %71 = vmatprep.subr.bf16.mxu0 0
  %72 = vmatpush1.bf16.msra.mxu0 0
  %73 = vmatprep.subr.bf16.mxu0 0
  %74 = vmatpush1.bf16.msra.mxu0 0
  %75 = vmatprep.subr.bf16.mxu0 0
  %76 = vmatpush1.bf16.msra.mxu0 0
  %77 = vmatprep.subr.bf16.mxu0 0
  %78 = vmatpush1.bf16.msra.mxu0 0
  %79 = vmatprep.mubr.bf16.mxu0 0
  %80 = vmatmul.mubr.bf16.gmra.mrb[0].mxu0 %v45
  %v81 = vpop.f32.mrb[0].mxu0
  %v82 = vadd.f32 0.0, %v81
  %v83 = vpop.f32.mrb[0].mxu0
  %v84 = vpop.f32.mrb[0].mxu0
  %v85 = vadd.f32 0.0, %v84
  %v86 = vpop.f32.mrb[0].mxu0
  %87 = vdwg.mxu0
  %v88 = vld [vmem:[%s2] sm:$0xff]
  %v89 = vld [vmem:[%s2 + $0x8] sm:$0xff]
  %v91 = vsel %vm43, %v82, 0
  %v94 = vsel %vm43, %v85, 0
  %96 = vmatprep.subr.mxu0 0.0
  %97 = vmatpush1.msra.mxu0 %v88
  %98 = vmatprep.subr.mxu0 0.0
  %99 = vmatpush1.msra.mxu0 %v89
  %100 = vmatprep.subr.mxu0 0.0
  %101 = vmatpush1.msra.mxu0 0.0
  %102 = vmatprep.subr.mxu0 0.0
  %103 = vmatpush1.msra.mxu0 0.0
  %104 = vmatprep.subr.mxu0 0.0
  %105 = vmatpush1.msra.mxu0 0.0
  %106 = vmatprep.subr.mxu0 0.0
  %107 = vmatpush1.msra.mxu0 0.0
  %108 = vmatprep.subr.mxu0 0.0
  %109 = vmatpush1.msra.mxu0 0.0
  %110 = vmatprep.subr.mxu0 0.0
  %111 = vmatpush1.msra.mxu0 0.0
  %112 = vmatprep.subr.mxu0 0.0
  %113 = vmatpush1.msra.mxu0 0.0
  %114 = vmatprep.subr.mxu0 0.0
  %115 = vmatpush1.msra.mxu0 0.0
  %116 = vmatprep.subr.mxu0 0.0
  %117 = vmatpush1.msra.mxu0 0.0
  %118 = vmatprep.subr.mxu0 0.0
  %119 = vmatpush1.msra.mxu0 0.0
  %120 = vmatprep.subr.mxu0 0.0
  %121 = vmatpush1.msra.mxu0 0.0
  %122 = vmatprep.subr.mxu0 0.0
  %123 = vmatpush1.msra.mxu0 0.0
  %124 = vmatprep.subr.mxu0 0.0
  %125 = vmatpush1.msra.mxu0 0.0
  %126 = vmatprep.subr.mxu0 0.0
  %127 = vmatpush1.msra.mxu0 0.0
  %128 = vmatprep.subr.mxu0 0.0
  %129 = vmatpush1.msra.mxu0 0.0
  %130 = vmatprep.subr.mxu0 0.0
  %131 = vmatpush1.msra.mxu0 0.0
  %132 = vmatprep.subr.mxu0 0.0
  %133 = vmatpush1.msra.mxu0 0.0
  %134 = vmatprep.subr.mxu0 0.0
  %135 = vmatpush1.msra.mxu0 0.0
  %136 = vmatprep.subr.mxu0 0.0
  %137 = vmatpush1.msra.mxu0 0.0
  %138 = vmatprep.subr.mxu0 0.0
  %139 = vmatpush1.msra.mxu0 0.0
  %140 = vmatprep.subr.mxu0 0.0
  %141 = vmatpush1.msra.mxu0 0.0
  %142 = vmatprep.subr.mxu0 0.0
  %143 = vmatpush1.msra.mxu0 0.0
  %144 = vmatprep.subr.mxu0 0.0
  %145 = vmatpush1.msra.mxu0 0.0
  %146 = vmatprep.subr.mxu0 0.0
  %147 = vmatpush1.msra.mxu0 0.0
  %148 = vmatprep.subr.mxu0 0.0
  %149 = vmatpush1.msra.mxu0 0.0
  %150 = vmatprep.subr.mxu0 0.0
  %151 = vmatpush1.msra.mxu0 0.0
  %152 = vmatprep.subr.mxu0 0.0
  %153 = vmatpush1.msra.mxu0 0.0
  %154 = vmatprep.subr.mxu0 0.0
  %155 = vmatpush1.msra.mxu0 0.0
  %156 = vmatprep.subr.mxu0 0.0
  %157 = vmatpush1.msra.mxu0 0.0
  %158 = vmatprep.subr.mxu0 0.0
  %159 = vmatpush1.msra.mxu0 0.0
  %160 = vmatprep.mubr.f32.mxu0 0.0
  %161 = vmatmul.mubr.f32.gmra.mrb[0].mxu0 %v91
  %v162 = vpop.f32.mrb[0].mxu0
  %v163 = vadd.f32 0.0, %v162
  %v164 = vpop.f32.mrb[0].mxu0
  %165 = vmatprep.mubr.f32.mxu0 0.0
  %166 = vmatmul.mubr.f32.gmra.mrb[0].mxu0 %v94
  %v167 = vpop.f32.mrb[0].mxu0
  %v168 = vadd.f32 0.0, %v167
  %v169 = vpop.f32.mrb[0].mxu0
  %170 = vdwg.mxu0
  %v171 = vld [vmem:[%s3] sm:$0xff]
  %v172 = vld [vmem:[%s3 + $0x8] sm:$0xff]
  %173 = vmatprep.subr.mxu0 0.0
  %174 = vmatpush1.msra.mxu0 %v171
  %175 = vmatprep.subr.mxu0 0.0
  %176 = vmatpush1.msra.mxu0 %v172
  %177 = vmatprep.subr.mxu0 0.0
  %178 = vmatpush1.msra.mxu0 0.0
  %179 = vmatprep.subr.mxu0 0.0
  %180 = vmatpush1.msra.mxu0 0.0
  %181 = vmatprep.subr.mxu0 0.0
  %182 = vmatpush1.msra.mxu0 0.0
  %183 = vmatprep.subr.mxu0 0.0
  %184 = vmatpush1.msra.mxu0 0.0
  %185 = vmatprep.subr.mxu0 0.0
  %186 = vmatpush1.msra.mxu0 0.0
  %187 = vmatprep.subr.mxu0 0.0
  %188 = vmatpush1.msra.mxu0 0.0
  %189 = vmatprep.subr.mxu0 0.0
  %190 = vmatpush1.msra.mxu0 0.0
  %191 = vmatprep.subr.mxu0 0.0
  %192 = vmatpush1.msra.mxu0 0.0
  %193 = vmatprep.subr.mxu0 0.0
  %194 = vmatpush1.msra.mxu0 0.0
  %195 = vmatprep.subr.mxu0 0.0
  %196 = vmatpush1.msra.mxu0 0.0
  %197 = vmatprep.subr.mxu0 0.0
  %198 = vmatpush1.msra.mxu0 0.0
  %199 = vmatprep.subr.mxu0 0.0
  %200 = vmatpush1.msra.mxu0 0.0
  %201 = vmatprep.subr.mxu0 0.0
  %202 = vmatpush1.msra.mxu0 0.0
  %203 = vmatprep.subr.mxu0 0.0
  %204 = vmatpush1.msra.mxu0 0.0
  %205 = vmatprep.subr.mxu0 0.0
  %206 = vmatpush1.msra.mxu0 0.0
  %207 = vmatprep.subr.mxu0 0.0
  %208 = vmatpush1.msra.mxu0 0.0
  %209 = vmatprep.subr.mxu0 0.0
  %210 = vmatpush1.msra.mxu0 0.0
  %211 = vmatprep.subr.mxu0 0.0
  %212 = vmatpush1.msra.mxu0 0.0
  %213 = vmatprep.subr.mxu0 0.0
  %214 = vmatpush1.msra.mxu0 0.0
  %215 = vmatprep.subr.mxu0 0.0
  %216 = vmatpush1.msra.mxu0 0.0
  %217 = vmatprep.subr.mxu0 0.0
  %218 = vmatpush1.msra.mxu0 0.0
  %219 = vmatprep.subr.mxu0 0.0
  %220 = vmatpush1.msra.mxu0 0.0
  %221 = vmatprep.subr.mxu0 0.0
  %222 = vmatpush1.msra.mxu0 0.0
  %223 = vmatprep.subr.mxu0 0.0
  %224 = vmatpush1.msra.mxu0 0.0
  %225 = vmatprep.subr.mxu0 0.0
  %226 = vmatpush1.msra.mxu0 0.0
  %227 = vmatprep.subr.mxu0 0.0
  %228 = vmatpush1.msra.mxu0 0.0
  %229 = vmatprep.subr.mxu0 0.0
  %230 = vmatpush1.msra.mxu0 0.0
  %231 = vmatprep.subr.mxu0 0.0
  %232 = vmatpush1.msra.mxu0 0.0
  %233 = vmatprep.subr.mxu0 0.0
  %234 = vmatpush1.msra.mxu0 0.0
  %235 = vmatprep.subr.mxu0 0.0
  %236 = vmatpush1.msra.mxu0 0.0
  %237 = vmatprep.mubr.f32.mxu0 0.0
  %238 = vmatmul.mubr.f32.gmra.mrb[0].mxu0 %v91
  %v239 = vpop.f32.mrb[0].mxu0
  %v240 = vadd.f32 0.0, %v239
  %v241 = vpop.f32.mrb[0].mxu0
  %242 = vmatprep.mubr.f32.mxu0 0.0
  %243 = vmatmul.mubr.f32.gmra.mrb[0].mxu0 %v94
  %v244 = vpop.f32.mrb[0].mxu0
  %v245 = vadd.f32 0.0, %v244
  %v246 = vpop.f32.mrb[0].mxu0
  %247 = vdwg.mxu0
  %248 = vxpose.xlu0.b32.start [1/16] %v240, 128
  %249 = vxpose.xlu0.b32.cont [2/16] %v245, 128
  %250 = vxpose.xlu0.b32.cont [3/16] 0.0, 128
  %251 = vxpose.xlu0.b32.cont [4/16] 0.0, 128
  %252 = vxpose.xlu0.b32.cont [5/16] 0.0, 128
  %253 = vxpose.xlu0.b32.cont [6/16] 0.0, 128
  %254 = vxpose.xlu0.b32.cont [7/16] 0.0, 128
  %255 = vxpose.xlu0.b32.cont [8/16] 0.0, 128
  %256 = vxpose.xlu0.b32.cont [9/16] 0.0, 128
  %257 = vxpose.xlu0.b32.cont [10/16] 0.0, 128
  %258 = vxpose.xlu0.b32.cont [11/16] 0.0, 128
  %259 = vxpose.xlu0.b32.cont [12/16] 0.0, 128
  %260 = vxpose.xlu0.b32.cont [13/16] 0.0, 128
  %261 = vxpose.xlu0.b32.cont [14/16] 0.0, 128
  %262 = vxpose.xlu0.b32.cont [15/16] 0.0, 128
  %263 = vxpose.xlu0.b32.end [16/16] 0.0, 128
  %v264 = vpop.trf.xlu0
  %v265 = vpop.trf.xlu0
  %v266 = vpop.trf.xlu0
  %v267 = vpop.trf.xlu0
  %v268 = vpop.trf.xlu0
  %v269 = vpop.trf.xlu0
  %v270 = vpop.trf.xlu0
  %v271 = vpop.trf.xlu0
  %v272 = vpop.trf.xlu0
  %v273 = vpop.trf.xlu0
  %v274 = vpop.trf.xlu0
  %v275 = vpop.trf.xlu0
  %v276 = vpop.trf.xlu0
  %v277 = vpop.trf.xlu0
  %v278 = vpop.trf.xlu0
  %v279 = vpop.trf.xlu0
  %v280 = vlaneseq
  %v281 = vshrl.u32 %v280, 7
  %v282 = vsub.s32 0, %v281
  %v283 = vrot.slane %v264, %v282
  %285 = vbcast.lane.b32.xlu0 %v283, 256
  %v286 = vpop.permute.xlu0 %285
  %s288 = sor.u32 256, 8
  %289 = vbcast.lane.b32.xlu0 %v283, %s288
  %v290 = vpop.permute.xlu0 %289
  %v291 = vlaneseq
  %v292 = vshrl.u32 %v291, 7
  %v293 = vsub.s32 1, %v292
  %v294 = vrot.slane %v264, %v293
  %296 = vbcast.lane.b32.xlu0 %v294, 256
  %v297 = vpop.permute.xlu0 %296
  %s299 = sor.u32 256, 8
  %300 = vbcast.lane.b32.xlu0 %v294, %s299
  %v301 = vpop.permute.xlu0 %300
  %302 = vxpose.xlu0.b32.start [1/16] %v163, 128
  %303 = vxpose.xlu0.b32.cont [2/16] %v168, 128
  %304 = vxpose.xlu0.b32.cont [3/16] 0.0, 128
  %305 = vxpose.xlu0.b32.cont [4/16] 0.0, 128
  %306 = vxpose.xlu0.b32.cont [5/16] 0.0, 128
  %307 = vxpose.xlu0.b32.cont [6/16] 0.0, 128
  %308 = vxpose.xlu0.b32.cont [7/16] 0.0, 128
  %309 = vxpose.xlu0.b32.cont [8/16] 0.0, 128
  %310 = vxpose.xlu0.b32.cont [9/16] 0.0, 128
  %311 = vxpose.xlu0.b32.cont [10/16] 0.0, 128
  %312 = vxpose.xlu0.b32.cont [11/16] 0.0, 128
  %313 = vxpose.xlu0.b32.cont [12/16] 0.0, 128
  %314 = vxpose.xlu0.b32.cont [13/16] 0.0, 128
  %315 = vxpose.xlu0.b32.cont [14/16] 0.0, 128
  %316 = vxpose.xlu0.b32.cont [15/16] 0.0, 128
  %317 = vxpose.xlu0.b32.end [16/16] 0.0, 128
  %v318 = vpop.trf.xlu0
  %v319 = vpop.trf.xlu0
  %v320 = vpop.trf.xlu0
  %v321 = vpop.trf.xlu0
  %v322 = vpop.trf.xlu0
  %v323 = vpop.trf.xlu0
  %v324 = vpop.trf.xlu0
  %v325 = vpop.trf.xlu0
  %v326 = vpop.trf.xlu0
  %v327 = vpop.trf.xlu0
  %v328 = vpop.trf.xlu0
  %v329 = vpop.trf.xlu0
  %v330 = vpop.trf.xlu0
  %v331 = vpop.trf.xlu0
  %v332 = vpop.trf.xlu0
  %v333 = vpop.trf.xlu0
  %v336 = vunpack.c.l.s4 1966171168
  %v337 = vunpack.c.0.s8 %v336
  %v338 = vlaneseq
  %v339 = vshrl.u32 %v338, 7
  %v340 = vsub.s32 %v337, %v339
  %v341 = vrot.slane %v318, %v340
  %v342 = vcombine.high %v341, %v341
  %v344 = vunpack.c.l.s4 1966171168
  %v345 = vunpack.c.0.s8 %v344
  %v346 = vlaneseq
  %v347 = vshrl.u32 %v346, 7
  %v348 = vsub.s32 %v345, %v347
  %v349 = vrot.slane %v341, %v348
  %v351 = vunpack.c.l.s4 1966171168
  %v352 = vunpack.c.0.s8 %v351
  %v353 = vlaneseq
  %v354 = vshrl.u32 %v353, 7
  %v355 = vsub.s32 %v352, %v354
  %v356 = vrot.slane %v342, %v355
  %v357 = vlaneseq
  %v358 = vshrl.u32 %v357, 7
  %v359 = vsub.s32 0, %v358
  %v360 = vrot.slane %v349, %v359
  %v361 = vlaneseq
  %v362 = vshrl.u32 %v361, 7
  %v363 = vsub.s32 0, %v362
  %v364 = vrot.slane %v356, %v363
  %v367 = vadd.f32 %v286, %v360
  %v368 = vadd.f32 %v290, %v360
  %v369 = vadd.f32 %v297, %v364
  %v370 = vadd.f32 %v301, %v364
  %vm371 = vcmp.gt.f32.partialorder %v367, 0.0
  %vm372 = vcmp.gt.f32.partialorder %v368, 0.0
  %vm373 = vcmp.gt.f32.partialorder %v369, 0.0
  %vm374 = vcmp.gt.f32.partialorder %v370, 0.0
  %v375 = vmul.f32 %v367, 0.2
  %v376 = vmul.f32 %v368, 0.2
  %v377 = vmul.f32 %v369, 0.2
  %v378 = vmul.f32 %v370, 0.2
  %v379 = vsel %vm371, %v367, %v375
  %v380 = vsel %vm372, %v368, %v376
  %v381 = vsel %vm373, %v369, %v377
  %v382 = vsel %vm374, %v370, %v378
  %v383 = vsel %vm38, 1, 0
  %v384 = vsel %vm39, 1, 0
  %vm385 = vcmp.eq.s32.totalorder %v383, 1
  %vm386 = vcmp.eq.s32.totalorder %v384, 1
  %v387 = vsel %vm385, %v379, -1e+30
  %v388 = vsel %vm386, %v380, -1e+30
  %v389 = vsel %vm385, %v381, -1e+30
  %v390 = vsel %vm386, %v382, -1e+30
  %v391 = vsel %vm43, %v387, -inf
  %392 = vmax.xlane.f32.xlu0 %v391
  %v393 = vpop.xlane.xlu0 %392
  %v394 = vsel %vm43, %v388, -inf
  %395 = vmax.xlane.f32.xlu0 %v394
  %v396 = vpop.xlane.xlu0 %395
  %v397 = vsel %vm43, %v389, -inf
  %398 = vmax.xlane.f32.xlu0 %v397
  %v399 = vpop.xlane.xlu0 %398
  %v400 = vsel %vm43, %v390, -inf
  %401 = vmax.xlane.f32.xlu0 %v400
  %v402 = vpop.xlane.xlu0 %401
  %v403 = vsub.f32 %v387, %v393
  %v404 = vsub.f32 %v388, %v396
  %v405 = vsub.f32 %v389, %v399
  %v406 = vsub.f32 %v390, %v402
  %v407 = vmul.f32 %v403, 1.442695
  %v408 = vpow.pop %v407
  %v409 = vmul.f32 %v404, 1.442695
  %v410 = vpow.pop %v409
  %v411 = vmul.f32 %v405, 1.442695
  %v412 = vpow.pop %v411
  %v413 = vmul.f32 %v406, 1.442695
  %v414 = vpow.pop %v413
  %v415 = vsel %vm385, %v408, 0.0
  %v416 = vsel %vm386, %v410, 0.0
  %v417 = vsel %vm385, %v412, 0.0
  %v418 = vsel %vm386, %v414, 0.0
  %v419 = vsel %vm43, %v415, 0.0
  %420 = vadd.xlane.f32.xlu0 %v419
  %v421 = vpop.xlane.xlu0 %420
  %v422 = vsel %vm43, %v416, 0.0
  %423 = vadd.xlane.f32.xlu0 %v422
  %v424 = vpop.xlane.xlu0 %423
  %v425 = vsel %vm43, %v417, 0.0
  %426 = vadd.xlane.f32.xlu0 %v425
  %v427 = vpop.xlane.xlu0 %426
  %v428 = vsel %vm43, %v418, 0.0
  %429 = vadd.xlane.f32.xlu0 %v428
  %v430 = vpop.xlane.xlu0 %429
  %v431 = vrcp.pop %v421
  %v432 = vmul.f32 %v415, %v431
  %v433 = vrcp.pop %v424
  %v434 = vmul.f32 %v416, %v433
  %v435 = vrcp.pop %v427
  %v436 = vmul.f32 %v417, %v435
  %v437 = vrcp.pop %v430
  %v438 = vmul.f32 %v418, %v437
  %v439 = vpack.c.bf16 %v434, %v432
  %v440 = vpack.c.bf16 %v438, %v436
  %v441 = vpack.c.bf16 %v85, %v82
  %v443 = vsel %vm43, %v439, 0
  %445 = vmatprep.subr.bf16.mxu0 0
  %446 = vmatpush1.bf16.msra.mxu0 %v441
  %447 = vmatprep.subr.bf16.mxu0 0
  %448 = vmatpush1.bf16.msra.mxu0 0
  %449 = vmatprep.subr.bf16.mxu0 0
  %450 = vmatpush1.bf16.msra.mxu0 0
  %451 = vmatprep.subr.bf16.mxu0 0
  %452 = vmatpush1.bf16.msra.mxu0 0
  %453 = vmatprep.subr.bf16.mxu0 0
  %454 = vmatpush1.bf16.msra.mxu0 0
  %455 = vmatprep.subr.bf16.mxu0 0
  %456 = vmatpush1.bf16.msra.mxu0 0
  %457 = vmatprep.subr.bf16.mxu0 0
  %458 = vmatpush1.bf16.msra.mxu0 0
  %459 = vmatprep.subr.bf16.mxu0 0
  %460 = vmatpush1.bf16.msra.mxu0 0
  %461 = vmatprep.subr.bf16.mxu0 0
  %462 = vmatpush1.bf16.msra.mxu0 0
  %463 = vmatprep.subr.bf16.mxu0 0
  %464 = vmatpush1.bf16.msra.mxu0 0
  %465 = vmatprep.subr.bf16.mxu0 0
  %466 = vmatpush1.bf16.msra.mxu0 0
  %467 = vmatprep.subr.bf16.mxu0 0
  %468 = vmatpush1.bf16.msra.mxu0 0
  %469 = vmatprep.subr.bf16.mxu0 0
  %470 = vmatpush1.bf16.msra.mxu0 0
  %471 = vmatprep.subr.bf16.mxu0 0
  %472 = vmatpush1.bf16.msra.mxu0 0
  %473 = vmatprep.subr.bf16.mxu0 0
  %474 = vmatpush1.bf16.msra.mxu0 0
  %475 = vmatprep.subr.bf16.mxu0 0
  %476 = vmatpush1.bf16.msra.mxu0 0
  %477 = vmatprep.mubr.bf16.mxu0 0
  %478 = vmatmul.mubr.bf16.gmra.mrb[0].mxu0 %v443
  %v479 = vpop.f32.mrb[0].mxu0
  %v480 = vadd.f32 0.0, %v479
  %v481 = vpop.f32.mrb[0].mxu0
  %v482 = vpop.f32.mrb[0].mxu0
  %v483 = vadd.f32 0.0, %v482
  %v484 = vpop.f32.mrb[0].mxu0
  %485 = vdwg.mxu0
  %487 = vrot.lane.b32.xlu0 %v441, 120
  %v488 = vpop.permute.xlu0 %487
  %v491 = vsel %vm43, %v440, 0
  %493 = vmatprep.subr.bf16.mxu0 0
  %494 = vmatpush1.bf16.msra.mxu0 %v488
  %495 = vmatprep.subr.bf16.mxu0 0
  %496 = vmatpush1.bf16.msra.mxu0 0
  %497 = vmatprep.subr.bf16.mxu0 0
  %498 = vmatpush1.bf16.msra.mxu0 0
  %499 = vmatprep.subr.bf16.mxu0 0
  %500 = vmatpush1.bf16.msra.mxu0 0
  %501 = vmatprep.subr.bf16.mxu0 0
  %502 = vmatpush1.bf16.msra.mxu0 0
  %503 = vmatprep.subr.bf16.mxu0 0
  %504 = vmatpush1.bf16.msra.mxu0 0
  %505 = vmatprep.subr.bf16.mxu0 0
  %506 = vmatpush1.bf16.msra.mxu0 0
  %507 = vmatprep.subr.bf16.mxu0 0
  %508 = vmatpush1.bf16.msra.mxu0 0
  %509 = vmatprep.subr.bf16.mxu0 0
  %510 = vmatpush1.bf16.msra.mxu0 0
  %511 = vmatprep.subr.bf16.mxu0 0
  %512 = vmatpush1.bf16.msra.mxu0 0
  %513 = vmatprep.subr.bf16.mxu0 0
  %514 = vmatpush1.bf16.msra.mxu0 0
  %515 = vmatprep.subr.bf16.mxu0 0
  %516 = vmatpush1.bf16.msra.mxu0 0
  %517 = vmatprep.subr.bf16.mxu0 0
  %518 = vmatpush1.bf16.msra.mxu0 0
  %519 = vmatprep.subr.bf16.mxu0 0
  %520 = vmatpush1.bf16.msra.mxu0 0
  %521 = vmatprep.subr.bf16.mxu0 0
  %522 = vmatpush1.bf16.msra.mxu0 0
  %523 = vmatprep.subr.bf16.mxu0 0
  %524 = vmatpush1.bf16.msra.mxu0 0
  %525 = vmatprep.mubr.bf16.mxu0 0
  %526 = vmatmul.mubr.bf16.gmra.mrb[0].mxu0 %v491
  %v527 = vpop.f32.mrb[0].mxu0
  %v528 = vadd.f32 0.0, %v527
  %v529 = vpop.f32.mrb[0].mxu0
  %v530 = vpop.f32.mrb[0].mxu0
  %v531 = vadd.f32 0.0, %v530
  %v532 = vpop.f32.mrb[0].mxu0
  %533 = vdwg.mxu0
  %536 = vrot.lane.b32.xlu0 %v528, 8
  %v537 = vpop.permute.xlu0 %536
  %538 = vrot.lane.b32.xlu0 %v531, 8
  %v539 = vpop.permute.xlu0 %538
  %vm542 = vcmask 64512
  %v543 = vsel %vm542, %v480, %v537
  %v544 = vsel %vm542, %v483, %v539
  %v545 = vld [vmem:[%s4] sm:$0x1]
  %v547 = vlaneseq
  %v548 = vshrl.u32 %v547, 7
  %v549 = vsub.s32 0, %v548
  %v550 = vrot.slane %v545, %v549
  %v552 = vadd.f32 %v543, %v550
  %v553 = vadd.f32 %v544, %v550
  %s554 = scalar_lea.vmem %s5, 16
  %v555 = vld [vmem:[%s554] sm:$0xff]
  %v556 = vld [vmem:[%s554 + $0x8] sm:$0xff]
  %vm557 = vcmp.gt.f32.partialorder %v555, 0.5
  %vm558 = vcmp.gt.f32.partialorder %v556, 0.5
  %s559 = scalar_lea.vmem %s1, 16
  %v560 = vld [vmem:[%s559] sm:$0xff]
  %v561 = vld [vmem:[%s559 + $0x8] sm:$0xff]
  %v562 = vpack.c.bf16 %v561, %v560
  %563 = vmatprep.subr.bf16.mxu0 0
  %564 = vmatpush1.bf16.msra.mxu0 %v562
  %565 = vmatprep.subr.bf16.mxu0 0
  %566 = vmatpush1.bf16.msra.mxu0 0
  %567 = vmatprep.subr.bf16.mxu0 0
  %568 = vmatpush1.bf16.msra.mxu0 0
  %569 = vmatprep.subr.bf16.mxu0 0
  %570 = vmatpush1.bf16.msra.mxu0 0
  %571 = vmatprep.subr.bf16.mxu0 0
  %572 = vmatpush1.bf16.msra.mxu0 0
  %573 = vmatprep.subr.bf16.mxu0 0
  %574 = vmatpush1.bf16.msra.mxu0 0
  %575 = vmatprep.subr.bf16.mxu0 0
  %576 = vmatpush1.bf16.msra.mxu0 0
  %577 = vmatprep.subr.bf16.mxu0 0
  %578 = vmatpush1.bf16.msra.mxu0 0
  %579 = vmatprep.subr.bf16.mxu0 0
  %580 = vmatpush1.bf16.msra.mxu0 0
  %581 = vmatprep.subr.bf16.mxu0 0
  %582 = vmatpush1.bf16.msra.mxu0 0
  %583 = vmatprep.subr.bf16.mxu0 0
  %584 = vmatpush1.bf16.msra.mxu0 0
  %585 = vmatprep.subr.bf16.mxu0 0
  %586 = vmatpush1.bf16.msra.mxu0 0
  %587 = vmatprep.subr.bf16.mxu0 0
  %588 = vmatpush1.bf16.msra.mxu0 0
  %589 = vmatprep.subr.bf16.mxu0 0
  %590 = vmatpush1.bf16.msra.mxu0 0
  %591 = vmatprep.subr.bf16.mxu0 0
  %592 = vmatpush1.bf16.msra.mxu0 0
  %593 = vmatprep.subr.bf16.mxu0 0
  %594 = vmatpush1.bf16.msra.mxu0 0
  %595 = vmatprep.mubr.bf16.mxu0 0
  %596 = vmatmul.mubr.bf16.gmra.mrb[0].mxu0 %v45
  %v597 = vpop.f32.mrb[0].mxu0
  %v598 = vadd.f32 0.0, %v597
  %v599 = vpop.f32.mrb[0].mxu0
  %v600 = vpop.f32.mrb[0].mxu0
  %v601 = vadd.f32 0.0, %v600
  %v602 = vpop.f32.mrb[0].mxu0
  %603 = vdwg.mxu0
  %s604 = scalar_lea.vmem %s2, 16
  %v605 = vld [vmem:[%s604] sm:$0xff]
  %v606 = vld [vmem:[%s604 + $0x8] sm:$0xff]
  %v608 = vsel %vm43, %v598, 0
  %v611 = vsel %vm43, %v601, 0
  %613 = vmatprep.subr.mxu0 0.0
  %614 = vmatpush1.msra.mxu0 %v605
  %615 = vmatprep.subr.mxu0 0.0
  %616 = vmatpush1.msra.mxu0 %v606
  %617 = vmatprep.subr.mxu0 0.0
  %618 = vmatpush1.msra.mxu0 0.0
  %619 = vmatprep.subr.mxu0 0.0
  %620 = vmatpush1.msra.mxu0 0.0
  %621 = vmatprep.subr.mxu0 0.0
  %622 = vmatpush1.msra.mxu0 0.0
  %623 = vmatprep.subr.mxu0 0.0
  %624 = vmatpush1.msra.mxu0 0.0
  %625 = vmatprep.subr.mxu0 0.0
  %626 = vmatpush1.msra.mxu0 0.0
  %627 = vmatprep.subr.mxu0 0.0
  %628 = vmatpush1.msra.mxu0 0.0
  %629 = vmatprep.subr.mxu0 0.0
  %630 = vmatpush1.msra.mxu0 0.0
  %631 = vmatprep.subr.mxu0 0.0
  %632 = vmatpush1.msra.mxu0 0.0
  %633 = vmatprep.subr.mxu0 0.0
  %634 = vmatpush1.msra.mxu0 0.0
  %635 = vmatprep.subr.mxu0 0.0
  %636 = vmatpush1.msra.mxu0 0.0
  %637 = vmatprep.subr.mxu0 0.0
  %638 = vmatpush1.msra.mxu0 0.0
  %639 = vmatprep.subr.mxu0 0.0
  %640 = vmatpush1.msra.mxu0 0.0
  %641 = vmatprep.subr.mxu0 0.0
  %642 = vmatpush1.msra.mxu0 0.0
  %643 = vmatprep.subr.mxu0 0.0
  %644 = vmatpush1.msra.mxu0 0.0
  %645 = vmatprep.subr.mxu0 0.0
  %646 = vmatpush1.msra.mxu0 0.0
  %647 = vmatprep.subr.mxu0 0.0
  %648 = vmatpush1.msra.mxu0 0.0
  %649 = vmatprep.subr.mxu0 0.0
  %650 = vmatpush1.msra.mxu0 0.0
  %651 = vmatprep.subr.mxu0 0.0
  %652 = vmatpush1.msra.mxu0 0.0
  %653 = vmatprep.subr.mxu0 0.0
  %654 = vmatpush1.msra.mxu0 0.0
  %655 = vmatprep.subr.mxu0 0.0
  %656 = vmatpush1.msra.mxu0 0.0
  %657 = vmatprep.subr.mxu0 0.0
  %658 = vmatpush1.msra.mxu0 0.0
  %659 = vmatprep.subr.mxu0 0.0
  %660 = vmatpush1.msra.mxu0 0.0
  %661 = vmatprep.subr.mxu0 0.0
  %662 = vmatpush1.msra.mxu0 0.0
  %663 = vmatprep.subr.mxu0 0.0
  %664 = vmatpush1.msra.mxu0 0.0
  %665 = vmatprep.subr.mxu0 0.0
  %666 = vmatpush1.msra.mxu0 0.0
  %667 = vmatprep.subr.mxu0 0.0
  %668 = vmatpush1.msra.mxu0 0.0
  %669 = vmatprep.subr.mxu0 0.0
  %670 = vmatpush1.msra.mxu0 0.0
  %671 = vmatprep.subr.mxu0 0.0
  %672 = vmatpush1.msra.mxu0 0.0
  %673 = vmatprep.subr.mxu0 0.0
  %674 = vmatpush1.msra.mxu0 0.0
  %675 = vmatprep.subr.mxu0 0.0
  %676 = vmatpush1.msra.mxu0 0.0
  %677 = vmatprep.mubr.f32.mxu0 0.0
  %678 = vmatmul.mubr.f32.gmra.mrb[0].mxu0 %v608
  %v679 = vpop.f32.mrb[0].mxu0
  %v680 = vadd.f32 0.0, %v679
  %v681 = vpop.f32.mrb[0].mxu0
  %682 = vmatprep.mubr.f32.mxu0 0.0
  %683 = vmatmul.mubr.f32.gmra.mrb[0].mxu0 %v611
  %v684 = vpop.f32.mrb[0].mxu0
  %v685 = vadd.f32 0.0, %v684
  %v686 = vpop.f32.mrb[0].mxu0
  %687 = vdwg.mxu0
  %s688 = scalar_lea.vmem %s3, 16
  %v689 = vld [vmem:[%s688] sm:$0xff]
  %v690 = vld [vmem:[%s688 + $0x8] sm:$0xff]
  %691 = vmatprep.subr.mxu0 0.0
  %692 = vmatpush1.msra.mxu0 %v689
  %693 = vmatprep.subr.mxu0 0.0
  %694 = vmatpush1.msra.mxu0 %v690
  %695 = vmatprep.subr.mxu0 0.0
  %696 = vmatpush1.msra.mxu0 0.0
  %697 = vmatprep.subr.mxu0 0.0
  %698 = vmatpush1.msra.mxu0 0.0
  %699 = vmatprep.subr.mxu0 0.0
  %700 = vmatpush1.msra.mxu0 0.0
  %701 = vmatprep.subr.mxu0 0.0
  %702 = vmatpush1.msra.mxu0 0.0
  %703 = vmatprep.subr.mxu0 0.0
  %704 = vmatpush1.msra.mxu0 0.0
  %705 = vmatprep.subr.mxu0 0.0
  %706 = vmatpush1.msra.mxu0 0.0
  %707 = vmatprep.subr.mxu0 0.0
  %708 = vmatpush1.msra.mxu0 0.0
  %709 = vmatprep.subr.mxu0 0.0
  %710 = vmatpush1.msra.mxu0 0.0
  %711 = vmatprep.subr.mxu0 0.0
  %712 = vmatpush1.msra.mxu0 0.0
  %713 = vmatprep.subr.mxu0 0.0
  %714 = vmatpush1.msra.mxu0 0.0
  %715 = vmatprep.subr.mxu0 0.0
  %716 = vmatpush1.msra.mxu0 0.0
  %717 = vmatprep.subr.mxu0 0.0
  %718 = vmatpush1.msra.mxu0 0.0
  %719 = vmatprep.subr.mxu0 0.0
  %720 = vmatpush1.msra.mxu0 0.0
  %721 = vmatprep.subr.mxu0 0.0
  %722 = vmatpush1.msra.mxu0 0.0
  %723 = vmatprep.subr.mxu0 0.0
  %724 = vmatpush1.msra.mxu0 0.0
  %725 = vmatprep.subr.mxu0 0.0
  %726 = vmatpush1.msra.mxu0 0.0
  %727 = vmatprep.subr.mxu0 0.0
  %728 = vmatpush1.msra.mxu0 0.0
  %729 = vmatprep.subr.mxu0 0.0
  %730 = vmatpush1.msra.mxu0 0.0
  %731 = vmatprep.subr.mxu0 0.0
  %732 = vmatpush1.msra.mxu0 0.0
  %733 = vmatprep.subr.mxu0 0.0
  %734 = vmatpush1.msra.mxu0 0.0
  %735 = vmatprep.subr.mxu0 0.0
  %736 = vmatpush1.msra.mxu0 0.0
  %737 = vmatprep.subr.mxu0 0.0
  %738 = vmatpush1.msra.mxu0 0.0
  %739 = vmatprep.subr.mxu0 0.0
  %740 = vmatpush1.msra.mxu0 0.0
  %741 = vmatprep.subr.mxu0 0.0
  %742 = vmatpush1.msra.mxu0 0.0
  %743 = vmatprep.subr.mxu0 0.0
  %744 = vmatpush1.msra.mxu0 0.0
  %745 = vmatprep.subr.mxu0 0.0
  %746 = vmatpush1.msra.mxu0 0.0
  %747 = vmatprep.subr.mxu0 0.0
  %748 = vmatpush1.msra.mxu0 0.0
  %749 = vmatprep.subr.mxu0 0.0
  %750 = vmatpush1.msra.mxu0 0.0
  %751 = vmatprep.subr.mxu0 0.0
  %752 = vmatpush1.msra.mxu0 0.0
  %753 = vmatprep.subr.mxu0 0.0
  %754 = vmatpush1.msra.mxu0 0.0
  %755 = vmatprep.mubr.f32.mxu0 0.0
  %756 = vmatmul.mubr.f32.gmra.mrb[0].mxu0 %v608
  %v757 = vpop.f32.mrb[0].mxu0
  %v758 = vadd.f32 0.0, %v757
  %v759 = vpop.f32.mrb[0].mxu0
  %760 = vmatprep.mubr.f32.mxu0 0.0
  %761 = vmatmul.mubr.f32.gmra.mrb[0].mxu0 %v611
  %v762 = vpop.f32.mrb[0].mxu0
  %v763 = vadd.f32 0.0, %v762
  %v764 = vpop.f32.mrb[0].mxu0
  %765 = vdwg.mxu0
  %766 = vxpose.xlu0.b32.start [1/16] %v758, 128
  %767 = vxpose.xlu0.b32.cont [2/16] %v763, 128
  %768 = vxpose.xlu0.b32.cont [3/16] 0.0, 128
  %769 = vxpose.xlu0.b32.cont [4/16] 0.0, 128
  %770 = vxpose.xlu0.b32.cont [5/16] 0.0, 128
  %771 = vxpose.xlu0.b32.cont [6/16] 0.0, 128
  %772 = vxpose.xlu0.b32.cont [7/16] 0.0, 128
  %773 = vxpose.xlu0.b32.cont [8/16] 0.0, 128
  %774 = vxpose.xlu0.b32.cont [9/16] 0.0, 128
  %775 = vxpose.xlu0.b32.cont [10/16] 0.0, 128
  %776 = vxpose.xlu0.b32.cont [11/16] 0.0, 128
  %777 = vxpose.xlu0.b32.cont [12/16] 0.0, 128
  %778 = vxpose.xlu0.b32.cont [13/16] 0.0, 128
  %779 = vxpose.xlu0.b32.cont [14/16] 0.0, 128
  %780 = vxpose.xlu0.b32.cont [15/16] 0.0, 128
  %781 = vxpose.xlu0.b32.end [16/16] 0.0, 128
  %v782 = vpop.trf.xlu0
  %v783 = vpop.trf.xlu0
  %v784 = vpop.trf.xlu0
  %v785 = vpop.trf.xlu0
  %v786 = vpop.trf.xlu0
  %v787 = vpop.trf.xlu0
  %v788 = vpop.trf.xlu0
  %v789 = vpop.trf.xlu0
  %v790 = vpop.trf.xlu0
  %v791 = vpop.trf.xlu0
  %v792 = vpop.trf.xlu0
  %v793 = vpop.trf.xlu0
  %v794 = vpop.trf.xlu0
  %v795 = vpop.trf.xlu0
  %v796 = vpop.trf.xlu0
  %v797 = vpop.trf.xlu0
  %v798 = vlaneseq
  %v799 = vshrl.u32 %v798, 7
  %v800 = vsub.s32 0, %v799
  %v801 = vrot.slane %v782, %v800
  %803 = vbcast.lane.b32.xlu0 %v801, 256
  %v804 = vpop.permute.xlu0 %803
  %s806 = sor.u32 256, 8
  %807 = vbcast.lane.b32.xlu0 %v801, %s806
  %v808 = vpop.permute.xlu0 %807
  %v809 = vlaneseq
  %v810 = vshrl.u32 %v809, 7
  %v811 = vsub.s32 1, %v810
  %v812 = vrot.slane %v782, %v811
  %814 = vbcast.lane.b32.xlu0 %v812, 256
  %v815 = vpop.permute.xlu0 %814
  %s817 = sor.u32 256, 8
  %818 = vbcast.lane.b32.xlu0 %v812, %s817
  %v819 = vpop.permute.xlu0 %818
  %820 = vxpose.xlu0.b32.start [1/16] %v680, 128
  %821 = vxpose.xlu0.b32.cont [2/16] %v685, 128
  %822 = vxpose.xlu0.b32.cont [3/16] 0.0, 128
  %823 = vxpose.xlu0.b32.cont [4/16] 0.0, 128
  %824 = vxpose.xlu0.b32.cont [5/16] 0.0, 128
  %825 = vxpose.xlu0.b32.cont [6/16] 0.0, 128
  %826 = vxpose.xlu0.b32.cont [7/16] 0.0, 128
  %827 = vxpose.xlu0.b32.cont [8/16] 0.0, 128
  %828 = vxpose.xlu0.b32.cont [9/16] 0.0, 128
  %829 = vxpose.xlu0.b32.cont [10/16] 0.0, 128
  %830 = vxpose.xlu0.b32.cont [11/16] 0.0, 128
  %831 = vxpose.xlu0.b32.cont [12/16] 0.0, 128
  %832 = vxpose.xlu0.b32.cont [13/16] 0.0, 128
  %833 = vxpose.xlu0.b32.cont [14/16] 0.0, 128
  %834 = vxpose.xlu0.b32.cont [15/16] 0.0, 128
  %835 = vxpose.xlu0.b32.end [16/16] 0.0, 128
  %v836 = vpop.trf.xlu0
  %v837 = vpop.trf.xlu0
  %v838 = vpop.trf.xlu0
  %v839 = vpop.trf.xlu0
  %v840 = vpop.trf.xlu0
  %v841 = vpop.trf.xlu0
  %v842 = vpop.trf.xlu0
  %v843 = vpop.trf.xlu0
  %v844 = vpop.trf.xlu0
  %v845 = vpop.trf.xlu0
  %v846 = vpop.trf.xlu0
  %v847 = vpop.trf.xlu0
  %v848 = vpop.trf.xlu0
  %v849 = vpop.trf.xlu0
  %v850 = vpop.trf.xlu0
  %v851 = vpop.trf.xlu0
  %v854 = vunpack.c.l.s4 1966171168
  %v855 = vunpack.c.0.s8 %v854
  %v856 = vlaneseq
  %v857 = vshrl.u32 %v856, 7
  %v858 = vsub.s32 %v855, %v857
  %v859 = vrot.slane %v836, %v858
  %v860 = vcombine.high %v859, %v859
  %v862 = vunpack.c.l.s4 1966171168
  %v863 = vunpack.c.0.s8 %v862
  %v864 = vlaneseq
  %v865 = vshrl.u32 %v864, 7
  %v866 = vsub.s32 %v863, %v865
  %v867 = vrot.slane %v859, %v866
  %v869 = vunpack.c.l.s4 1966171168
  %v870 = vunpack.c.0.s8 %v869
  %v871 = vlaneseq
  %v872 = vshrl.u32 %v871, 7
  %v873 = vsub.s32 %v870, %v872
  %v874 = vrot.slane %v860, %v873
  %v875 = vlaneseq
  %v876 = vshrl.u32 %v875, 7
  %v877 = vsub.s32 0, %v876
  %v878 = vrot.slane %v867, %v877
  %v879 = vlaneseq
  %v880 = vshrl.u32 %v879, 7
  %v881 = vsub.s32 0, %v880
  %v882 = vrot.slane %v874, %v881
  %v885 = vadd.f32 %v804, %v878
  %v886 = vadd.f32 %v808, %v878
  %v887 = vadd.f32 %v815, %v882
  %v888 = vadd.f32 %v819, %v882
  %vm889 = vcmp.gt.f32.partialorder %v885, 0.0
  %vm890 = vcmp.gt.f32.partialorder %v886, 0.0
  %vm891 = vcmp.gt.f32.partialorder %v887, 0.0
  %vm892 = vcmp.gt.f32.partialorder %v888, 0.0
  %v893 = vmul.f32 %v885, 0.2
  %v894 = vmul.f32 %v886, 0.2
  %v895 = vmul.f32 %v887, 0.2
  %v896 = vmul.f32 %v888, 0.2
  %v897 = vsel %vm889, %v885, %v893
  %v898 = vsel %vm890, %v886, %v894
  %v899 = vsel %vm891, %v887, %v895
  %v900 = vsel %vm892, %v888, %v896
  %v901 = vsel %vm557, 1, 0
  %v902 = vsel %vm558, 1, 0
  %vm903 = vcmp.eq.s32.totalorder %v901, 1
  %vm904 = vcmp.eq.s32.totalorder %v902, 1
  %v905 = vsel %vm903, %v897, -1e+30
  %v906 = vsel %vm904, %v898, -1e+30
  %v907 = vsel %vm903, %v899, -1e+30
  %v908 = vsel %vm904, %v900, -1e+30
  %v909 = vsel %vm43, %v905, -inf
  %910 = vmax.xlane.f32.xlu0 %v909
  %v911 = vpop.xlane.xlu0 %910
  %v912 = vsel %vm43, %v906, -inf
  %913 = vmax.xlane.f32.xlu0 %v912
  %v914 = vpop.xlane.xlu0 %913
  %v915 = vsel %vm43, %v907, -inf
  %916 = vmax.xlane.f32.xlu0 %v915
  %v917 = vpop.xlane.xlu0 %916
  %v918 = vsel %vm43, %v908, -inf
  %919 = vmax.xlane.f32.xlu0 %v918
  %v920 = vpop.xlane.xlu0 %919
  %v921 = vsub.f32 %v905, %v911
  %v922 = vsub.f32 %v906, %v914
  %v923 = vsub.f32 %v907, %v917
  %v924 = vsub.f32 %v908, %v920
  %v925 = vmul.f32 %v921, 1.442695
  %v926 = vpow.pop %v925
  %v927 = vmul.f32 %v922, 1.442695
  %v928 = vpow.pop %v927
  %v929 = vmul.f32 %v923, 1.442695
  %v930 = vpow.pop %v929
  %v931 = vmul.f32 %v924, 1.442695
  %v932 = vpow.pop %v931
  %v933 = vsel %vm903, %v926, 0.0
  %v934 = vsel %vm904, %v928, 0.0
  %v935 = vsel %vm903, %v930, 0.0
  %v936 = vsel %vm904, %v932, 0.0
  %v937 = vsel %vm43, %v933, 0.0
  %938 = vadd.xlane.f32.xlu0 %v937
  %v939 = vpop.xlane.xlu0 %938
  %v940 = vsel %vm43, %v934, 0.0
  %941 = vadd.xlane.f32.xlu0 %v940
  %v942 = vpop.xlane.xlu0 %941
  %v943 = vsel %vm43, %v935, 0.0
  %944 = vadd.xlane.f32.xlu0 %v943
  %v945 = vpop.xlane.xlu0 %944
  %v946 = vsel %vm43, %v936, 0.0
  %947 = vadd.xlane.f32.xlu0 %v946
  %v948 = vpop.xlane.xlu0 %947
  %v949 = vrcp.pop %v939
  %v950 = vmul.f32 %v933, %v949
  %v951 = vrcp.pop %v942
  %v952 = vmul.f32 %v934, %v951
  %v953 = vrcp.pop %v945
  %v954 = vmul.f32 %v935, %v953
  %v955 = vrcp.pop %v948
  %v956 = vmul.f32 %v936, %v955
  %v957 = vpack.c.bf16 %v952, %v950
  %v958 = vpack.c.bf16 %v956, %v954
  %v959 = vpack.c.bf16 %v601, %v598
  %v961 = vsel %vm43, %v957, 0
  %963 = vmatprep.subr.bf16.mxu0 0
  %964 = vmatpush1.bf16.msra.mxu0 %v959
  %965 = vmatprep.subr.bf16.mxu0 0
  %966 = vmatpush1.bf16.msra.mxu0 0
  %967 = vmatprep.subr.bf16.mxu0 0
  %968 = vmatpush1.bf16.msra.mxu0 0
  %969 = vmatprep.subr.bf16.mxu0 0
  %970 = vmatpush1.bf16.msra.mxu0 0
  %971 = vmatprep.subr.bf16.mxu0 0
  %972 = vmatpush1.bf16.msra.mxu0 0
  %973 = vmatprep.subr.bf16.mxu0 0
  %974 = vmatpush1.bf16.msra.mxu0 0
  %975 = vmatprep.subr.bf16.mxu0 0
  %976 = vmatpush1.bf16.msra.mxu0 0
  %977 = vmatprep.subr.bf16.mxu0 0
  %978 = vmatpush1.bf16.msra.mxu0 0
  %979 = vmatprep.subr.bf16.mxu0 0
  %980 = vmatpush1.bf16.msra.mxu0 0
  %981 = vmatprep.subr.bf16.mxu0 0
  %982 = vmatpush1.bf16.msra.mxu0 0
  %983 = vmatprep.subr.bf16.mxu0 0
  %984 = vmatpush1.bf16.msra.mxu0 0
  %985 = vmatprep.subr.bf16.mxu0 0
  %986 = vmatpush1.bf16.msra.mxu0 0
  %987 = vmatprep.subr.bf16.mxu0 0
  %988 = vmatpush1.bf16.msra.mxu0 0
  %989 = vmatprep.subr.bf16.mxu0 0
  %990 = vmatpush1.bf16.msra.mxu0 0
  %991 = vmatprep.subr.bf16.mxu0 0
  %992 = vmatpush1.bf16.msra.mxu0 0
  %993 = vmatprep.subr.bf16.mxu0 0
  %994 = vmatpush1.bf16.msra.mxu0 0
  %995 = vmatprep.mubr.bf16.mxu0 0
  %996 = vmatmul.mubr.bf16.gmra.mrb[0].mxu0 %v961
  %v997 = vpop.f32.mrb[0].mxu0
  %v998 = vadd.f32 0.0, %v997
  %v999 = vpop.f32.mrb[0].mxu0
  %v1000 = vpop.f32.mrb[0].mxu0
  %v1001 = vadd.f32 0.0, %v1000
  %v1002 = vpop.f32.mrb[0].mxu0
  %1003 = vdwg.mxu0
  %1005 = vrot.lane.b32.xlu0 %v959, 120
  %v1006 = vpop.permute.xlu0 %1005
  %v1009 = vsel %vm43, %v958, 0
  %1011 = vmatprep.subr.bf16.mxu0 0
  %1012 = vmatpush1.bf16.msra.mxu0 %v1006
  %1013 = vmatprep.subr.bf16.mxu0 0
  %1014 = vmatpush1.bf16.msra.mxu0 0
  %1015 = vmatprep.subr.bf16.mxu0 0
  %1016 = vmatpush1.bf16.msra.mxu0 0
  %1017 = vmatprep.subr.bf16.mxu0 0
  %1018 = vmatpush1.bf16.msra.mxu0 0
  %1019 = vmatprep.subr.bf16.mxu0 0
  %1020 = vmatpush1.bf16.msra.mxu0 0
  %1021 = vmatprep.subr.bf16.mxu0 0
  %1022 = vmatpush1.bf16.msra.mxu0 0
  %1023 = vmatprep.subr.bf16.mxu0 0
  %1024 = vmatpush1.bf16.msra.mxu0 0
  %1025 = vmatprep.subr.bf16.mxu0 0
  %1026 = vmatpush1.bf16.msra.mxu0 0
  %1027 = vmatprep.subr.bf16.mxu0 0
  %1028 = vmatpush1.bf16.msra.mxu0 0
  %1029 = vmatprep.subr.bf16.mxu0 0
  %1030 = vmatpush1.bf16.msra.mxu0 0
  %1031 = vmatprep.subr.bf16.mxu0 0
  %1032 = vmatpush1.bf16.msra.mxu0 0
  %1033 = vmatprep.subr.bf16.mxu0 0
  %1034 = vmatpush1.bf16.msra.mxu0 0
  %1035 = vmatprep.subr.bf16.mxu0 0
  %1036 = vmatpush1.bf16.msra.mxu0 0
  %1037 = vmatprep.subr.bf16.mxu0 0
  %1038 = vmatpush1.bf16.msra.mxu0 0
  %1039 = vmatprep.subr.bf16.mxu0 0
  %1040 = vmatpush1.bf16.msra.mxu0 0
  %1041 = vmatprep.subr.bf16.mxu0 0
  %1042 = vmatpush1.bf16.msra.mxu0 0
  %1043 = vmatprep.mubr.bf16.mxu0 0
  %1044 = vmatmul.mubr.bf16.gmra.mrb[0].mxu0 %v1009
  %v1045 = vpop.f32.mrb[0].mxu0
  %v1046 = vadd.f32 0.0, %v1045
  %v1047 = vpop.f32.mrb[0].mxu0
  %v1048 = vpop.f32.mrb[0].mxu0
  %v1049 = vadd.f32 0.0, %v1048
  %v1050 = vpop.f32.mrb[0].mxu0
  %1051 = vdwg.mxu0
  %1054 = vrot.lane.b32.xlu0 %v1046, 8
  %v1055 = vpop.permute.xlu0 %1054
  %1056 = vrot.lane.b32.xlu0 %v1049, 8
  %v1057 = vpop.permute.xlu0 %1056
  %v1060 = vsel %vm542, %v998, %v1055
  %v1061 = vsel %vm542, %v1001, %v1057
  %s1062 = scalar_lea.vmem %s4, 1
  %v1063 = vld [vmem:[%s1062] sm:$0x1]
  %v1065 = vlaneseq
  %v1066 = vshrl.u32 %v1065, 7
  %v1067 = vsub.s32 0, %v1066
  %v1068 = vrot.slane %v1063, %v1067
  %v1070 = vadd.f32 %v1060, %v1068
  %v1071 = vadd.f32 %v1061, %v1068
  %v1072 = vpack.c.bf16 %v553, %v552
  %v1073 = vpack.c.bf16 %v1071, %v1070
  %v1074 = vld [vmem:[%s6] sm:$0xff]
  %v1075 = vld [vmem:[%s6 + $0x8] sm:$0xff]
  %v1076 = vpack.c.bf16 %v1075, %v1074
  %v1077 = vld [vmem:[%s7] sm:$0x1]
  %v1079 = vlaneseq
  %v1080 = vshrl.u32 %v1079, 7
  %v1081 = vsub.s32 0, %v1080
  %v1082 = vrot.slane %v1077, %v1081
  %v1085 = vsel %vm43, %v1072, 0
  %v1088 = vsel %vm43, %v1073, 0
  %1090 = vmatprep.subr.bf16.mxu0 0
  %1091 = vmatpush1.bf16.msra.mxu0 %v1076
  %1092 = vmatprep.subr.bf16.mxu0 0
  %1093 = vmatpush1.bf16.msra.mxu0 0
  %1094 = vmatprep.subr.bf16.mxu0 0
  %1095 = vmatpush1.bf16.msra.mxu0 0
  %1096 = vmatprep.subr.bf16.mxu0 0
  %1097 = vmatpush1.bf16.msra.mxu0 0
  %1098 = vmatprep.subr.bf16.mxu0 0
  %1099 = vmatpush1.bf16.msra.mxu0 0
  %1100 = vmatprep.subr.bf16.mxu0 0
  %1101 = vmatpush1.bf16.msra.mxu0 0
  %1102 = vmatprep.subr.bf16.mxu0 0
  %1103 = vmatpush1.bf16.msra.mxu0 0
  %1104 = vmatprep.subr.bf16.mxu0 0
  %1105 = vmatpush1.bf16.msra.mxu0 0
  %1106 = vmatprep.subr.bf16.mxu0 0
  %1107 = vmatpush1.bf16.msra.mxu0 0
  %1108 = vmatprep.subr.bf16.mxu0 0
  %1109 = vmatpush1.bf16.msra.mxu0 0
  %1110 = vmatprep.subr.bf16.mxu0 0
  %1111 = vmatpush1.bf16.msra.mxu0 0
  %1112 = vmatprep.subr.bf16.mxu0 0
  %1113 = vmatpush1.bf16.msra.mxu0 0
  %1114 = vmatprep.subr.bf16.mxu0 0
  %1115 = vmatpush1.bf16.msra.mxu0 0
  %1116 = vmatprep.subr.bf16.mxu0 0
  %1117 = vmatpush1.bf16.msra.mxu0 0
  %1118 = vmatprep.subr.bf16.mxu0 0
  %1119 = vmatpush1.bf16.msra.mxu0 0
  %1120 = vmatprep.subr.bf16.mxu0 0
  %1121 = vmatpush1.bf16.msra.mxu0 0
  %1122 = vmatprep.mubr.bf16.mxu0 0
  %1123 = vmatmul.mubr.bf16.gmra.mrb[0].mxu0 %v1085
  %v1124 = vpop.f32.mrb[0].mxu0
  %v1125 = vadd.f32 %v1082, %v1124
  %v1126 = vpop.f32.mrb[0].mxu0
  %v1127 = vpop.f32.mrb[0].mxu0
  %v1128 = vadd.f32 %v1082, %v1127
  %v1129 = vpop.f32.mrb[0].mxu0
  %1130 = vmatprep.mubr.bf16.mxu0 0
  %1131 = vmatmul.mubr.bf16.gmra.mrb[0].mxu0 %v1088
  %v1132 = vpop.f32.mrb[0].mxu0
  %v1133 = vadd.f32 %v1082, %v1132
  %v1134 = vpop.f32.mrb[0].mxu0
  %v1135 = vpop.f32.mrb[0].mxu0
  %v1136 = vadd.f32 %v1082, %v1135
  %v1137 = vpop.f32.mrb[0].mxu0
  %1138 = vdwg.mxu0
  %v1139 = vtanh.pop %v1125
  %v1140 = vtanh.pop %v1128
  %v1141 = vtanh.pop %v1133
  %v1142 = vtanh.pop %v1136
  %v1143 = vpack.c.bf16 %v1140, %v1139
  %v1144 = vpack.c.bf16 %v1142, %v1141
  %v1145 = vld [vmem:[%s8] sm:$0xff]
  %v1146 = vld [vmem:[%s8 + $0x8] sm:$0xff]
  %v1147 = vld [vmem:[%s8 + $0x10] sm:$0xff]
  %v1148 = vld [vmem:[%s8 + $0x18] sm:$0xff]
  %v1149 = vld [vmem:[%s8 + $0x20] sm:$0xff]
  %v1150 = vld [vmem:[%s8 + $0x28] sm:$0xff]
  %v1151 = vld [vmem:[%s8 + $0x30] sm:$0xff]
  %v1152 = vld [vmem:[%s8 + $0x38] sm:$0xff]
  %v1153 = vld [vmem:[%s8 + $0x40] sm:$0xff]
  %v1154 = vld [vmem:[%s8 + $0x48] sm:$0xff]
  %v1155 = vld [vmem:[%s8 + $0x50] sm:$0xff]
  %v1156 = vld [vmem:[%s8 + $0x58] sm:$0xff]
  %v1157 = vld [vmem:[%s8 + $0x60] sm:$0xff]
  %v1158 = vld [vmem:[%s8 + $0x68] sm:$0xff]
  %v1159 = vld [vmem:[%s8 + $0x70] sm:$0xff]
  %v1160 = vld [vmem:[%s8 + $0x78] sm:$0xff]
  %v1161 = vpack.c.bf16 %v1146, %v1145
  %v1162 = vpack.c.bf16 %v1148, %v1147
  %v1163 = vpack.c.bf16 %v1150, %v1149
  %v1164 = vpack.c.bf16 %v1152, %v1151
  %v1165 = vpack.c.bf16 %v1154, %v1153
  %v1166 = vpack.c.bf16 %v1156, %v1155
  %v1167 = vpack.c.bf16 %v1158, %v1157
  %v1168 = vpack.c.bf16 %v1160, %v1159
  %1169 = vmatprep.subr.bf16.mxu0 0
  %1170 = vmatpush1.bf16.msra.mxu0 %v1161
  %1171 = vmatprep.subr.bf16.mxu0 0
  %1172 = vmatpush1.bf16.msra.mxu0 %v1162
  %1173 = vmatprep.subr.bf16.mxu0 0
  %1174 = vmatpush1.bf16.msra.mxu0 %v1163
  %1175 = vmatprep.subr.bf16.mxu0 0
  %1176 = vmatpush1.bf16.msra.mxu0 %v1164
  %1177 = vmatprep.subr.bf16.mxu0 0
  %1178 = vmatpush1.bf16.msra.mxu0 %v1165
  %1179 = vmatprep.subr.bf16.mxu0 0
  %1180 = vmatpush1.bf16.msra.mxu0 %v1166
  %1181 = vmatprep.subr.bf16.mxu0 0
  %1182 = vmatpush1.bf16.msra.mxu0 %v1167
  %1183 = vmatprep.subr.bf16.mxu0 0
  %1184 = vmatpush1.bf16.msra.mxu0 %v1168
  %1185 = vmatprep.subr.bf16.mxu0 0
  %1186 = vmatpush1.bf16.msra.mxu0 0
  %1187 = vmatprep.subr.bf16.mxu0 0
  %1188 = vmatpush1.bf16.msra.mxu0 0
  %1189 = vmatprep.subr.bf16.mxu0 0
  %1190 = vmatpush1.bf16.msra.mxu0 0
  %1191 = vmatprep.subr.bf16.mxu0 0
  %1192 = vmatpush1.bf16.msra.mxu0 0
  %1193 = vmatprep.subr.bf16.mxu0 0
  %1194 = vmatpush1.bf16.msra.mxu0 0
  %1195 = vmatprep.subr.bf16.mxu0 0
  %1196 = vmatpush1.bf16.msra.mxu0 0
  %1197 = vmatprep.subr.bf16.mxu0 0
  %1198 = vmatpush1.bf16.msra.mxu0 0
  %1199 = vmatprep.subr.bf16.mxu0 0
  %1200 = vmatpush1.bf16.msra.mxu0 0
  %1201 = vmatprep.mubr.bf16.mxu0 0
  %1202 = vmatmul.mubr.bf16.gmra.mrb[0].mxu0 %v1143
  %v1203 = vpop.f32.mrb[0].mxu0
  %v1204 = vadd.f32 0.0, %v1203
  %v1205 = vpop.f32.mrb[0].mxu0
  %v1206 = vpop.f32.mrb[0].mxu0
  %v1207 = vadd.f32 0.0, %v1206
  %v1208 = vpop.f32.mrb[0].mxu0
  %1209 = vmatprep.mubr.bf16.mxu0 0
  %1210 = vmatmul.mubr.bf16.gmra.mrb[0].mxu0 %v1144
  %v1211 = vpop.f32.mrb[0].mxu0
  %v1212 = vadd.f32 0.0, %v1211
  %v1213 = vpop.f32.mrb[0].mxu0
  %v1214 = vpop.f32.mrb[0].mxu0
  %v1215 = vadd.f32 0.0, %v1214
  %v1216 = vpop.f32.mrb[0].mxu0
  %1217 = vdwg.mxu0
  %v1218 = vmax.f32 %v1204, %v1212
  %v1219 = vmax.f32 %v1207, %v1215
  %v1220 = vsub.f32 %v1204, %v1218
  %v1221 = vsub.f32 %v1207, %v1219
  %v1222 = vmul.f32 %v1220, 1.442695
  %v1223 = vpow.pop %v1222
  %v1224 = vmul.f32 %v1221, 1.442695
  %v1225 = vpow.pop %v1224
  %v1226 = vsub.f32 %v1212, %v1218
  %v1227 = vsub.f32 %v1215, %v1219
  %v1228 = vmul.f32 %v1226, 1.442695
  %v1229 = vpow.pop %v1228
  %v1230 = vmul.f32 %v1227, 1.442695
  %v1231 = vpow.pop %v1230
  %v1232 = vadd.f32 %v1223, %v1229
  %v1233 = vadd.f32 %v1225, %v1231
  %v1234 = vrcp.pop %v1232
  %v1235 = vmul.f32 1.0, %v1234
  %v1236 = vrcp.pop %v1233
  %v1237 = vmul.f32 1.0, %v1236
  %v1238 = vmul.f32 %v1223, %v1235
  %v1239 = vmul.f32 %v1225, %v1237
  %1241 = vset.pattern.permute.xlu0 0
  %1242 = vperm.xlu0 %1241, %v1238
  %v1243 = vpop.permute.xlu0 %1242
  %1246 = vset.pattern.permute.xlu0 0
  %1247 = vperm.xlu0 %1246, %v1239
  %v1248 = vpop.permute.xlu0 %1247
  %v1250 = vmul.f32 %v1243, %v552
  %v1251 = vmul.f32 %v1248, %v553
  %v1252 = vmul.f32 %v1229, %v1235
  %v1253 = vmul.f32 %v1231, %v1237
  %1255 = vset.pattern.permute.xlu0 0
  %1256 = vperm.xlu0 %1255, %v1252
  %v1257 = vpop.permute.xlu0 %1256
  %1260 = vset.pattern.permute.xlu0 0
  %1261 = vperm.xlu0 %1260, %v1253
  %v1262 = vpop.permute.xlu0 %1261
  %v1264 = vmul.f32 %v1257, %v1070
  %v1265 = vmul.f32 %v1262, %v1071
  %v1266 = vadd.f32 %v1250, %v1264
  %v1267 = vadd.f32 %v1251, %v1265
  %1268 = vst.msk [vmem:[%s9] sm:$0xff] %vm43, %v1266
  %1269 = vst.msk [vmem:[%s9 + $0x8] sm:$0xff] %vm43, %v1267
  // Predicated region
  $region38: #{iarnet_forward.2} parent=0 // pred_check
    _
  $region39: #{iarnet_forward.2} parent=0 // pred_check_branch
    %1271 = sbr.rel (0) target = $region41
  $region40: #{iarnet_forward.2} parent=0 // pred_region
    _
  $region41: #{iarnet_forward.2} parent=0 // pred_fallthru
    _
  // Predicated region
  $region42: #{iarnet_forward.2} parent=0 // pred_check
    _
  $region43: #{iarnet_forward.2} parent=0 // pred_check_branch
    %1273 = sbr.rel (0) target = $region45
  $region44: #{iarnet_forward.2} parent=0 // pred_region
    _
  $region45: #{iarnet_forward.2} parent=0 // pred_fallthru
    _

// kernel: iarnet_forward.3
$region0: #{iarnet_forward.3}
  #allocation0 [shape = 'u32[]', space=smem, size = 0x4, offset = 0x4, fixed_abs, tag = 'smem constant byte address 0x4 - core index']
  #allocation1 [shape = 'u32[144,128]{1,0:T(1,128)}', space=vmem, size = 0x12000, scoped, tag = 'internal scratch']
  %s0 = inlined_call_operand.vmem [shape: f32[16,16], index: 0, kind: input, shape index: {}]
  %s1 = inlined_call_operand.vmem [shape: f32[2,16,16], index: 1, kind: input, shape index: {}]
  %s2 = inlined_call_operand.vmem [shape: f32[2,16,2], index: 2, kind: input, shape index: {}]
  %s3 = inlined_call_operand.vmem [shape: f32[2,16,2], index: 3, kind: input, shape index: {}]
  %s4 = inlined_call_operand.vmem [shape: f32[2,1,16], index: 4, kind: input, shape index: {}]
  %s5 = inlined_call_operand.vmem [shape: f32[2,16,16], index: 5, kind: input, shape index: {}]
  %s6 = inlined_call_operand.vmem [shape: f32[16,128], index: 6, kind: input, shape index: {}]
  %s7 = inlined_call_operand.vmem [shape: f32[1,128], index: 7, kind: input, shape index: {}]
  %s8 = inlined_call_operand.vmem [shape: f32[128,1], index: 8, kind: input, shape index: {}]
  %s9 = inlined_call_operand.hbm [shape: f32[16,16], index: 9, kind: output, shape index: {}]
  %s10 = sld [smem:[#allocation0]]
  $region46: #{iarnet_forward.3} parent=0
    _
  %s12 = ssub.s32 1, %s10
  %s13 = scalar_select 0, %s12, %s10
  $region1: #{iarnet_forward.3} parent=0
    #allocation2 [shape = 'u8[8192]{0}', space=vmem, size = 0x2000, scoped, tag = 'output window, operand 0, single buffered']
    #allocation3 [shape = 's32[1]{0}', space=sflag, size = 0x4, scoped, tag = 'scoped memory for iarnet_forward.3']
    %14 = vsyncpa [#allocation3], 0
    // Predicated region
    $region2: #{iarnet_forward.3} parent=1 // pred_check
      _
    $region3: #{iarnet_forward.3} parent=1 // pred_check_branch
      %16 = sbr.rel (0) target = $region5
    $region4: #{iarnet_forward.3} parent=1 // pred_region
      _
    $region5: #{iarnet_forward.3} parent=1 // pred_fallthru
      _
    // Predicated region
    $region6: #{iarnet_forward.3} parent=1 // pred_check
      _
    $region7: #{iarnet_forward.3} parent=1 // pred_check_branch
      %18 = sbr.rel (0) target = $region9
    $region8: #{iarnet_forward.3} parent=1 // pred_region
      _
    $region9: #{iarnet_forward.3} parent=1 // pred_fallthru
      _
    // Predicated region
    $region10: #{iarnet_forward.3} parent=1 // pred_check
      _
    $region11: #{iarnet_forward.3} parent=1 // pred_check_branch
      %20 = sbr.rel (0) target = $region13
    $region12: #{iarnet_forward.3} parent=1 // pred_region
      _
    $region13: #{iarnet_forward.3} parent=1 // pred_fallthru
      _
    // Predicated region
    $region14: #{iarnet_forward.3} parent=1 // pred_check
      _
    $region15: #{iarnet_forward.3} parent=1 // pred_check_branch
      %22 = sbr.rel (0) target = $region17
    $region16: #{iarnet_forward.3} parent=1 // pred_region
      _
    $region17: #{iarnet_forward.3} parent=1 // pred_fallthru
      _
    // Predicated region
    $region18: #{iarnet_forward.3} parent=1 // pred_check
      _
    $region19: #{iarnet_forward.3} parent=1 // pred_check_branch
      %24 = sbr.rel (0) target = $region21
    $region20: #{iarnet_forward.3} parent=1 // pred_region
      _
    $region21: #{iarnet_forward.3} parent=1 // pred_fallthru
      _
    // Predicated region
    $region22: #{iarnet_forward.3} parent=1 // pred_check
      _
    $region23: #{iarnet_forward.3} parent=1 // pred_check_branch
      %26 = sbr.rel (0) target = $region25
    $region24: #{iarnet_forward.3} parent=1 // pred_region
      _
    $region25: #{iarnet_forward.3} parent=1 // pred_fallthru
      _
    // Predicated region
    $region26: #{iarnet_forward.3} parent=1 // pred_check
      _
    $region27: #{iarnet_forward.3} parent=1 // pred_check_branch
      %28 = sbr.rel (0) target = $region29
    $region28: #{iarnet_forward.3} parent=1 // pred_region
      _
    $region29: #{iarnet_forward.3} parent=1 // pred_fallthru
      _
    // Predicated region
    $region30: #{iarnet_forward.3} parent=1 // pred_check
      _
    $region31: #{iarnet_forward.3} parent=1 // pred_check_branch
      %30 = sbr.rel (0) target = $region33
    $region32: #{iarnet_forward.3} parent=1 // pred_region
      _
    $region33: #{iarnet_forward.3} parent=1 // pred_fallthru
      _
    // Predicated region
    $region34: #{iarnet_forward.3} parent=1 // pred_check
      _
    $region35: #{iarnet_forward.3} parent=1 // pred_check_branch
      %32 = sbr.rel (0) target = $region37
    $region36: #{iarnet_forward.3} parent=1 // pred_region
      _
    $region37: #{iarnet_forward.3} parent=1 // pred_fallthru
      _
    %v34 = vld [vmem:[%s0] sm:$0xff]
    %v35 = vld [vmem:[%s0 + $0x8] sm:$0xff]
    %v36 = vpack.c.bf16 %v35, %v34
    %v37 = vld [vmem:[%s5] sm:$0xff]
    %v38 = vld [vmem:[%s5 + $0x8] sm:$0xff]
    %vm39 = vcmp.gt.f32.partialorder %v37, 0.5
    %vm40 = vcmp.gt.f32.partialorder %v38, 0.5
    %v41 = vld [vmem:[%s1] sm:$0xff]
    %v42 = vld [vmem:[%s1 + $0x8] sm:$0xff]
    %v43 = vpack.c.bf16 %v42, %v41
    %vm44 = vcmask 130048
    %v46 = vsel %vm44, %v36, 0
    %48 = vmatprep.subr.bf16.mxu0 0
    %49 = vmatpush1.bf16.msra.mxu0 %v43
    %50 = vmatprep.subr.bf16.mxu0 0
    %51 = vmatpush1.bf16.msra.mxu0 0
    %52 = vmatprep.subr.bf16.mxu0 0
    %53 = vmatpush1.bf16.msra.mxu0 0
    %54 = vmatprep.subr.bf16.mxu0 0
    %55 = vmatpush1.bf16.msra.mxu0 0
    %56 = vmatprep.subr.bf16.mxu0 0
    %57 = vmatpush1.bf16.msra.mxu0 0
    %58 = vmatprep.subr.bf16.mxu0 0
    %59 = vmatpush1.bf16.msra.mxu0 0
    %60 = vmatprep.subr.bf16.mxu0 0
    %61 = vmatpush1.bf16.msra.mxu0 0
    %62 = vmatprep.subr.bf16.mxu0 0
    %63 = vmatpush1.bf16.msra.mxu0 0
    %64 = vmatprep.subr.bf16.mxu0 0
    %65 = vmatpush1.bf16.msra.mxu0 0
    %66 = vmatprep.subr.bf16.mxu0 0
    %67 = vmatpush1.bf16.msra.mxu0 0
    %68 = vmatprep.subr.bf16.mxu0 0
    %69 = vmatpush1.bf16.msra.mxu0 0
    %70 = vmatprep.subr.bf16.mxu0 0
    %71 = vmatpush1.bf16.msra.mxu0 0
    %72 = vmatprep.subr.bf16.mxu0 0
    %73 = vmatpush1.bf16.msra.mxu0 0
    %74 = vmatprep.subr.bf16.mxu0 0
    %75 = vmatpush1.bf16.msra.mxu0 0
    %76 = vmatprep.subr.bf16.mxu0 0
    %77 = vmatpush1.bf16.msra.mxu0 0
    %78 = vmatprep.subr.bf16.mxu0 0
    %79 = vmatpush1.bf16.msra.mxu0 0
    %80 = vmatprep.mubr.bf16.mxu0 0
    %81 = vmatmul.mubr.bf16.gmra.mrb[0].mxu0 %v46
    %v82 = vpop.f32.mrb[0].mxu0
    %v83 = vadd.f32 0.0, %v82
    %v84 = vpop.f32.mrb[0].mxu0
    %v85 = vpop.f32.mrb[0].mxu0
    %v86 = vadd.f32 0.0, %v85
    %v87 = vpop.f32.mrb[0].mxu0
    %88 = vdwg.mxu0
    %v89 = vld [vmem:[%s2] sm:$0xff]
    %v90 = vld [vmem:[%s2 + $0x8] sm:$0xff]
    %v92 = vsel %vm44, %v83, 0
    %v95 = vsel %vm44, %v86, 0
    %97 = vmatprep.subr.mxu0 0.0
    %98 = vmatpush1.msra.mxu0 %v89
    %99 = vmatprep.subr.mxu0 0.0
    %100 = vmatpush1.msra.mxu0 %v90
    %101 = vmatprep.subr.mxu0 0.0
    %102 = vmatpush1.msra.mxu0 0.0
    %103 = vmatprep.subr.mxu0 0.0
    %104 = vmatpush1.msra.mxu0 0.0
    %105 = vmatprep.subr.mxu0 0.0
    %106 = vmatpush1.msra.mxu0 0.0
    %107 = vmatprep.subr.mxu0 0.0
    %108 = vmatpush1.msra.mxu0 0.0
    %109 = vmatprep.subr.mxu0 0.0
    %110 = vmatpush1.msra.mxu0 0.0
    %111 = vmatprep.subr.mxu0 0.0
    %112 = vmatpush1.msra.mxu0 0.0
    %113 = vmatprep.subr.mxu0 0.0
    %114 = vmatpush1.msra.mxu0 0.0
    %115 = vmatprep.subr.mxu0 0.0
    %116 = vmatpush1.msra.mxu0 0.0
    %117 = vmatprep.subr.mxu0 0.0
    %118 = vmatpush1.msra.mxu0 0.0
    %119 = vmatprep.subr.mxu0 0.0
    %120 = vmatpush1.msra.mxu0 0.0
    %121 = vmatprep.subr.mxu0 0.0
    %122 = vmatpush1.msra.mxu0 0.0
    %123 = vmatprep.subr.mxu0 0.0
    %124 = vmatpush1.msra.mxu0 0.0
    %125 = vmatprep.subr.mxu0 0.0
    %126 = vmatpush1.msra.mxu0 0.0
    %127 = vmatprep.subr.mxu0 0.0
    %128 = vmatpush1.msra.mxu0 0.0
    %129 = vmatprep.subr.mxu0 0.0
    %130 = vmatpush1.msra.mxu0 0.0
    %131 = vmatprep.subr.mxu0 0.0
    %132 = vmatpush1.msra.mxu0 0.0
    %133 = vmatprep.subr.mxu0 0.0
    %134 = vmatpush1.msra.mxu0 0.0
    %135 = vmatprep.subr.mxu0 0.0
    %136 = vmatpush1.msra.mxu0 0.0
    %137 = vmatprep.subr.mxu0 0.0
    %138 = vmatpush1.msra.mxu0 0.0
    %139 = vmatprep.subr.mxu0 0.0
    %140 = vmatpush1.msra.mxu0 0.0
    %141 = vmatprep.subr.mxu0 0.0
    %142 = vmatpush1.msra.mxu0 0.0
    %143 = vmatprep.subr.mxu0 0.0
    %144 = vmatpush1.msra.mxu0 0.0
    %145 = vmatprep.subr.mxu0 0.0
    %146 = vmatpush1.msra.mxu0 0.0
    %147 = vmatprep.subr.mxu0 0.0
    %148 = vmatpush1.msra.mxu0 0.0
    %149 = vmatprep.subr.mxu0 0.0
    %150 = vmatpush1.msra.mxu0 0.0
    %151 = vmatprep.subr.mxu0 0.0
    %152 = vmatpush1.msra.mxu0 0.0
    %153 = vmatprep.subr.mxu0 0.0
    %154 = vmatpush1.msra.mxu0 0.0
    %155 = vmatprep.subr.mxu0 0.0
    %156 = vmatpush1.msra.mxu0 0.0
    %157 = vmatprep.subr.mxu0 0.0
    %158 = vmatpush1.msra.mxu0 0.0
    %159 = vmatprep.subr.mxu0 0.0
    %160 = vmatpush1.msra.mxu0 0.0
    %161 = vmatprep.mubr.f32.mxu0 0.0
    %162 = vmatmul.mubr.f32.gmra.mrb[0].mxu0 %v92
    %v163 = vpop.f32.mrb[0].mxu0
    %v164 = vadd.f32 0.0, %v163
    %v165 = vpop.f32.mrb[0].mxu0
    %166 = vmatprep.mubr.f32.mxu0 0.0
    %167 = vmatmul.mubr.f32.gmra.mrb[0].mxu0 %v95
    %v168 = vpop.f32.mrb[0].mxu0
    %v169 = vadd.f32 0.0, %v168
    %v170 = vpop.f32.mrb[0].mxu0
    %171 = vdwg.mxu0
    %v172 = vld [vmem:[%s3] sm:$0xff]
    %v173 = vld [vmem:[%s3 + $0x8] sm:$0xff]
    %174 = vmatprep.subr.mxu0 0.0
    %175 = vmatpush1.msra.mxu0 %v172
    %176 = vmatprep.subr.mxu0 0.0
    %177 = vmatpush1.msra.mxu0 %v173
    %178 = vmatprep.subr.mxu0 0.0
    %179 = vmatpush1.msra.mxu0 0.0
    %180 = vmatprep.subr.mxu0 0.0
    %181 = vmatpush1.msra.mxu0 0.0
    %182 = vmatprep.subr.mxu0 0.0
    %183 = vmatpush1.msra.mxu0 0.0
    %184 = vmatprep.subr.mxu0 0.0
    %185 = vmatpush1.msra.mxu0 0.0
    %186 = vmatprep.subr.mxu0 0.0
    %187 = vmatpush1.msra.mxu0 0.0
    %188 = vmatprep.subr.mxu0 0.0
    %189 = vmatpush1.msra.mxu0 0.0
    %190 = vmatprep.subr.mxu0 0.0
    %191 = vmatpush1.msra.mxu0 0.0
    %192 = vmatprep.subr.mxu0 0.0
    %193 = vmatpush1.msra.mxu0 0.0
    %194 = vmatprep.subr.mxu0 0.0
    %195 = vmatpush1.msra.mxu0 0.0
    %196 = vmatprep.subr.mxu0 0.0
    %197 = vmatpush1.msra.mxu0 0.0
    %198 = vmatprep.subr.mxu0 0.0
    %199 = vmatpush1.msra.mxu0 0.0
    %200 = vmatprep.subr.mxu0 0.0
    %201 = vmatpush1.msra.mxu0 0.0
    %202 = vmatprep.subr.mxu0 0.0
    %203 = vmatpush1.msra.mxu0 0.0
    %204 = vmatprep.subr.mxu0 0.0
    %205 = vmatpush1.msra.mxu0 0.0
    %206 = vmatprep.subr.mxu0 0.0
    %207 = vmatpush1.msra.mxu0 0.0
    %208 = vmatprep.subr.mxu0 0.0
    %209 = vmatpush1.msra.mxu0 0.0
    %210 = vmatprep.subr.mxu0 0.0
    %211 = vmatpush1.msra.mxu0 0.0
    %212 = vmatprep.subr.mxu0 0.0
    %213 = vmatpush1.msra.mxu0 0.0
    %214 = vmatprep.subr.mxu0 0.0
    %215 = vmatpush1.msra.mxu0 0.0
    %216 = vmatprep.subr.mxu0 0.0
    %217 = vmatpush1.msra.mxu0 0.0
    %218 = vmatprep.subr.mxu0 0.0
    %219 = vmatpush1.msra.mxu0 0.0
    %220 = vmatprep.subr.mxu0 0.0
    %221 = vmatpush1.msra.mxu0 0.0
    %222 = vmatprep.subr.mxu0 0.0
    %223 = vmatpush1.msra.mxu0 0.0
    %224 = vmatprep.subr.mxu0 0.0
    %225 = vmatpush1.msra.mxu0 0.0
    %226 = vmatprep.subr.mxu0 0.0
    %227 = vmatpush1.msra.mxu0 0.0
    %228 = vmatprep.subr.mxu0 0.0
    %229 = vmatpush1.msra.mxu0 0.0
    %230 = vmatprep.subr.mxu0 0.0
    %231 = vmatpush1.msra.mxu0 0.0
    %232 = vmatprep.subr.mxu0 0.0
    %233 = vmatpush1.msra.mxu0 0.0
    %234 = vmatprep.subr.mxu0 0.0
    %235 = vmatpush1.msra.mxu0 0.0
    %236 = vmatprep.subr.mxu0 0.0
    %237 = vmatpush1.msra.mxu0 0.0
    %238 = vmatprep.mubr.f32.mxu0 0.0
    %239 = vmatmul.mubr.f32.gmra.mrb[0].mxu0 %v92
    %v240 = vpop.f32.mrb[0].mxu0
    %v241 = vadd.f32 0.0, %v240
    %v242 = vpop.f32.mrb[0].mxu0
    %243 = vmatprep.mubr.f32.mxu0 0.0
    %244 = vmatmul.mubr.f32.gmra.mrb[0].mxu0 %v95
    %v245 = vpop.f32.mrb[0].mxu0
    %v246 = vadd.f32 0.0, %v245
    %v247 = vpop.f32.mrb[0].mxu0
    %248 = vdwg.mxu0
    %249 = vxpose.xlu0.b32.start [1/16] %v241, 128
    %250 = vxpose.xlu0.b32.cont [2/16] %v246, 128
    %251 = vxpose.xlu0.b32.cont [3/16] 0.0, 128
    %252 = vxpose.xlu0.b32.cont [4/16] 0.0, 128
    %253 = vxpose.xlu0.b32.cont [5/16] 0.0, 128
    %254 = vxpose.xlu0.b32.cont [6/16] 0.0, 128
    %255 = vxpose.xlu0.b32.cont [7/16] 0.0, 128
    %256 = vxpose.xlu0.b32.cont [8/16] 0.0, 128
    %257 = vxpose.xlu0.b32.cont [9/16] 0.0, 128
    %258 = vxpose.xlu0.b32.cont [10/16] 0.0, 128
    %259 = vxpose.xlu0.b32.cont [11/16] 0.0, 128
    %260 = vxpose.xlu0.b32.cont [12/16] 0.0, 128
    %261 = vxpose.xlu0.b32.cont [13/16] 0.0, 128
    %262 = vxpose.xlu0.b32.cont [14/16] 0.0, 128
    %263 = vxpose.xlu0.b32.cont [15/16] 0.0, 128
    %264 = vxpose.xlu0.b32.end [16/16] 0.0, 128
    %v265 = vpop.trf.xlu0
    %v266 = vpop.trf.xlu0
    %v267 = vpop.trf.xlu0
    %v268 = vpop.trf.xlu0
    %v269 = vpop.trf.xlu0
    %v270 = vpop.trf.xlu0
    %v271 = vpop.trf.xlu0
    %v272 = vpop.trf.xlu0
    %v273 = vpop.trf.xlu0
    %v274 = vpop.trf.xlu0
    %v275 = vpop.trf.xlu0
    %v276 = vpop.trf.xlu0
    %v277 = vpop.trf.xlu0
    %v278 = vpop.trf.xlu0
    %v279 = vpop.trf.xlu0
    %v280 = vpop.trf.xlu0
    %v281 = vlaneseq
    %v282 = vshrl.u32 %v281, 7
    %v283 = vsub.s32 0, %v282
    %v284 = vrot.slane %v265, %v283
    %286 = vbcast.lane.b32.xlu0 %v284, 256
    %v287 = vpop.permute.xlu0 %286
    %s289 = sor.u32 256, 8
    %290 = vbcast.lane.b32.xlu0 %v284, %s289
    %v291 = vpop.permute.xlu0 %290
    %v292 = vlaneseq
    %v293 = vshrl.u32 %v292, 7
    %v294 = vsub.s32 1, %v293
    %v295 = vrot.slane %v265, %v294
    %297 = vbcast.lane.b32.xlu0 %v295, 256
    %v298 = vpop.permute.xlu0 %297
    %s300 = sor.u32 256, 8
    %301 = vbcast.lane.b32.xlu0 %v295, %s300
    %v302 = vpop.permute.xlu0 %301
    %303 = vxpose.xlu0.b32.start [1/16] %v164, 128
    %304 = vxpose.xlu0.b32.cont [2/16] %v169, 128
    %305 = vxpose.xlu0.b32.cont [3/16] 0.0, 128
    %306 = vxpose.xlu0.b32.cont [4/16] 0.0, 128
    %307 = vxpose.xlu0.b32.cont [5/16] 0.0, 128
    %308 = vxpose.xlu0.b32.cont [6/16] 0.0, 128
    %309 = vxpose.xlu0.b32.cont [7/16] 0.0, 128
    %310 = vxpose.xlu0.b32.cont [8/16] 0.0, 128
    %311 = vxpose.xlu0.b32.cont [9/16] 0.0, 128
    %312 = vxpose.xlu0.b32.cont [10/16] 0.0, 128
    %313 = vxpose.xlu0.b32.cont [11/16] 0.0, 128
    %314 = vxpose.xlu0.b32.cont [12/16] 0.0, 128
    %315 = vxpose.xlu0.b32.cont [13/16] 0.0, 128
    %316 = vxpose.xlu0.b32.cont [14/16] 0.0, 128
    %317 = vxpose.xlu0.b32.cont [15/16] 0.0, 128
    %318 = vxpose.xlu0.b32.end [16/16] 0.0, 128
    %v319 = vpop.trf.xlu0
    %v320 = vpop.trf.xlu0
    %v321 = vpop.trf.xlu0
    %v322 = vpop.trf.xlu0
    %v323 = vpop.trf.xlu0
    %v324 = vpop.trf.xlu0
    %v325 = vpop.trf.xlu0
    %v326 = vpop.trf.xlu0
    %v327 = vpop.trf.xlu0
    %v328 = vpop.trf.xlu0
    %v329 = vpop.trf.xlu0
    %v330 = vpop.trf.xlu0
    %v331 = vpop.trf.xlu0
    %v332 = vpop.trf.xlu0
    %v333 = vpop.trf.xlu0
    %v334 = vpop.trf.xlu0
    %v337 = vunpack.c.l.s4 1966171168
    %v338 = vunpack.c.0.s8 %v337
    %v339 = vlaneseq
    %v340 = vshrl.u32 %v339, 7
    %v341 = vsub.s32 %v338, %v340
    %v342 = vrot.slane %v319, %v341
    %v343 = vcombine.high %v342, %v342
    %v345 = vunpack.c.l.s4 1966171168
    %v346 = vunpack.c.0.s8 %v345
    %v347 = vlaneseq
    %v348 = vshrl.u32 %v347, 7
    %v349 = vsub.s32 %v346, %v348
    %v350 = vrot.slane %v342, %v349
    %v352 = vunpack.c.l.s4 1966171168
    %v353 = vunpack.c.0.s8 %v352
    %v354 = vlaneseq
    %v355 = vshrl.u32 %v354, 7
    %v356 = vsub.s32 %v353, %v355
    %v357 = vrot.slane %v343, %v356
    %v358 = vlaneseq
    %v359 = vshrl.u32 %v358, 7
    %v360 = vsub.s32 0, %v359
    %v361 = vrot.slane %v350, %v360
    %v362 = vlaneseq
    %v363 = vshrl.u32 %v362, 7
    %v364 = vsub.s32 0, %v363
    %v365 = vrot.slane %v357, %v364
    %v368 = vadd.f32 %v287, %v361
    %v369 = vadd.f32 %v291, %v361
    %v370 = vadd.f32 %v298, %v365
    %v371 = vadd.f32 %v302, %v365
    %vm372 = vcmp.gt.f32.partialorder %v368, 0.0
    %vm373 = vcmp.gt.f32.partialorder %v369, 0.0
    %vm374 = vcmp.gt.f32.partialorder %v370, 0.0
    %vm375 = vcmp.gt.f32.partialorder %v371, 0.0
    %v376 = vmul.f32 %v368, 0.2
    %v377 = vmul.f32 %v369, 0.2
    %v378 = vmul.f32 %v370, 0.2
    %v379 = vmul.f32 %v371, 0.2
    %v380 = vsel %vm372, %v368, %v376
    %v381 = vsel %vm373, %v369, %v377
    %v382 = vsel %vm374, %v370, %v378
    %v383 = vsel %vm375, %v371, %v379
    %v384 = vsel %vm39, 1, 0
    %v385 = vsel %vm40, 1, 0
    %vm386 = vcmp.eq.s32.totalorder %v384, 1
    %vm387 = vcmp.eq.s32.totalorder %v385, 1
    %v388 = vsel %vm386, %v380, -1e+30
    %v389 = vsel %vm387, %v381, -1e+30
    %v390 = vsel %vm386, %v382, -1e+30
    %v391 = vsel %vm387, %v383, -1e+30
    %v392 = vsel %vm44, %v388, -inf
    %393 = vmax.xlane.f32.xlu0 %v392
    %v394 = vpop.xlane.xlu0 %393
    %v395 = vsel %vm44, %v389, -inf
    %396 = vmax.xlane.f32.xlu0 %v395
    %v397 = vpop.xlane.xlu0 %396
    %v398 = vsel %vm44, %v390, -inf
    %399 = vmax.xlane.f32.xlu0 %v398
    %v400 = vpop.xlane.xlu0 %399
    %v401 = vsel %vm44, %v391, -inf
    %402 = vmax.xlane.f32.xlu0 %v401
    %v403 = vpop.xlane.xlu0 %402
    %v404 = vsub.f32 %v388, %v394
    %v405 = vsub.f32 %v389, %v397
    %v406 = vsub.f32 %v390, %v400
    %v407 = vsub.f32 %v391, %v403
    %v408 = vmul.f32 %v404, 1.442695
    %v409 = vpow.pop %v408
    %v410 = vmul.f32 %v405, 1.442695
    %v411 = vpow.pop %v410
    %v412 = vmul.f32 %v406, 1.442695
    %v413 = vpow.pop %v412
    %v414 = vmul.f32 %v407, 1.442695
    %v415 = vpow.pop %v414
    %v416 = vsel %vm386, %v409, 0.0
    %v417 = vsel %vm387, %v411, 0.0
    %v418 = vsel %vm386, %v413, 0.0
    %v419 = vsel %vm387, %v415, 0.0
    %v420 = vsel %vm44, %v416, 0.0
    %421 = vadd.xlane.f32.xlu0 %v420
    %v422 = vpop.xlane.xlu0 %421
    %v423 = vsel %vm44, %v417, 0.0
    %424 = vadd.xlane.f32.xlu0 %v423
    %v425 = vpop.xlane.xlu0 %424
    %v426 = vsel %vm44, %v418, 0.0
    %427 = vadd.xlane.f32.xlu0 %v426
    %v428 = vpop.xlane.xlu0 %427
    %v429 = vsel %vm44, %v419, 0.0
    %430 = vadd.xlane.f32.xlu0 %v429
    %v431 = vpop.xlane.xlu0 %430
    %v432 = vrcp.pop %v422
    %v433 = vmul.f32 %v416, %v432
    %v434 = vrcp.pop %v425
    %v435 = vmul.f32 %v417, %v434
    %v436 = vrcp.pop %v428
    %v437 = vmul.f32 %v418, %v436
    %v438 = vrcp.pop %v431
    %v439 = vmul.f32 %v419, %v438
    %v440 = vpack.c.bf16 %v435, %v433
    %v441 = vpack.c.bf16 %v439, %v437
    %v442 = vpack.c.bf16 %v86, %v83
    %v444 = vsel %vm44, %v440, 0
    %446 = vmatprep.subr.bf16.mxu0 0
    %447 = vmatpush1.bf16.msra.mxu0 %v442
    %448 = vmatprep.subr.bf16.mxu0 0
    %449 = vmatpush1.bf16.msra.mxu0 0
    %450 = vmatprep.subr.bf16.mxu0 0
    %451 = vmatpush1.bf16.msra.mxu0 0
    %452 = vmatprep.subr.bf16.mxu0 0
    %453 = vmatpush1.bf16.msra.mxu0 0
    %454 = vmatprep.subr.bf16.mxu0 0
    %455 = vmatpush1.bf16.msra.mxu0 0
    %456 = vmatprep.subr.bf16.mxu0 0
    %457 = vmatpush1.bf16.msra.mxu0 0
    %458 = vmatprep.subr.bf16.mxu0 0
    %459 = vmatpush1.bf16.msra.mxu0 0
    %460 = vmatprep.subr.bf16.mxu0 0
    %461 = vmatpush1.bf16.msra.mxu0 0
    %462 = vmatprep.subr.bf16.mxu0 0
    %463 = vmatpush1.bf16.msra.mxu0 0
    %464 = vmatprep.subr.bf16.mxu0 0
    %465 = vmatpush1.bf16.msra.mxu0 0
    %466 = vmatprep.subr.bf16.mxu0 0
    %467 = vmatpush1.bf16.msra.mxu0 0
    %468 = vmatprep.subr.bf16.mxu0 0
    %469 = vmatpush1.bf16.msra.mxu0 0
    %470 = vmatprep.subr.bf16.mxu0 0
    %471 = vmatpush1.bf16.msra.mxu0 0
    %472 = vmatprep.subr.bf16.mxu0 0
    %473 = vmatpush1.bf16.msra.mxu0 0
    %474 = vmatprep.subr.bf16.mxu0 0
    %475 = vmatpush1.bf16.msra.mxu0 0
    %476 = vmatprep.subr.bf16.mxu0 0
    %477 = vmatpush1.bf16.msra.mxu0 0
    %478 = vmatprep.mubr.bf16.mxu0 0
    %479 = vmatmul.mubr.bf16.gmra.mrb[0].mxu0 %v444
    %v480 = vpop.f32.mrb[0].mxu0
    %v481 = vadd.f32 0.0, %v480
    %v482 = vpop.f32.mrb[0].mxu0
    %v483 = vpop.f32.mrb[0].mxu0
    %v484 = vadd.f32 0.0, %v483
    %v485 = vpop.f32.mrb[0].mxu0
    %486 = vdwg.mxu0
    %488 = vrot.lane.b32.xlu0 %v442, 120
    %v489 = vpop.permute.xlu0 %488
    %v492 = vsel %vm44, %v441, 0
    %494 = vmatprep.subr.bf16.mxu0 0
    %495 = vmatpush1.bf16.msra.mxu0 %v489
    %496 = vmatprep.subr.bf16.mxu0 0
    %497 = vmatpush1.bf16.msra.mxu0 0
    %498 = vmatprep.subr.bf16.mxu0 0
    %499 = vmatpush1.bf16.msra.mxu0 0
    %500 = vmatprep.subr.bf16.mxu0 0
    %501 = vmatpush1.bf16.msra.mxu0 0
    %502 = vmatprep.subr.bf16.mxu0 0
    %503 = vmatpush1.bf16.msra.mxu0 0
    %504 = vmatprep.subr.bf16.mxu0 0
    %505 = vmatpush1.bf16.msra.mxu0 0
    %506 = vmatprep.subr.bf16.mxu0 0
    %507 = vmatpush1.bf16.msra.mxu0 0
    %508 = vmatprep.subr.bf16.mxu0 0
    %509 = vmatpush1.bf16.msra.mxu0 0
    %510 = vmatprep.subr.bf16.mxu0 0
    %511 = vmatpush1.bf16.msra.mxu0 0
    %512 = vmatprep.subr.bf16.mxu0 0
    %513 = vmatpush1.bf16.msra.mxu0 0
    %514 = vmatprep.subr.bf16.mxu0 0
    %515 = vmatpush1.bf16.msra.mxu0 0
    %516 = vmatprep.subr.bf16.mxu0 0
    %517 = vmatpush1.bf16.msra.mxu0 0
    %518 = vmatprep.subr.bf16.mxu0 0
    %519 = vmatpush1.bf16.msra.mxu0 0
    %520 = vmatprep.subr.bf16.mxu0 0
    %521 = vmatpush1.bf16.msra.mxu0 0
    %522 = vmatprep.subr.bf16.mxu0 0
    %523 = vmatpush1.bf16.msra.mxu0 0
    %524 = vmatprep.subr.bf16.mxu0 0
    %525 = vmatpush1.bf16.msra.mxu0 0
    %526 = vmatprep.mubr.bf16.mxu0 0
    %527 = vmatmul.mubr.bf16.gmra.mrb[0].mxu0 %v492
    %v528 = vpop.f32.mrb[0].mxu0
    %v529 = vadd.f32 0.0, %v528
    %v530 = vpop.f32.mrb[0].mxu0
    %v531 = vpop.f32.mrb[0].mxu0
    %v532 = vadd.f32 0.0, %v531
    %v533 = vpop.f32.mrb[0].mxu0
    %534 = vdwg.mxu0
    %537 = vrot.lane.b32.xlu0 %v529, 8
    %v538 = vpop.permute.xlu0 %537
    %539 = vrot.lane.b32.xlu0 %v532, 8
    %v540 = vpop.permute.xlu0 %539
    %vm543 = vcmask 64512
    %v544 = vsel %vm543, %v481, %v538
    %v545 = vsel %vm543, %v484, %v540
    %v546 = vld [vmem:[%s4] sm:$0x1]
    %v548 = vlaneseq
    %v549 = vshrl.u32 %v548, 7
    %v550 = vsub.s32 0, %v549
    %v551 = vrot.slane %v546, %v550
    %v553 = vadd.f32 %v544, %v551
    %v554 = vadd.f32 %v545, %v551
    %s555 = scalar_lea.vmem %s5, 16
    %v556 = vld [vmem:[%s555] sm:$0xff]
    %v557 = vld [vmem:[%s555 + $0x8] sm:$0xff]
    %vm558 = vcmp.gt.f32.partialorder %v556, 0.5
    %vm559 = vcmp.gt.f32.partialorder %v557, 0.5
    %s560 = scalar_lea.vmem %s1, 16
    %v561 = vld [vmem:[%s560] sm:$0xff]
    %v562 = vld [vmem:[%s560 + $0x8] sm:$0xff]
    %v563 = vpack.c.bf16 %v562, %v561
    %564 = vmatprep.subr.bf16.mxu0 0
    %565 = vmatpush1.bf16.msra.mxu0 %v563
    %566 = vmatprep.subr.bf16.mxu0 0
    %567 = vmatpush1.bf16.msra.mxu0 0
    %568 = vmatprep.subr.bf16.mxu0 0
    %569 = vmatpush1.bf16.msra.mxu0 0
    %570 = vmatprep.subr.bf16.mxu0 0
    %571 = vmatpush1.bf16.msra.mxu0 0
    %572 = vmatprep.subr.bf16.mxu0 0
    %573 = vmatpush1.bf16.msra.mxu0 0
    %574 = vmatprep.subr.bf16.mxu0 0
    %575 = vmatpush1.bf16.msra.mxu0 0
    %576 = vmatprep.subr.bf16.mxu0 0
    %577 = vmatpush1.bf16.msra.mxu0 0
    %578 = vmatprep.subr.bf16.mxu0 0
    %579 = vmatpush1.bf16.msra.mxu0 0
    %580 = vmatprep.subr.bf16.mxu0 0
    %581 = vmatpush1.bf16.msra.mxu0 0
    %582 = vmatprep.subr.bf16.mxu0 0
    %583 = vmatpush1.bf16.msra.mxu0 0
    %584 = vmatprep.subr.bf16.mxu0 0
    %585 = vmatpush1.bf16.msra.mxu0 0
    %586 = vmatprep.subr.bf16.mxu0 0
    %587 = vmatpush1.bf16.msra.mxu0 0
    %588 = vmatprep.subr.bf16.mxu0 0
    %589 = vmatpush1.bf16.msra.mxu0 0
    %590 = vmatprep.subr.bf16.mxu0 0
    %591 = vmatpush1.bf16.msra.mxu0 0
    %592 = vmatprep.subr.bf16.mxu0 0
    %593 = vmatpush1.bf16.msra.mxu0 0
    %594 = vmatprep.subr.bf16.mxu0 0
    %595 = vmatpush1.bf16.msra.mxu0 0
    %596 = vmatprep.mubr.bf16.mxu0 0
    %597 = vmatmul.mubr.bf16.gmra.mrb[0].mxu0 %v46
    %v598 = vpop.f32.mrb[0].mxu0
    %v599 = vadd.f32 0.0, %v598
    %v600 = vpop.f32.mrb[0].mxu0
    %v601 = vpop.f32.mrb[0].mxu0
    %v602 = vadd.f32 0.0, %v601
    %v603 = vpop.f32.mrb[0].mxu0
    %604 = vdwg.mxu0
    %s605 = scalar_lea.vmem %s2, 16
    %v606 = vld [vmem:[%s605] sm:$0xff]
    %v607 = vld [vmem:[%s605 + $0x8] sm:$0xff]
    %v609 = vsel %vm44, %v599, 0
    %v612 = vsel %vm44, %v602, 0
    %614 = vmatprep.subr.mxu0 0.0
    %615 = vmatpush1.msra.mxu0 %v606
    %616 = vmatprep.subr.mxu0 0.0
    %617 = vmatpush1.msra.mxu0 %v607
    %618 = vmatprep.subr.mxu0 0.0
    %619 = vmatpush1.msra.mxu0 0.0
    %620 = vmatprep.subr.mxu0 0.0
    %621 = vmatpush1.msra.mxu0 0.0
    %622 = vmatprep.subr.mxu0 0.0
    %623 = vmatpush1.msra.mxu0 0.0
    %624 = vmatprep.subr.mxu0 0.0
    %625 = vmatpush1.msra.mxu0 0.0
    %626 = vmatprep.subr.mxu0 0.0
    %627 = vmatpush1.msra.mxu0 0.0
    %628 = vmatprep.subr.mxu0 0.0
    %629 = vmatpush1.msra.mxu0 0.0
    %630 = vmatprep.subr.mxu0 0.0
    %631 = vmatpush1.msra.mxu0 0.0
    %632 = vmatprep.subr.mxu0 0.0
    %633 = vmatpush1.msra.mxu0 0.0
    %634 = vmatprep.subr.mxu0 0.0
    %635 = vmatpush1.msra.mxu0 0.0
    %636 = vmatprep.subr.mxu0 0.0
    %637 = vmatpush1.msra.mxu0 0.0
    %638 = vmatprep.subr.mxu0 0.0
    %639 = vmatpush1.msra.mxu0 0.0
    %640 = vmatprep.subr.mxu0 0.0
    %641 = vmatpush1.msra.mxu0 0.0
    %642 = vmatprep.subr.mxu0 0.0
    %643 = vmatpush1.msra.mxu0 0.0
    %644 = vmatprep.subr.mxu0 0.0
    %645 = vmatpush1.msra.mxu0 0.0
    %646 = vmatprep.subr.mxu0 0.0
    %647 = vmatpush1.msra.mxu0 0.0
    %648 = vmatprep.subr.mxu0 0.0
    %649 = vmatpush1.msra.mxu0 0.0
    %650 = vmatprep.subr.mxu0 0.0
    %651 = vmatpush1.msra.mxu0 0.0
    %652 = vmatprep.subr.mxu0 0.0
    %653 = vmatpush1.msra.mxu0 0.0
    %654 = vmatprep.subr.mxu0 0.0
    %655 = vmatpush1.msra.mxu0 0.0
    %656 = vmatprep.subr.mxu0 0.0
    %657 = vmatpush1.msra.mxu0 0.0
    %658 = vmatprep.subr.mxu0 0.0
    %659 = vmatpush1.msra.mxu0 0.0
    %660 = vmatprep.subr.mxu0 0.0
    %661 = vmatpush1.msra.mxu0 0.0
    %662 = vmatprep.subr.mxu0 0.0
    %663 = vmatpush1.msra.mxu0 0.0
    %664 = vmatprep.subr.mxu0 0.0
    %665 = vmatpush1.msra.mxu0 0.0
    %666 = vmatprep.subr.mxu0 0.0
    %667 = vmatpush1.msra.mxu0 0.0
    %668 = vmatprep.subr.mxu0 0.0
    %669 = vmatpush1.msra.mxu0 0.0
    %670 = vmatprep.subr.mxu0 0.0
    %671 = vmatpush1.msra.mxu0 0.0
    %672 = vmatprep.subr.mxu0 0.0
    %673 = vmatpush1.msra.mxu0 0.0
    %674 = vmatprep.subr.mxu0 0.0
    %675 = vmatpush1.msra.mxu0 0.0
    %676 = vmatprep.subr.mxu0 0.0
    %677 = vmatpush1.msra.mxu0 0.0
    %678 = vmatprep.mubr.f32.mxu0 0.0
    %679 = vmatmul.mubr.f32.gmra.mrb[0].mxu0 %v609
    %v680 = vpop.f32.mrb[0].mxu0
    %v681 = vadd.f32 0.0, %v680
    %v682 = vpop.f32.mrb[0].mxu0
    %683 = vmatprep.mubr.f32.mxu0 0.0
    %684 = vmatmul.mubr.f32.gmra.mrb[0].mxu0 %v612
    %v685 = vpop.f32.mrb[0].mxu0
    %v686 = vadd.f32 0.0, %v685
    %v687 = vpop.f32.mrb[0].mxu0
    %688 = vdwg.mxu0
    %s689 = scalar_lea.vmem %s3, 16
    %v690 = vld [vmem:[%s689] sm:$0xff]
    %v691 = vld [vmem:[%s689 + $0x8] sm:$0xff]
    %692 = vmatprep.subr.mxu0 0.0
    %693 = vmatpush1.msra.mxu0 %v690
    %694 = vmatprep.subr.mxu0 0.0
    %695 = vmatpush1.msra.mxu0 %v691
    %696 = vmatprep.subr.mxu0 0.0
    %697 = vmatpush1.msra.mxu0 0.0
    %698 = vmatprep.subr.mxu0 0.0
    %699 = vmatpush1.msra.mxu0 0.0
    %700 = vmatprep.subr.mxu0 0.0
    %701 = vmatpush1.msra.mxu0 0.0
    %702 = vmatprep.subr.mxu0 0.0
    %703 = vmatpush1.msra.mxu0 0.0
    %704 = vmatprep.subr.mxu0 0.0
    %705 = vmatpush1.msra.mxu0 0.0
    %706 = vmatprep.subr.mxu0 0.0
    %707 = vmatpush1.msra.mxu0 0.0
    %708 = vmatprep.subr.mxu0 0.0
    %709 = vmatpush1.msra.mxu0 0.0
    %710 = vmatprep.subr.mxu0 0.0
    %711 = vmatpush1.msra.mxu0 0.0
    %712 = vmatprep.subr.mxu0 0.0
    %713 = vmatpush1.msra.mxu0 0.0
    %714 = vmatprep.subr.mxu0 0.0
    %715 = vmatpush1.msra.mxu0 0.0
    %716 = vmatprep.subr.mxu0 0.0
    %717 = vmatpush1.msra.mxu0 0.0
    %718 = vmatprep.subr.mxu0 0.0
    %719 = vmatpush1.msra.mxu0 0.0
    %720 = vmatprep.subr.mxu0 0.0
    %721 = vmatpush1.msra.mxu0 0.0
    %722 = vmatprep.subr.mxu0 0.0
    %723 = vmatpush1.msra.mxu0 0.0
    %724 = vmatprep.subr.mxu0 0.0
    %725 = vmatpush1.msra.mxu0 0.0
    %726 = vmatprep.subr.mxu0 0.0
    %727 = vmatpush1.msra.mxu0 0.0
    %728 = vmatprep.subr.mxu0 0.0
    %729 = vmatpush1.msra.mxu0 0.0
    %730 = vmatprep.subr.mxu0 0.0
    %731 = vmatpush1.msra.mxu0 0.0
    %732 = vmatprep.subr.mxu0 0.0
    %733 = vmatpush1.msra.mxu0 0.0
    %734 = vmatprep.subr.mxu0 0.0
    %735 = vmatpush1.msra.mxu0 0.0
    %736 = vmatprep.subr.mxu0 0.0
    %737 = vmatpush1.msra.mxu0 0.0
    %738 = vmatprep.subr.mxu0 0.0
    %739 = vmatpush1.msra.mxu0 0.0
    %740 = vmatprep.subr.mxu0 0.0
    %741 = vmatpush1.msra.mxu0 0.0
    %742 = vmatprep.subr.mxu0 0.0
    %743 = vmatpush1.msra.mxu0 0.0
    %744 = vmatprep.subr.mxu0 0.0
    %745 = vmatpush1.msra.mxu0 0.0
    %746 = vmatprep.subr.mxu0 0.0
    %747 = vmatpush1.msra.mxu0 0.0
    %748 = vmatprep.subr.mxu0 0.0
    %749 = vmatpush1.msra.mxu0 0.0
    %750 = vmatprep.subr.mxu0 0.0
    %751 = vmatpush1.msra.mxu0 0.0
    %752 = vmatprep.subr.mxu0 0.0
    %753 = vmatpush1.msra.mxu0 0.0
    %754 = vmatprep.subr.mxu0 0.0
    %755 = vmatpush1.msra.mxu0 0.0
    %756 = vmatprep.mubr.f32.mxu0 0.0
    %757 = vmatmul.mubr.f32.gmra.mrb[0].mxu0 %v609
    %v758 = vpop.f32.mrb[0].mxu0
    %v759 = vadd.f32 0.0, %v758
    %v760 = vpop.f32.mrb[0].mxu0
    %761 = vmatprep.mubr.f32.mxu0 0.0
    %762 = vmatmul.mubr.f32.gmra.mrb[0].mxu0 %v612
    %v763 = vpop.f32.mrb[0].mxu0
    %v764 = vadd.f32 0.0, %v763
    %v765 = vpop.f32.mrb[0].mxu0
    %766 = vdwg.mxu0
    %767 = vxpose.xlu0.b32.start [1/16] %v759, 128
    %768 = vxpose.xlu0.b32.cont [2/16] %v764, 128
    %769 = vxpose.xlu0.b32.cont [3/16] 0.0, 128
    %770 = vxpose.xlu0.b32.cont [4/16] 0.0, 128
    %771 = vxpose.xlu0.b32.cont [5/16] 0.0, 128
    %772 = vxpose.xlu0.b32.cont [6/16] 0.0, 128
    %773 = vxpose.xlu0.b32.cont [7/16] 0.0, 128
    %774 = vxpose.xlu0.b32.cont [8/16] 0.0, 128
    %775 = vxpose.xlu0.b32.cont [9/16] 0.0, 128
    %776 = vxpose.xlu0.b32.cont [10/16] 0.0, 128
    %777 = vxpose.xlu0.b32.cont [11/16] 0.0, 128
    %778 = vxpose.xlu0.b32.cont [12/16] 0.0, 128
    %779 = vxpose.xlu0.b32.cont [13/16] 0.0, 128
    %780 = vxpose.xlu0.b32.cont [14/16] 0.0, 128
    %781 = vxpose.xlu0.b32.cont [15/16] 0.0, 128
    %782 = vxpose.xlu0.b32.end [16/16] 0.0, 128
    %v783 = vpop.trf.xlu0
    %v784 = vpop.trf.xlu0
    %v785 = vpop.trf.xlu0
    %v786 = vpop.trf.xlu0
    %v787 = vpop.trf.xlu0
    %v788 = vpop.trf.xlu0
    %v789 = vpop.trf.xlu0
    %v790 = vpop.trf.xlu0
    %v791 = vpop.trf.xlu0
    %v792 = vpop.trf.xlu0
    %v793 = vpop.trf.xlu0
    %v794 = vpop.trf.xlu0
    %v795 = vpop.trf.xlu0
    %v796 = vpop.trf.xlu0
    %v797 = vpop.trf.xlu0
    %v798 = vpop.trf.xlu0
    %v799 = vlaneseq
    %v800 = vshrl.u32 %v799, 7
    %v801 = vsub.s32 0, %v800
    %v802 = vrot.slane %v783, %v801
    %804 = vbcast.lane.b32.xlu0 %v802, 256
    %v805 = vpop.permute.xlu0 %804
    %s807 = sor.u32 256, 8
    %808 = vbcast.lane.b32.xlu0 %v802, %s807
    %v809 = vpop.permute.xlu0 %808
    %v810 = vlaneseq
    %v811 = vshrl.u32 %v810, 7
    %v812 = vsub.s32 1, %v811
    %v813 = vrot.slane %v783, %v812
    %815 = vbcast.lane.b32.xlu0 %v813, 256
    %v816 = vpop.permute.xlu0 %815
    %s818 = sor.u32 256, 8
    %819 = vbcast.lane.b32.xlu0 %v813, %s818
    %v820 = vpop.permute.xlu0 %819
    %821 = vxpose.xlu0.b32.start [1/16] %v681, 128
    %822 = vxpose.xlu0.b32.cont [2/16] %v686, 128
    %823 = vxpose.xlu0.b32.cont [3/16] 0.0, 128
    %824 = vxpose.xlu0.b32.cont [4/16] 0.0, 128
    %825 = vxpose.xlu0.b32.cont [5/16] 0.0, 128
    %826 = vxpose.xlu0.b32.cont [6/16] 0.0, 128
    %827 = vxpose.xlu0.b32.cont [7/16] 0.0, 128
    %828 = vxpose.xlu0.b32.cont [8/16] 0.0, 128
    %829 = vxpose.xlu0.b32.cont [9/16] 0.0, 128
    %830 = vxpose.xlu0.b32.cont [10/16] 0.0, 128
    %831 = vxpose.xlu0.b32.cont [11/16] 0.0, 128
    %832 = vxpose.xlu0.b32.cont [12/16] 0.0, 128
    %833 = vxpose.xlu0.b32.cont [13/16] 0.0, 128
    %834 = vxpose.xlu0.b32.cont [14/16] 0.0, 128
    %835 = vxpose.xlu0.b32.cont [15/16] 0.0, 128
    %836 = vxpose.xlu0.b32.end [16/16] 0.0, 128
    %v837 = vpop.trf.xlu0
    %v838 = vpop.trf.xlu0
    %v839 = vpop.trf.xlu0
    %v840 = vpop.trf.xlu0
    %v841 = vpop.trf.xlu0
    %v842 = vpop.trf.xlu0
    %v843 = vpop.trf.xlu0
    %v844 = vpop.trf.xlu0
    %v845 = vpop.trf.xlu0
    %v846 = vpop.trf.xlu0
    %v847 = vpop.trf.xlu0
    %v848 = vpop.trf.xlu0
    %v849 = vpop.trf.xlu0
    %v850 = vpop.trf.xlu0
    %v851 = vpop.trf.xlu0
    %v852 = vpop.trf.xlu0
    %v855 = vunpack.c.l.s4 1966171168
    %v856 = vunpack.c.0.s8 %v855
    %v857 = vlaneseq
    %v858 = vshrl.u32 %v857, 7
    %v859 = vsub.s32 %v856, %v858
    %v860 = vrot.slane %v837, %v859
    %v861 = vcombine.high %v860, %v860
    %v863 = vunpack.c.l.s4 1966171168
    %v864 = vunpack.c.0.s8 %v863
    %v865 = vlaneseq
    %v866 = vshrl.u32 %v865, 7
    %v867 = vsub.s32 %v864, %v866
    %v868 = vrot.slane %v860, %v867
    %v870 = vunpack.c.l.s4 1966171168
    %v871 = vunpack.c.0.s8 %v870
    %v872 = vlaneseq
    %v873 = vshrl.u32 %v872, 7
    %v874 = vsub.s32 %v871, %v873
    %v875 = vrot.slane %v861, %v874
    %v876 = vlaneseq
    %v877 = vshrl.u32 %v876, 7
    %v878 = vsub.s32 0, %v877
    %v879 = vrot.slane %v868, %v878
    %v880 = vlaneseq
    %v881 = vshrl.u32 %v880, 7
    %v882 = vsub.s32 0, %v881
    %v883 = vrot.slane %v875, %v882
    %v886 = vadd.f32 %v805, %v879
    %v887 = vadd.f32 %v809, %v879
    %v888 = vadd.f32 %v816, %v883
    %v889 = vadd.f32 %v820, %v883
    %vm890 = vcmp.gt.f32.partialorder %v886, 0.0
    %vm891 = vcmp.gt.f32.partialorder %v887, 0.0
    %vm892 = vcmp.gt.f32.partialorder %v888, 0.0
    %vm893 = vcmp.gt.f32.partialorder %v889, 0.0
    %v894 = vmul.f32 %v886, 0.2
    %v895 = vmul.f32 %v887, 0.2
    %v896 = vmul.f32 %v888, 0.2
    %v897 = vmul.f32 %v889, 0.2
    %v898 = vsel %vm890, %v886, %v894
    %v899 = vsel %vm891, %v887, %v895
    %v900 = vsel %vm892, %v888, %v896
    %v901 = vsel %vm893, %v889, %v897
    %v902 = vsel %vm558, 1, 0
    %v903 = vsel %vm559, 1, 0
    %vm904 = vcmp.eq.s32.totalorder %v902, 1
    %vm905 = vcmp.eq.s32.totalorder %v903, 1
    %v906 = vsel %vm904, %v898, -1e+30
    %v907 = vsel %vm905, %v899, -1e+30
    %v908 = vsel %vm904, %v900, -1e+30
    %v909 = vsel %vm905, %v901, -1e+30
    %v910 = vsel %vm44, %v906, -inf
    %911 = vmax.xlane.f32.xlu0 %v910
    %v912 = vpop.xlane.xlu0 %911
    %v913 = vsel %vm44, %v907, -inf
    %914 = vmax.xlane.f32.xlu0 %v913
    %v915 = vpop.xlane.xlu0 %914
    %v916 = vsel %vm44, %v908, -inf
    %917 = vmax.xlane.f32.xlu0 %v916
    %v918 = vpop.xlane.xlu0 %917
    %v919 = vsel %vm44, %v909, -inf
    %920 = vmax.xlane.f32.xlu0 %v919
    %v921 = vpop.xlane.xlu0 %920
    %v922 = vsub.f32 %v906, %v912
    %v923 = vsub.f32 %v907, %v915
    %v924 = vsub.f32 %v908, %v918
    %v925 = vsub.f32 %v909, %v921
    %v926 = vmul.f32 %v922, 1.442695
    %v927 = vpow.pop %v926
    %v928 = vmul.f32 %v923, 1.442695
    %v929 = vpow.pop %v928
    %v930 = vmul.f32 %v924, 1.442695
    %v931 = vpow.pop %v930
    %v932 = vmul.f32 %v925, 1.442695
    %v933 = vpow.pop %v932
    %v934 = vsel %vm904, %v927, 0.0
    %v935 = vsel %vm905, %v929, 0.0
    %v936 = vsel %vm904, %v931, 0.0
    %v937 = vsel %vm905, %v933, 0.0
    %v938 = vsel %vm44, %v934, 0.0
    %939 = vadd.xlane.f32.xlu0 %v938
    %v940 = vpop.xlane.xlu0 %939
    %v941 = vsel %vm44, %v935, 0.0
    %942 = vadd.xlane.f32.xlu0 %v941
    %v943 = vpop.xlane.xlu0 %942
    %v944 = vsel %vm44, %v936, 0.0
    %945 = vadd.xlane.f32.xlu0 %v944
    %v946 = vpop.xlane.xlu0 %945
    %v947 = vsel %vm44, %v937, 0.0
    %948 = vadd.xlane.f32.xlu0 %v947
    %v949 = vpop.xlane.xlu0 %948
    %v950 = vrcp.pop %v940
    %v951 = vmul.f32 %v934, %v950
    %v952 = vrcp.pop %v943
    %v953 = vmul.f32 %v935, %v952
    %v954 = vrcp.pop %v946
    %v955 = vmul.f32 %v936, %v954
    %v956 = vrcp.pop %v949
    %v957 = vmul.f32 %v937, %v956
    %v958 = vpack.c.bf16 %v953, %v951
    %v959 = vpack.c.bf16 %v957, %v955
    %v960 = vpack.c.bf16 %v602, %v599
    %v962 = vsel %vm44, %v958, 0
    %964 = vmatprep.subr.bf16.mxu0 0
    %965 = vmatpush1.bf16.msra.mxu0 %v960
    %966 = vmatprep.subr.bf16.mxu0 0
    %967 = vmatpush1.bf16.msra.mxu0 0
    %968 = vmatprep.subr.bf16.mxu0 0
    %969 = vmatpush1.bf16.msra.mxu0 0
    %970 = vmatprep.subr.bf16.mxu0 0
    %971 = vmatpush1.bf16.msra.mxu0 0
    %972 = vmatprep.subr.bf16.mxu0 0
    %973 = vmatpush1.bf16.msra.mxu0 0
    %974 = vmatprep.subr.bf16.mxu0 0
    %975 = vmatpush1.bf16.msra.mxu0 0
    %976 = vmatprep.subr.bf16.mxu0 0
    %977 = vmatpush1.bf16.msra.mxu0 0
    %978 = vmatprep.subr.bf16.mxu0 0
    %979 = vmatpush1.bf16.msra.mxu0 0
    %980 = vmatprep.subr.bf16.mxu0 0
    %981 = vmatpush1.bf16.msra.mxu0 0
    %982 = vmatprep.subr.bf16.mxu0 0
    %983 = vmatpush1.bf16.msra.mxu0 0
    %984 = vmatprep.subr.bf16.mxu0 0
    %985 = vmatpush1.bf16.msra.mxu0 0
    %986 = vmatprep.subr.bf16.mxu0 0
    %987 = vmatpush1.bf16.msra.mxu0 0
    %988 = vmatprep.subr.bf16.mxu0 0
    %989 = vmatpush1.bf16.msra.mxu0 0
    %990 = vmatprep.subr.bf16.mxu0 0
    %991 = vmatpush1.bf16.msra.mxu0 0
    %992 = vmatprep.subr.bf16.mxu0 0
    %993 = vmatpush1.bf16.msra.mxu0 0
    %994 = vmatprep.subr.bf16.mxu0 0
    %995 = vmatpush1.bf16.msra.mxu0 0
    %996 = vmatprep.mubr.bf16.mxu0 0
    %997 = vmatmul.mubr.bf16.gmra.mrb[0].mxu0 %v962
    %v998 = vpop.f32.mrb[0].mxu0
    %v999 = vadd.f32 0.0, %v998
    %v1000 = vpop.f32.mrb[0].mxu0
    %v1001 = vpop.f32.mrb[0].mxu0
    %v1002 = vadd.f32 0.0, %v1001
    %v1003 = vpop.f32.mrb[0].mxu0
    %1004 = vdwg.mxu0
    %1006 = vrot.lane.b32.xlu0 %v960, 120
    %v1007 = vpop.permute.xlu0 %1006
    %v1010 = vsel %vm44, %v959, 0
    %1012 = vmatprep.subr.bf16.mxu0 0
    %1013 = vmatpush1.bf16.msra.mxu0 %v1007
    %1014 = vmatprep.subr.bf16.mxu0 0
    %1015 = vmatpush1.bf16.msra.mxu0 0
    %1016 = vmatprep.subr.bf16.mxu0 0
    %1017 = vmatpush1.bf16.msra.mxu0 0
    %1018 = vmatprep.subr.bf16.mxu0 0
    %1019 = vmatpush1.bf16.msra.mxu0 0
    %1020 = vmatprep.subr.bf16.mxu0 0
    %1021 = vmatpush1.bf16.msra.mxu0 0
    %1022 = vmatprep.subr.bf16.mxu0 0
    %1023 = vmatpush1.bf16.msra.mxu0 0
    %1024 = vmatprep.subr.bf16.mxu0 0
    %1025 = vmatpush1.bf16.msra.mxu0 0
    %1026 = vmatprep.subr.bf16.mxu0 0
    %1027 = vmatpush1.bf16.msra.mxu0 0
    %1028 = vmatprep.subr.bf16.mxu0 0
    %1029 = vmatpush1.bf16.msra.mxu0 0
    %1030 = vmatprep.subr.bf16.mxu0 0
    %1031 = vmatpush1.bf16.msra.mxu0 0
    %1032 = vmatprep.subr.bf16.mxu0 0
    %1033 = vmatpush1.bf16.msra.mxu0 0
    %1034 = vmatprep.subr.bf16.mxu0 0
    %1035 = vmatpush1.bf16.msra.mxu0 0
    %1036 = vmatprep.subr.bf16.mxu0 0
    %1037 = vmatpush1.bf16.msra.mxu0 0
    %1038 = vmatprep.subr.bf16.mxu0 0
    %1039 = vmatpush1.bf16.msra.mxu0 0
    %1040 = vmatprep.subr.bf16.mxu0 0
    %1041 = vmatpush1.bf16.msra.mxu0 0
    %1042 = vmatprep.subr.bf16.mxu0 0
    %1043 = vmatpush1.bf16.msra.mxu0 0
    %1044 = vmatprep.mubr.bf16.mxu0 0
    %1045 = vmatmul.mubr.bf16.gmra.mrb[0].mxu0 %v1010
    %v1046 = vpop.f32.mrb[0].mxu0
    %v1047 = vadd.f32 0.0, %v1046
    %v1048 = vpop.f32.mrb[0].mxu0
    %v1049 = vpop.f32.mrb[0].mxu0
    %v1050 = vadd.f32 0.0, %v1049
    %v1051 = vpop.f32.mrb[0].mxu0
    %1052 = vdwg.mxu0
    %1055 = vrot.lane.b32.xlu0 %v1047, 8
    %v1056 = vpop.permute.xlu0 %1055
    %1057 = vrot.lane.b32.xlu0 %v1050, 8
    %v1058 = vpop.permute.xlu0 %1057
    %v1061 = vsel %vm543, %v999, %v1056
    %v1062 = vsel %vm543, %v1002, %v1058
    %s1063 = scalar_lea.vmem %s4, 1
    %v1064 = vld [vmem:[%s1063] sm:$0x1]
    %v1066 = vlaneseq
    %v1067 = vshrl.u32 %v1066, 7
    %v1068 = vsub.s32 0, %v1067
    %v1069 = vrot.slane %v1064, %v1068
    %v1071 = vadd.f32 %v1061, %v1069
    %v1072 = vadd.f32 %v1062, %v1069
    %v1073 = vpack.c.bf16 %v554, %v553
    %v1074 = vpack.c.bf16 %v1072, %v1071
    %v1075 = vld [vmem:[%s6] sm:$0xff]
    %v1076 = vld [vmem:[%s6 + $0x8] sm:$0xff]
    %v1077 = vpack.c.bf16 %v1076, %v1075
    %v1078 = vld [vmem:[%s7] sm:$0x1]
    %v1080 = vlaneseq
    %v1081 = vshrl.u32 %v1080, 7
    %v1082 = vsub.s32 0, %v1081
    %v1083 = vrot.slane %v1078, %v1082
    %v1086 = vsel %vm44, %v1073, 0
    %v1089 = vsel %vm44, %v1074, 0
    %1091 = vmatprep.subr.bf16.mxu0 0
    %1092 = vmatpush1.bf16.msra.mxu0 %v1077
    %1093 = vmatprep.subr.bf16.mxu0 0
    %1094 = vmatpush1.bf16.msra.mxu0 0
    %1095 = vmatprep.subr.bf16.mxu0 0
    %1096 = vmatpush1.bf16.msra.mxu0 0
    %1097 = vmatprep.subr.bf16.mxu0 0
    %1098 = vmatpush1.bf16.msra.mxu0 0
    %1099 = vmatprep.subr.bf16.mxu0 0
    %1100 = vmatpush1.bf16.msra.mxu0 0
    %1101 = vmatprep.subr.bf16.mxu0 0
    %1102 = vmatpush1.bf16.msra.mxu0 0
    %1103 = vmatprep.subr.bf16.mxu0 0
    %1104 = vmatpush1.bf16.msra.mxu0 0
    %1105 = vmatprep.subr.bf16.mxu0 0
    %1106 = vmatpush1.bf16.msra.mxu0 0
    %1107 = vmatprep.subr.bf16.mxu0 0
    %1108 = vmatpush1.bf16.msra.mxu0 0
    %1109 = vmatprep.subr.bf16.mxu0 0
    %1110 = vmatpush1.bf16.msra.mxu0 0
    %1111 = vmatprep.subr.bf16.mxu0 0
    %1112 = vmatpush1.bf16.msra.mxu0 0
    %1113 = vmatprep.subr.bf16.mxu0 0
    %1114 = vmatpush1.bf16.msra.mxu0 0
    %1115 = vmatprep.subr.bf16.mxu0 0
    %1116 = vmatpush1.bf16.msra.mxu0 0
    %1117 = vmatprep.subr.bf16.mxu0 0
    %1118 = vmatpush1.bf16.msra.mxu0 0
    %1119 = vmatprep.subr.bf16.mxu0 0
    %1120 = vmatpush1.bf16.msra.mxu0 0
    %1121 = vmatprep.subr.bf16.mxu0 0
    %1122 = vmatpush1.bf16.msra.mxu0 0
    %1123 = vmatprep.mubr.bf16.mxu0 0
    %1124 = vmatmul.mubr.bf16.gmra.mrb[0].mxu0 %v1086
    %v1125 = vpop.f32.mrb[0].mxu0
    %v1126 = vadd.f32 %v1083, %v1125
    %v1127 = vpop.f32.mrb[0].mxu0
    %v1128 = vpop.f32.mrb[0].mxu0
    %v1129 = vadd.f32 %v1083, %v1128
    %v1130 = vpop.f32.mrb[0].mxu0
    %1131 = vmatprep.mubr.bf16.mxu0 0
    %1132 = vmatmul.mubr.bf16.gmra.mrb[0].mxu0 %v1089
    %v1133 = vpop.f32.mrb[0].mxu0
    %v1134 = vadd.f32 %v1083, %v1133
    %v1135 = vpop.f32.mrb[0].mxu0
    %v1136 = vpop.f32.mrb[0].mxu0
    %v1137 = vadd.f32 %v1083, %v1136
    %v1138 = vpop.f32.mrb[0].mxu0
    %1139 = vdwg.mxu0
    %v1140 = vtanh.pop %v1126
    %v1141 = vtanh.pop %v1129
    %v1142 = vtanh.pop %v1134
    %v1143 = vtanh.pop %v1137
    %v1144 = vpack.c.bf16 %v1141, %v1140
    %v1145 = vpack.c.bf16 %v1143, %v1142
    %v1146 = vld [vmem:[%s8] sm:$0xff]
    %v1147 = vld [vmem:[%s8 + $0x8] sm:$0xff]
    %v1148 = vld [vmem:[%s8 + $0x10] sm:$0xff]
    %v1149 = vld [vmem:[%s8 + $0x18] sm:$0xff]
    %v1150 = vld [vmem:[%s8 + $0x20] sm:$0xff]
    %v1151 = vld [vmem:[%s8 + $0x28] sm:$0xff]
    %v1152 = vld [vmem:[%s8 + $0x30] sm:$0xff]
    %v1153 = vld [vmem:[%s8 + $0x38] sm:$0xff]
    %v1154 = vld [vmem:[%s8 + $0x40] sm:$0xff]
    %v1155 = vld [vmem:[%s8 + $0x48] sm:$0xff]
    %v1156 = vld [vmem:[%s8 + $0x50] sm:$0xff]
    %v1157 = vld [vmem:[%s8 + $0x58] sm:$0xff]
    %v1158 = vld [vmem:[%s8 + $0x60] sm:$0xff]
    %v1159 = vld [vmem:[%s8 + $0x68] sm:$0xff]
    %v1160 = vld [vmem:[%s8 + $0x70] sm:$0xff]
    %v1161 = vld [vmem:[%s8 + $0x78] sm:$0xff]
    %v1162 = vpack.c.bf16 %v1147, %v1146
    %v1163 = vpack.c.bf16 %v1149, %v1148
    %v1164 = vpack.c.bf16 %v1151, %v1150
    %v1165 = vpack.c.bf16 %v1153, %v1152
    %v1166 = vpack.c.bf16 %v1155, %v1154
    %v1167 = vpack.c.bf16 %v1157, %v1156
    %v1168 = vpack.c.bf16 %v1159, %v1158
    %v1169 = vpack.c.bf16 %v1161, %v1160
    %1170 = vmatprep.subr.bf16.mxu0 0
    %1171 = vmatpush1.bf16.msra.mxu0 %v1162
    %1172 = vmatprep.subr.bf16.mxu0 0
    %1173 = vmatpush1.bf16.msra.mxu0 %v1163
    %1174 = vmatprep.subr.bf16.mxu0 0
    %1175 = vmatpush1.bf16.msra.mxu0 %v1164
    %1176 = vmatprep.subr.bf16.mxu0 0
    %1177 = vmatpush1.bf16.msra.mxu0 %v1165
    %1178 = vmatprep.subr.bf16.mxu0 0
    %1179 = vmatpush1.bf16.msra.mxu0 %v1166
    %1180 = vmatprep.subr.bf16.mxu0 0
    %1181 = vmatpush1.bf16.msra.mxu0 %v1167
    %1182 = vmatprep.subr.bf16.mxu0 0
    %1183 = vmatpush1.bf16.msra.mxu0 %v1168
    %1184 = vmatprep.subr.bf16.mxu0 0
    %1185 = vmatpush1.bf16.msra.mxu0 %v1169
    %1186 = vmatprep.subr.bf16.mxu0 0
    %1187 = vmatpush1.bf16.msra.mxu0 0
    %1188 = vmatprep.subr.bf16.mxu0 0
    %1189 = vmatpush1.bf16.msra.mxu0 0
    %1190 = vmatprep.subr.bf16.mxu0 0
    %1191 = vmatpush1.bf16.msra.mxu0 0
    %1192 = vmatprep.subr.bf16.mxu0 0
    %1193 = vmatpush1.bf16.msra.mxu0 0
    %1194 = vmatprep.subr.bf16.mxu0 0
    %1195 = vmatpush1.bf16.msra.mxu0 0
    %1196 = vmatprep.subr.bf16.mxu0 0
    %1197 = vmatpush1.bf16.msra.mxu0 0
    %1198 = vmatprep.subr.bf16.mxu0 0
    %1199 = vmatpush1.bf16.msra.mxu0 0
    %1200 = vmatprep.subr.bf16.mxu0 0
    %1201 = vmatpush1.bf16.msra.mxu0 0
    %1202 = vmatprep.mubr.bf16.mxu0 0
    %1203 = vmatmul.mubr.bf16.gmra.mrb[0].mxu0 %v1144
    %v1204 = vpop.f32.mrb[0].mxu0
    %v1205 = vadd.f32 0.0, %v1204
    %v1206 = vpop.f32.mrb[0].mxu0
    %v1207 = vpop.f32.mrb[0].mxu0
    %v1208 = vadd.f32 0.0, %v1207
    %v1209 = vpop.f32.mrb[0].mxu0
    %1210 = vmatprep.mubr.bf16.mxu0 0
    %1211 = vmatmul.mubr.bf16.gmra.mrb[0].mxu0 %v1145
    %v1212 = vpop.f32.mrb[0].mxu0
    %v1213 = vadd.f32 0.0, %v1212
    %v1214 = vpop.f32.mrb[0].mxu0
    %v1215 = vpop.f32.mrb[0].mxu0
    %v1216 = vadd.f32 0.0, %v1215
    %v1217 = vpop.f32.mrb[0].mxu0
    %1218 = vdwg.mxu0
    %v1219 = vmax.f32 %v1205, %v1213
    %v1220 = vmax.f32 %v1208, %v1216
    %v1221 = vsub.f32 %v1205, %v1219
    %v1222 = vsub.f32 %v1208, %v1220
    %v1223 = vmul.f32 %v1221, 1.442695
    %v1224 = vpow.pop %v1223
    %v1225 = vmul.f32 %v1222, 1.442695
    %v1226 = vpow.pop %v1225
    %v1227 = vsub.f32 %v1213, %v1219
    %v1228 = vsub.f32 %v1216, %v1220
    %v1229 = vmul.f32 %v1227, 1.442695
    %v1230 = vpow.pop %v1229
    %v1231 = vmul.f32 %v1228, 1.442695
    %v1232 = vpow.pop %v1231
    %v1233 = vadd.f32 %v1224, %v1230
    %v1234 = vadd.f32 %v1226, %v1232
    %v1235 = vrcp.pop %v1233
    %v1236 = vmul.f32 1.0, %v1235
    %v1237 = vrcp.pop %v1234
    %v1238 = vmul.f32 1.0, %v1237
    %v1239 = vmul.f32 %v1224, %v1236
    %v1240 = vmul.f32 %v1226, %v1238
    %1242 = vset.pattern.permute.xlu0 0
    %1243 = vperm.xlu0 %1242, %v1239
    %v1244 = vpop.permute.xlu0 %1243
    %1247 = vset.pattern.permute.xlu0 0
    %1248 = vperm.xlu0 %1247, %v1240
    %v1249 = vpop.permute.xlu0 %1248
    %v1251 = vmul.f32 %v1244, %v553
    %v1252 = vmul.f32 %v1249, %v554
    %v1253 = vmul.f32 %v1230, %v1236
    %v1254 = vmul.f32 %v1232, %v1238
    %1256 = vset.pattern.permute.xlu0 0
    %1257 = vperm.xlu0 %1256, %v1253
    %v1258 = vpop.permute.xlu0 %1257
    %1261 = vset.pattern.permute.xlu0 0
    %1262 = vperm.xlu0 %1261, %v1254
    %v1263 = vpop.permute.xlu0 %1262
    %v1265 = vmul.f32 %v1258, %v1071
    %v1266 = vmul.f32 %v1263, %v1072
    %v1267 = vadd.f32 %v1251, %v1265
    %v1268 = vadd.f32 %v1252, %v1266
    %1269 = vst.msk [vmem:[#allocation2] sm:$0xff] %vm44, %v1267
    %1270 = vst.msk [vmem:[#allocation2 + $0x8] sm:$0xff] %vm44, %v1268
    // Predicated region
    $region38: #{iarnet_forward.3} parent=1 // pred_check
      _
    $region39: #{iarnet_forward.3} parent=1 // pred_check_branch
      %1272 = sbr.rel (0) target = $region41
    $region40: #{iarnet_forward.3} parent=1 // pred_region
      %s1274 = ssub.s32 256, 256
      %1275 = vsyncadd [#allocation3], %s1274
      %s1276 = sshll.u32 [#allocation2], 4
      %s1277 = int_to_ptr.vmem [resolvable:$true] %s1276
      %1282 = dma.vmem_to_hbm [thread:$0]  %s1277, 256, %s9, [#allocation3], 128, 128, 8
    $region41: #{iarnet_forward.3} parent=1 // pred_fallthru
      _
    // Predicated region
    $region42: #{iarnet_forward.3} parent=1 // pred_check
      _
    $region43: #{iarnet_forward.3} parent=1 // pred_check_branch
      %1284 = sbr.rel (0) target = $region45
    $region44: #{iarnet_forward.3} parent=1 // pred_region
      %1285 = dma.done [#allocation3], 256
    $region45: #{iarnet_forward.3} parent=1 // pred_fallthru
      _
    %1286 = vsyncpa [#allocation3], 1

</llo_original>
